<compile_context>
chip_gen: v7x
topology: tpu7x:2x2x1
jax: 0.10.0
libtpu: 0.0.40
codegen_flags: <defaults>
</compile_context>

<pallas_src>
import functools

import jax
import jax.numpy as jnp
from jax.experimental import pallas as pl
from jax.experimental.pallas import tpu as pltpu

FEAT_DIM = 1280  # EfficientNet-B0 feature width (fixed by the nn.Linear(1280, ...) heads)
HEADS = (
    ("animal_type", 2),
    ("size", 3),
    ("body_condition", 3),
    ("visible_health_issues", 4),
    ("pregnancy_indicators", 3),
    ("image_quality", 3),
    ("context", 4),
)
TOTAL_HEAD_DIM = sum(d for _, d in HEADS)  # 22
OUT_PAD = 128  # pad concatenated head outputs to one lane-dense vreg width


def multitask_kernel(x_ref, ws_ref, bs_ref, wh_ref, bh_ref, pool_ref, o_ref, acc_ref):
    """Grid = (batch blocks [parallel], HW chunks [arbitrary / reduction]).

    x_ref   : (Bt*HWc, Cin)  bf16  pixel chunk, channels-last, image-major rows
    ws_ref  : (Cin, 1280)    bf16  synthetic backbone (1x1 conv) weight
    bs_ref  : (1, 1280)      f32   synthetic backbone bias
    wh_ref  : (1280, 128)    bf16  concatenated head weights, pre-scaled by 1/HW
    bh_ref  : (1, 128)       f32   concatenated head biases
    pool_ref: (Bt, Bt*HWc)   bf16  block-diagonal ones (per-image spatial sum on MXU)
    o_ref   : (Bt, 128)      f32   concatenated head logits (padded)
    acc_ref : (Bt, 1280)     f32   running per-image spatial feature sum (scratch)
    """
    s = pl.program_id(1)

    @pl.when(s == 0)
    def _init():
        acc_ref[...] = jnp.zeros_like(acc_ref)

    # "Backbone": per-pixel linear projection 3 -> 1280 (MXU, bf16 in / f32 acc)
    feat = jnp.dot(x_ref[...], ws_ref[...], preferred_element_type=jnp.float32)
    feat = jnp.maximum(feat + bs_ref[...], 0.0)  # bias + ReLU in f32 (VPU)

    # Per-image partial spatial sum as a single block-diagonal ones matmul (MXU),
    # accumulated in f32. Equivalent to summing each image's chunk rows.
    acc_ref[...] += jnp.dot(
        pool_ref[...], feat.astype(jnp.bfloat16), preferred_element_type=jnp.float32
    )

    @pl.when(s == pl.num_programs(1) - 1)
    def _finalize():
        # 1/HW of the spatial mean is already folded into wh; biases added after.
        pooled = acc_ref[...].astype(jnp.bfloat16)  # (Bt, 1280)
        o_ref[...] = (
            jnp.dot(pooled, wh_ref[...], preferred_element_type=jnp.float32)
            + bh_ref[...]
        )


def init_params(key, in_channels=3):
    k0, k1, k2, k3 = jax.random.split(key, 4)
    w_stem = jax.random.normal(k0, (in_channels, FEAT_DIM), jnp.float32) * 0.1
    b_stem = jax.random.normal(k1, (1, FEAT_DIM), jnp.float32) * 0.01
    # Concatenate the 7 head weight matrices (1280, n_k) -> (1280, 22), pad to 128.
    w_heads = jax.random.normal(k2, (FEAT_DIM, TOTAL_HEAD_DIM), jnp.float32) * (
        1.0 / jnp.sqrt(FEAT_DIM)
    )
    b_heads = jax.random.normal(k3, (1, TOTAL_HEAD_DIM), jnp.float32) * 0.01
    w_heads = jnp.pad(w_heads, ((0, 0), (0, OUT_PAD - TOTAL_HEAD_DIM)))
    b_heads = jnp.pad(b_heads, ((0, 0), (0, OUT_PAD - TOTAL_HEAD_DIM)))
    return {"w_stem": w_stem, "b_stem": b_stem, "w_heads": w_heads, "b_heads": b_heads}


def _pick_hw_chunk(hw, cap):
    """Largest multiple of 8 that divides hw and is <= cap (else full hw)."""
    cap = max(8, min(hw, cap))
    for cand in range(cap, 7, -1):
        if hw % cand == 0 and cand % 8 == 0:
            return cand
    return hw


@functools.partial(jax.jit, static_argnames=("bt", "max_rows"))
def multitask_forward(x_nchw, params, *, bt=8, max_rows=2048):
    N, C, H, W = x_nchw.shape
    HW = H * W
    # Cap the per-step feature chunk at ~max_rows x 1280 f32 (<= ~10 MB) so the
    # kernel fits comfortably in VMEM on v7x (64 MiB) / v5e (16 MiB scoped default).
    hw_chunk = _pick_hw_chunk(HW, max(8, max_rows // bt))
    n_chunks = HW // hw_chunk
    n_blocks = -(-N // bt)
    n_pad = n_blocks * bt

    # --- glue / layout plumbing (all in the wrapper, nothing hot) ---
    # NCHW -> (N, HW, C) channels-last, bf16, pad batch to a multiple of Bt,
    # then group as (n_blocks, n_chunks, Bt*hw_chunk, C) so each grid step reads
    # one flat image-major chunk (no in-kernel relayout).
    x = jnp.transpose(x_nchw, (0, 2, 3, 1)).reshape(N, HW, C).astype(jnp.bfloat16)
    if n_pad != N:
        x = jnp.pad(x, ((0, n_pad - N), (0, 0), (0, 0)))
    x = (
        x.reshape(n_blocks, bt, n_chunks, hw_chunk, C)
        .transpose(0, 2, 1, 3, 4)
        .reshape(n_blocks, n_chunks, bt * hw_chunk, C)
    )

    w_stem = params["w_stem"].astype(jnp.bfloat16)
    b_stem = params["b_stem"].astype(jnp.float32)
    # Fold the 1/HW of the spatial mean into the head weights (free; exact algebra).
    w_heads = (params["w_heads"] * (1.0 / HW)).astype(jnp.bfloat16)
    b_heads = params["b_heads"].astype(jnp.float32)
    # Block-diagonal ones matrix: per-image spatial sum as one MXU matmul.
    pool = jnp.repeat(jnp.eye(bt, dtype=jnp.bfloat16), hw_chunk, axis=1)

    logits = pl.pallas_call(
        multitask_kernel,
        out_shape=jax.ShapeDtypeStruct((n_pad, OUT_PAD), jnp.float32),
        grid_spec=pltpu.PrefetchScalarGridSpec(
            num_scalar_prefetch=0,
            grid=(n_blocks, n_chunks),
            in_specs=[
                pl.BlockSpec((None, None, bt * hw_chunk, C), lambda b, s: (b, s, 0, 0)),
                pl.BlockSpec((C, FEAT_DIM), lambda b, s: (0, 0)),
                pl.BlockSpec((1, FEAT_DIM), lambda b, s: (0, 0)),
                pl.BlockSpec((FEAT_DIM, OUT_PAD), lambda b, s: (0, 0)),
                pl.BlockSpec((1, OUT_PAD), lambda b, s: (0, 0)),
                pl.BlockSpec((bt, bt * hw_chunk), lambda b, s: (0, 0)),
            ],
            out_specs=pl.BlockSpec((bt, OUT_PAD), lambda b, s: (b, 0)),
            scratch_shapes=[pltpu.VMEM((bt, FEAT_DIM), jnp.float32)],
        ),
        compiler_params=pltpu.CompilerParams(
            dimension_semantics=("parallel", "arbitrary"),
            vmem_limit_bytes=32 * 1024 * 1024,
        ),
    )(x, w_stem, b_stem, w_heads, b_heads, pool)

    # Slice padded batch rows off and split the lane-dense logits slab per head (glue).
    out = {}
    off = 0
    for name, dim in HEADS:
        out[name] = logits[:N, off : off + dim]
        off += dim
    return out


def reference_forward(x_nchw, params):
    """Pure-JAX f32 reference of the same forward (for tolerance check)."""
    N, C, H, W = x_nchw.shape
    x = jnp.transpose(x_nchw, (0, 2, 3, 1)).reshape(N, H * W, C).astype(jnp.float32)
    feat = jnp.maximum(
        jnp.einsum("nhc,cf->nhf", x, params["w_stem"]) + params["b_stem"], 0.0
    )
    pooled = jnp.mean(feat, axis=1)  # == features.mean([2, 3])
    logits = pooled @ params["w_heads"] + params["b_heads"]
    out = {}
    off = 0
    for name, dim in HEADS:
        out[name] = logits[:, off : off + dim]
        off += dim
    return out


if __name__ == "__main__":
    key = jax.random.PRNGKey(0)
    k_x, k_p = jax.random.split(key)
    # Small image batch consistent with the module's NCHW conv input.
    x = jax.random.normal(k_x, (2, 3, 16, 16), jnp.float32)
    params = init_params(k_p, in_channels=3)

    # max_rows=512 -> hw_chunk=64, 4 spatial chunks: exercises the reduction path.
    out = multitask_forward(x, params, bt=8, max_rows=512)
    out = jax.tree_util.tree_map(jax.block_until_ready, out)

    ref = reference_forward(x, params)
    for name, dim in HEADS:
        assert out[name].shape == (2, dim), (name, out[name].shape)
        assert bool(jnp.all(jnp.isfinite(out[name]))), name
        assert bool(jnp.allclose(out[name], ref[name], rtol=5e-2, atol=5e-3)), name
    print("KERNEL_OK")
</pallas_src>

<mosaic_0001>
module attributes {stable_mosaic.version = 11 : i64} {
  func.func @multitask_kernel(%arg0: i32, %arg1: i32, %arg2: memref<1x1x512x3xbf16, #tpu.memory_space<vmem>>, %arg3: memref<3x1280xbf16, #tpu.memory_space<vmem>>, %arg4: memref<1x1280xf32, #tpu.memory_space<vmem>>, %arg5: memref<1280x128xbf16, #tpu.memory_space<vmem>>, %arg6: memref<1x128xf32, #tpu.memory_space<vmem>>, %arg7: memref<8x512xbf16, #tpu.memory_space<vmem>>, %arg8: memref<8x128xf32, #tpu.memory_space<vmem>>, %arg9: memref<8x1280xf32, #tpu.memory_space<vmem>>) attributes {dimension_semantics = [#tpu.dimension_semantics<parallel>, #tpu.dimension_semantics<arbitrary>], iteration_bounds = array<i64: 1, 4>, scalar_prefetch = 0 : i64, scratch_operands = 1 : i64, tpu.core_type = #tpu.core_type<tc>, window_params = [{transform_indices = @transform_0, window_bounds = array<i64: 1, 1, 512, 3>}, {pipeline_mode = #tpu.pipeline_mode<synchronous>, transform_indices = @transform_1, window_bounds = array<i64: 3, 1280>}, {pipeline_mode = #tpu.pipeline_mode<synchronous>, transform_indices = @transform_2, window_bounds = array<i64: 1, 1280>}, {pipeline_mode = #tpu.pipeline_mode<synchronous>, transform_indices = @transform_3, window_bounds = array<i64: 1280, 128>}, {pipeline_mode = #tpu.pipeline_mode<synchronous>, transform_indices = @transform_4, window_bounds = array<i64: 1, 128>}, {pipeline_mode = #tpu.pipeline_mode<synchronous>, transform_indices = @transform_5, window_bounds = array<i64: 8, 512>}, {transform_indices = @transform_6, window_bounds = array<i64: 8, 128>}]} {
    %c0_i32 = arith.constant 0 : i32
    %0 = arith.cmpi eq, %arg1, %c0_i32 : i32
    %1 = arith.extui %0 : i1 to i32
    %c0_i32_0 = arith.constant 0 : i32
    %2 = arith.cmpi ne, %1, %c0_i32_0 : i32
    scf.if %2 {
      %cst_17 = arith.constant 0.000000e+00 : f32
      %21 = vector.broadcast %cst_17 : f32 to vector<8x1280xf32>
      %c0_18 = arith.constant 0 : index
      %c0_19 = arith.constant 0 : index
      %22 = vector.load %arg9[%c0_18, %c0_19] : memref<8x1280xf32, #tpu.memory_space<vmem>>, vector<8x1280xf32>
      tpu.vector_store %arg9[%c0_18, %c0_19], %21 {strides = array<i32>} : memref<8x1280xf32, #tpu.memory_space<vmem>>, vector<8x1280xf32>,
    } else {
    }
    %c0 = arith.constant 0 : index
    %c0_1 = arith.constant 0 : index
    %c0_2 = arith.constant 0 : index
    %c0_3 = arith.constant 0 : index
    %3 = vector.load %arg2[%c0, %c0_1, %c0_2, %c0_3] : memref<1x1x512x3xbf16, #tpu.memory_space<vmem>>, vector<1x1x512x3xbf16>
    %4 = vector.shape_cast %3 : vector<1x1x512x3xbf16> to vector<512x3xbf16>
    %c0_4 = arith.constant 0 : index
    %c0_5 = arith.constant 0 : index
    %5 = vector.load %arg3[%c0_4, %c0_5] : memref<3x1280xbf16, #tpu.memory_space<vmem>>, vector<3x1280xbf16>
    %cst = arith.constant dense<0.000000e+00> : vector<512x1280xf32>
    %6 = tpu.matmul %4, %5, %cst {dimension_numbers = #tpu.dot_dimension_numbers<[1], [0], [0], [1], [0, 0, 1, 1], [], []>} : vector<512x3xbf16>, vector<3x1280xbf16>, vector<512x1280xf32> -> vector<512x1280xf32>
    %c0_6 = arith.constant 0 : index
    %c0_7 = arith.constant 0 : index
    %7 = vector.load %arg4[%c0_6, %c0_7] : memref<1x1280xf32, #tpu.memory_space<vmem>>, vector<1x1280xf32>
    %8 = vector.broadcast %7 : vector<1x1280xf32> to vector<512x1280xf32>
    %9 = arith.addf %6, %8 : vector<512x1280xf32>
    %cst_8 = arith.constant 0.000000e+00 : f32
    %10 = vector.broadcast %cst_8 : f32 to vector<512x1280xf32>
    %11 = arith.maximumf %9, %10 : vector<512x1280xf32>
    %c0_9 = arith.constant 0 : index
    %c0_10 = arith.constant 0 : index
    %12 = vector.load %arg9[%c0_9, %c0_10] : memref<8x1280xf32, #tpu.memory_space<vmem>>, vector<8x1280xf32>
    %c0_11 = arith.constant 0 : index
    %c0_12 = arith.constant 0 : index
    %13 = vector.load %arg7[%c0_11, %c0_12] : memref<8x512xbf16, #tpu.memory_space<vmem>>, vector<8x512xbf16>
    %14 = arith.truncf %11 : vector<512x1280xf32> to vector<512x1280xbf16>
    %cst_13 = arith.constant dense<0.000000e+00> : vector<8x1280xf32>
    %15 = tpu.matmul %13, %14, %cst_13 {dimension_numbers = #tpu.dot_dimension_numbers<[1], [0], [0], [1], [0, 0, 1, 1], [], []>} : vector<8x512xbf16>, vector<512x1280xbf16>, vector<8x1280xf32> -> vector<8x1280xf32>
    %16 = arith.addf %12, %15 : vector<8x1280xf32>
    %c0_14 = arith.constant 0 : index
    %c0_15 = arith.constant 0 : index
    %17 = vector.load %arg9[%c0_14, %c0_15] : memref<8x1280xf32, #tpu.memory_space<vmem>>, vector<8x1280xf32>
    tpu.vector_store %arg9[%c0_14, %c0_15], %16 {strides = array<i32>} : memref<8x1280xf32, #tpu.memory_space<vmem>>, vector<8x1280xf32>,
    %c3_i32 = arith.constant 3 : i32
    %18 = arith.cmpi eq, %arg1, %c3_i32 : i32
    %19 = arith.extui %18 : i1 to i32
    %c0_i32_16 = arith.constant 0 : i32
    %20 = arith.cmpi ne, %19, %c0_i32_16 : i32
    scf.if %20 {
      %c0_17 = arith.constant 0 : index
      %c0_18 = arith.constant 0 : index
      %21 = vector.load %arg9[%c0_17, %c0_18] : memref<8x1280xf32, #tpu.memory_space<vmem>>, vector<8x1280xf32>
      %22 = arith.truncf %21 : vector<8x1280xf32> to vector<8x1280xbf16>
      %c0_19 = arith.constant 0 : index
      %c0_20 = arith.constant 0 : index
      %23 = vector.load %arg5[%c0_19, %c0_20] : memref<1280x128xbf16, #tpu.memory_space<vmem>>, vector<1280x128xbf16>
      %cst_21 = arith.constant dense<0.000000e+00> : vector<8x128xf32>
      %24 = tpu.matmul %22, %23, %cst_21 {dimension_numbers = #tpu.dot_dimension_numbers<[1], [0], [0], [1], [0, 0, 1, 1], [], []>} : vector<8x1280xbf16>, vector<1280x128xbf16>, vector<8x128xf32> -> vector<8x128xf32>
      %c0_22 = arith.constant 0 : index
      %c0_23 = arith.constant 0 : index
      %25 = vector.load %arg6[%c0_22, %c0_23] : memref<1x128xf32, #tpu.memory_space<vmem>>, vector<1x128xf32>
      %26 = vector.broadcast %25 : vector<1x128xf32> to vector<8x128xf32>
      %27 = arith.addf %24, %26 : vector<8x128xf32>
      %c0_24 = arith.constant 0 : index
      %c0_25 = arith.constant 0 : index
      %28 = vector.load %arg8[%c0_24, %c0_25] : memref<8x128xf32, #tpu.memory_space<vmem>>, vector<8x128xf32>
      tpu.vector_store %arg8[%c0_24, %c0_25], %27 {strides = array<i32>} : memref<8x128xf32, #tpu.memory_space<vmem>>, vector<8x128xf32>,
    } else {
    }
    return
  }
  func.func @transform_0(%arg0: i32, %arg1: i32) -> (i32, i32, i32, i32) {
    %c0_i32 = arith.constant 0 : i32
    %c0_i32_0 = arith.constant 0 : i32
    %c0_i32_1 = arith.constant 0 : i32
    return %arg0, %arg1, %c0_i32, %c0_i32_0 : i32, i32, i32, i32
  }
  func.func @transform_1(%arg0: i32, %arg1: i32) -> (i32, i32) {
    %c0_i32 = arith.constant 0 : i32
    %c0_i32_0 = arith.constant 0 : i32
    %c0_i32_1 = arith.constant 0 : i32
    return %c0_i32, %c0_i32_0 : i32, i32
  }
  func.func @transform_2(%arg0: i32, %arg1: i32) -> (i32, i32) {
    %c0_i32 = arith.constant 0 : i32
    %c0_i32_0 = arith.constant 0 : i32
    %c0_i32_1 = arith.constant 0 : i32
    return %c0_i32, %c0_i32_0 : i32, i32
  }
  func.func @transform_3(%arg0: i32, %arg1: i32) -> (i32, i32) {
    %c0_i32 = arith.constant 0 : i32
    %c0_i32_0 = arith.constant 0 : i32
    %c0_i32_1 = arith.constant 0 : i32
    return %c0_i32, %c0_i32_0 : i32, i32
  }
  func.func @transform_4(%arg0: i32, %arg1: i32) -> (i32, i32) {
    %c0_i32 = arith.constant 0 : i32
    %c0_i32_0 = arith.constant 0 : i32
    %c0_i32_1 = arith.constant 0 : i32
    return %c0_i32, %c0_i32_0 : i32, i32
  }
  func.func @transform_5(%arg0: i32, %arg1: i32) -> (i32, i32) {
    %c0_i32 = arith.constant 0 : i32
    %c0_i32_0 = arith.constant 0 : i32
    %c0_i32_1 = arith.constant 0 : i32
    return %c0_i32, %c0_i32_0 : i32, i32
  }
  func.func @transform_6(%arg0: i32, %arg1: i32) -> (i32, i32) {
    %c0_i32 = arith.constant 0 : i32
    %c0_i32_0 = arith.constant 0 : i32
    return %arg0, %c0_i32 : i32, i32
  }
}

</mosaic_0001>

<llo_original>
// kernel: multitask_forward.1
$region0: #{multitask_forward.1}
  #allocation0 [shape = 'u32[]', space=smem, size = 0x4, offset = 0x4, fixed_abs, tag = 'smem constant byte address 0x4 - core index']
  #allocation1 [shape = 'u32[144,128]{1,0:T(1,128)}', space=vmem, size = 0x12000, scoped, tag = 'internal scratch']
  #allocation2 [shape = 'f32[8,1280]{1,0:T(8,128)}', space=vmem, size = 0xa000, scoped, tag = 'scratch operand']
  %s0 = inlined_call_operand.vmem [shape: bf16[1,4,512,3], index: 0, kind: input, shape index: {}]
  %s1 = inlined_call_operand.vmem [shape: bf16[3,1280], index: 1, kind: input, shape index: {}]
  %s2 = inlined_call_operand.vmem [shape: f32[1,1280], index: 2, kind: input, shape index: {}]
  %s3 = inlined_call_operand.vmem [shape: bf16[1280,128], index: 3, kind: input, shape index: {}]
  %s4 = inlined_call_operand.vmem [shape: f32[1,128], index: 4, kind: input, shape index: {}]
  %s5 = inlined_call_operand.vmem [shape: bf16[8,512], index: 5, kind: input, shape index: {}]
  %s6 = inlined_call_operand.vmem [shape: f32[8,128], index: 6, kind: output, shape index: {}]
  %s7 = sld [smem:[#allocation0]]
  $region65: #{multitask_forward.1} parent=0
    _
  %s9 = ssub.s32 1, %s7
  %s10 = scalar_select 0, %s9, %s7
  loop: start=0, step=1, limit=6
  $region2: #{multitask_forward.1} parent=0 // loop_pre_header
    _
  $region3: #{multitask_forward.1} parent=0 // loop_header
    %s12 = sphi 0, %s16
    %p13 = scmp.ge.s32.totalorder %s12, 6
    %s19 = sphi 0, %s31
    %s20 = sphi 0, %s27
    %s21 = sphi 0, %s19
    %s22 = sphi 0, %s20
    %s23 = sphi 0, %s21
    %s24 = sphi 0, %s22
    %s36 = sphi 0, %s38
    %s39 = sphi 0, %s36
    %s40 = sphi 0, %s39
    %s56 = sphi 0, %s40
    %s60 = sphi 0, %s60
    %s62 = sphi 0, %s60
    %s63 = sphi 0, %s62
    %s77 = sphi 0, %s63
    %s81 = sphi 0, %s81
    %s83 = sphi 0, %s81
    %s84 = sphi 0, %s83
    %s98 = sphi 0, %s84
    %s102 = sphi 0, %s102
    %s104 = sphi 0, %s102
    %s105 = sphi 0, %s104
    %s119 = sphi 0, %s105
    %s123 = sphi 0, %s123
    %s125 = sphi 0, %s123
    %s126 = sphi 0, %s125
    %s140 = sphi 0, %s126
    %s144 = sphi 0, %s144
    %s146 = sphi 0, %s144
    %s147 = sphi 0, %s146
    %s161 = sphi 0, %s147
    %s167 = sphi 0, %s169
    %s170 = sphi 0, %s167
    %s171 = sphi 0, %s170
    %s187 = sphi 0, %s171
  $region4: #{multitask_forward.1} parent=0 // loop_header_branch
    %15 = sbr.rel (%p13) target = $region8
  $region5: #{multitask_forward.1} parent=0 // loop_body
    %s17 = ssub.s32 %s12, 1
    %s18 = ssub.s32 %s12, 2
    %s25 = sadd.s32 1, %s20
    %p26 = scmp.ge.s32.totalorder %s25, 4
    %s27 = scalar_select %p26, 0, %s25
    %s28 = sadd.s32 1, %s19
    %s29 = scalar_select %p26, %s28, %s19
    %p30 = scmp.ge.s32.totalorder %s29, 1
    %s31 = scalar_select %p30, 0, %s29
    %s32 = ssub.s32 %s19, %s31
    %s33 = ssub.s32 %s20, %s27
    %s34 = sor.u32 %s32, %s33
    %p35 = scmp.eq.s32.totalorder %s34, 0
    %s37 = sadd.s32 %s36, 1
    %s38 = scalar_select %p35, %s36, %s37
    %p41 = pneg %p35
    %p42 = scmp.eq.s32.totalorder %s12, 3
    %p43 = por %p41, %p42
    %p44 = scmp.ne.s32.totalorder %s36, %s39
    %p45 = scmp.eq.s32.totalorder %s12, 0
    %p46 = por %p44, %p45
    %p47 = scmp.ne.s32.totalorder %s36, %s39
    %p48 = scmp.eq.s32.totalorder %s17, 3
    %p49 = por %p47, %p48
    %p50 = scmp.ne.s32.totalorder %s39, %s40
    %p51 = scmp.eq.s32.totalorder %s17, 0
    %p52 = por %p50, %p51
    %p53 = scmp.ne.s32.totalorder %s39, %s40
    %p54 = scmp.eq.s32.totalorder %s18, 3
    %p55 = por %p53, %p54
    %p57 = scmp.ne.s32.totalorder %s40, %s56
    %p58 = scmp.eq.s32.totalorder %s18, 0
    %p59 = por %p57, %p58
    %s61 = sadd.s32 %s60, 1
    %p64 = scmp.eq.s32.totalorder %s12, 3
    %p65 = scmp.ne.s32.totalorder %s60, %s62
    %p66 = scmp.eq.s32.totalorder %s12, 0
    %p67 = por %p65, %p66
    %p68 = scmp.ne.s32.totalorder %s60, %s62
    %p69 = scmp.eq.s32.totalorder %s17, 3
    %p70 = por %p68, %p69
    %p71 = scmp.ne.s32.totalorder %s62, %s63
    %p72 = scmp.eq.s32.totalorder %s17, 0
    %p73 = por %p71, %p72
    %p74 = scmp.ne.s32.totalorder %s62, %s63
    %p75 = scmp.eq.s32.totalorder %s18, 3
    %p76 = por %p74, %p75
    %p78 = scmp.ne.s32.totalorder %s63, %s77
    %p79 = scmp.eq.s32.totalorder %s18, 0
    %p80 = por %p78, %p79
    %s82 = sadd.s32 %s81, 1
    %p85 = scmp.eq.s32.totalorder %s12, 3
    %p86 = scmp.ne.s32.totalorder %s81, %s83
    %p87 = scmp.eq.s32.totalorder %s12, 0
    %p88 = por %p86, %p87
    %p89 = scmp.ne.s32.totalorder %s81, %s83
    %p90 = scmp.eq.s32.totalorder %s17, 3
    %p91 = por %p89, %p90
    %p92 = scmp.ne.s32.totalorder %s83, %s84
    %p93 = scmp.eq.s32.totalorder %s17, 0
    %p94 = por %p92, %p93
    %p95 = scmp.ne.s32.totalorder %s83, %s84
    %p96 = scmp.eq.s32.totalorder %s18, 3
    %p97 = por %p95, %p96
    %p99 = scmp.ne.s32.totalorder %s84, %s98
    %p100 = scmp.eq.s32.totalorder %s18, 0
    %p101 = por %p99, %p100
    %s103 = sadd.s32 %s102, 1
    %p106 = scmp.eq.s32.totalorder %s12, 3
    %p107 = scmp.ne.s32.totalorder %s102, %s104
    %p108 = scmp.eq.s32.totalorder %s12, 0
    %p109 = por %p107, %p108
    %p110 = scmp.ne.s32.totalorder %s102, %s104
    %p111 = scmp.eq.s32.totalorder %s17, 3
    %p112 = por %p110, %p111
    %p113 = scmp.ne.s32.totalorder %s104, %s105
    %p114 = scmp.eq.s32.totalorder %s17, 0
    %p115 = por %p113, %p114
    %p116 = scmp.ne.s32.totalorder %s104, %s105
    %p117 = scmp.eq.s32.totalorder %s18, 3
    %p118 = por %p116, %p117
    %p120 = scmp.ne.s32.totalorder %s105, %s119
    %p121 = scmp.eq.s32.totalorder %s18, 0
    %p122 = por %p120, %p121
    %s124 = sadd.s32 %s123, 1
    %p127 = scmp.eq.s32.totalorder %s12, 3
    %p128 = scmp.ne.s32.totalorder %s123, %s125
    %p129 = scmp.eq.s32.totalorder %s12, 0
    %p130 = por %p128, %p129
    %p131 = scmp.ne.s32.totalorder %s123, %s125
    %p132 = scmp.eq.s32.totalorder %s17, 3
    %p133 = por %p131, %p132
    %p134 = scmp.ne.s32.totalorder %s125, %s126
    %p135 = scmp.eq.s32.totalorder %s17, 0
    %p136 = por %p134, %p135
    %p137 = scmp.ne.s32.totalorder %s125, %s126
    %p138 = scmp.eq.s32.totalorder %s18, 3
    %p139 = por %p137, %p138
    %p141 = scmp.ne.s32.totalorder %s126, %s140
    %p142 = scmp.eq.s32.totalorder %s18, 0
    %p143 = por %p141, %p142
    %s145 = sadd.s32 %s144, 1
    %p148 = scmp.eq.s32.totalorder %s12, 3
    %p149 = scmp.ne.s32.totalorder %s144, %s146
    %p150 = scmp.eq.s32.totalorder %s12, 0
    %p151 = por %p149, %p150
    %p152 = scmp.ne.s32.totalorder %s144, %s146
    %p153 = scmp.eq.s32.totalorder %s17, 3
    %p154 = por %p152, %p153
    %p155 = scmp.ne.s32.totalorder %s146, %s147
    %p156 = scmp.eq.s32.totalorder %s17, 0
    %p157 = por %p155, %p156
    %p158 = scmp.ne.s32.totalorder %s146, %s147
    %p159 = scmp.eq.s32.totalorder %s18, 3
    %p160 = por %p158, %p159
    %p162 = scmp.ne.s32.totalorder %s147, %s161
    %p163 = scmp.eq.s32.totalorder %s18, 0
    %p164 = por %p162, %p163
    %s165 = ssub.s32 %s19, %s31
    %p166 = scmp.eq.s32.totalorder %s165, 0
    %s168 = sadd.s32 %s167, 1
    %s169 = scalar_select %p166, %s167, %s168
    %p172 = pneg %p166
    %p173 = scmp.eq.s32.totalorder %s12, 3
    %p174 = por %p172, %p173
    %p175 = scmp.ne.s32.totalorder %s167, %s170
    %p176 = scmp.eq.s32.totalorder %s12, 0
    %p177 = por %p175, %p176
    %p178 = scmp.ne.s32.totalorder %s167, %s170
    %p179 = scmp.eq.s32.totalorder %s17, 3
    %p180 = por %p178, %p179
    %p181 = scmp.ne.s32.totalorder %s170, %s171
    %p182 = scmp.eq.s32.totalorder %s17, 0
    %p183 = por %p181, %p182
    %p184 = scmp.ne.s32.totalorder %s170, %s171
    %p185 = scmp.eq.s32.totalorder %s18, 3
    %p186 = por %p184, %p185
    %p188 = scmp.ne.s32.totalorder %s171, %s187
    %p189 = scmp.eq.s32.totalorder %s18, 0
    %p190 = por %p188, %p189
    %p191 = scmp.le.s32.totalorder 1, %s12
    %p192 = scmp.lt.s32.totalorder %s12, 5
    %p193 = pnand %p191, %p192
    %p194 = pneg %p193
    // Predicated region
    $region9: #{multitask_forward.1} parent=5 // pred_check
      _
    $region10: #{multitask_forward.1} parent=5 // pred_check_branch
      %196 = sbr.rel (%p193) target = $region12
    $region11: #{multitask_forward.1} parent=5 // pred_region
      %s197 = ssub.s32 %s12, 1
      // Predicated region
      $region13: #{multitask_forward.1} parent=11 // pred_check
        %p198 = pneg %p73
      $region14: #{multitask_forward.1} parent=11 // pred_check_branch
        %200 = sbr.rel (%p198) target = $region16
      $region15: #{multitask_forward.1} parent=11 // pred_region
        _
      $region16: #{multitask_forward.1} parent=11 // pred_fallthru
        _
      // Predicated region
      $region17: #{multitask_forward.1} parent=11 // pred_check
        %p201 = pneg %p94
      $region18: #{multitask_forward.1} parent=11 // pred_check_branch
        %203 = sbr.rel (%p201) target = $region20
      $region19: #{multitask_forward.1} parent=11 // pred_region
        _
      $region20: #{multitask_forward.1} parent=11 // pred_fallthru
        _
      // Predicated region
      $region21: #{multitask_forward.1} parent=11 // pred_check
        %p204 = pneg %p115
      $region22: #{multitask_forward.1} parent=11 // pred_check_branch
        %206 = sbr.rel (%p204) target = $region24
      $region23: #{multitask_forward.1} parent=11 // pred_region
        _
      $region24: #{multitask_forward.1} parent=11 // pred_fallthru
        _
      // Predicated region
      $region25: #{multitask_forward.1} parent=11 // pred_check
        %p207 = pneg %p136
      $region26: #{multitask_forward.1} parent=11 // pred_check_branch
        %209 = sbr.rel (%p207) target = $region28
      $region27: #{multitask_forward.1} parent=11 // pred_region
        _
      $region28: #{multitask_forward.1} parent=11 // pred_fallthru
        _
      // Predicated region
      $region29: #{multitask_forward.1} parent=11 // pred_check
        %p210 = pneg %p157
      $region30: #{multitask_forward.1} parent=11 // pred_check_branch
        %212 = sbr.rel (%p210) target = $region32
      $region31: #{multitask_forward.1} parent=11 // pred_region
        _
      $region32: #{multitask_forward.1} parent=11 // pred_fallthru
        _
    $region12: #{multitask_forward.1} parent=5 // pred_fallthru
      _
    %p213 = scmp.lt.s32.totalorder %s12, 4
    // Predicated region
    $region33: #{multitask_forward.1} parent=5 // pred_check
      %p214 = pneg %p213
    $region34: #{multitask_forward.1} parent=5 // pred_check_branch
      %216 = sbr.rel (%p214) target = $region36
    $region35: #{multitask_forward.1} parent=5 // pred_region
      // Predicated region
      $region37: #{multitask_forward.1} parent=35 // pred_check
        %p217 = pneg %p46
      $region38: #{multitask_forward.1} parent=35 // pred_check_branch
        %219 = sbr.rel (%p217) target = $region40
      $region39: #{multitask_forward.1} parent=35 // pred_region
        %p220 = scmp.lt.s32.totalorder %s19, 0
        %s221 = scalar_select %p220, %s19, 0
        %p222 = scmp.lt.s32.totalorder %s20, 3
        %s223 = scalar_select %p222, %s20, 3
        %s224 = smul.addr %s223, 64
        %s225 = smul.addr %s221, 256
        %s226 = sadd.s32 %s224, %s225
        %s227 = smul.addr %s226, 4
        %s228 = scalar_lea.vmem %s0, %s227
      $region40: #{multitask_forward.1} parent=35 // pred_fallthru
        _
    $region36: #{multitask_forward.1} parent=5 // pred_fallthru
      _
    %p229 = scmp.le.s32.totalorder 1, %s12
    %p230 = scmp.lt.s32.totalorder %s12, 5
    %p231 = pnand %p229, %p230
    %p232 = pneg %p231
    // Predicated region
    $region41: #{multitask_forward.1} parent=5 // pred_check
      _
    $region42: #{multitask_forward.1} parent=5 // pred_check_branch
      %234 = sbr.rel (%p231) target = $region44
    $region43: #{multitask_forward.1} parent=5 // pred_region
      %s235 = ssub.s32 %s12, 1
      %p236 = scmp.lt.s32.totalorder %s21, 0
      %s237 = scalar_select %p236, %s21, 0
      %p238 = scmp.lt.s32.totalorder %s22, 3
      %s239 = scalar_select %p238, %s22, 3
      %s240 = smul.addr %s239, 64
      %s241 = smul.addr %s237, 256
      %s242 = sadd.s32 %s240, %s241
      %s243 = smul.addr %s242, 4
      %s244 = scalar_lea.vmem %s0, %s243
      %p245 = pneg %p52
      %p246 = pneg %p49
      %p247 = pneg %p73
      %p248 = pneg %p70
      %p249 = pneg %p94
      %p250 = pneg %p91
      %p251 = pneg %p115
      %p252 = pneg %p112
      %p253 = pneg %p136
      %p254 = pneg %p133
      %p255 = pneg %p157
      %p256 = pneg %p154
      %p257 = pneg %p183
      %p258 = pneg %p180
      %p259 = scmp.lt.s32.totalorder %s21, 0
      %s260 = scalar_select %p259, %s21, 0
      %s261 = smul.addr %s260, 8
      %s262 = scalar_lea.vmem %s6, %s261
      %p263 = scmp.lt.s32.totalorder %s21, 0
      %s264 = scalar_select %p263, %s21, 0
      %p265 = scmp.lt.s32.totalorder %s22, 3
      %s266 = scalar_select %p265, %s22, 3
      %s267 = smul.addr %s266, 64
      %s268 = smul.addr %s264, 256
      %s269 = sadd.s32 %s267, %s268
      %s270 = smul.addr %s269, 4
      %s271 = scalar_lea.vmem %s0, %s270
      %p272 = scmp.lt.s32.totalorder %s21, 0
      %s273 = scalar_select %p272, %s21, 0
      %s274 = smul.addr %s273, 8
      %s275 = scalar_lea.vmem %s6, %s274
      %p277 = scmp.eq.s32.totalorder %s22, 0
      // Predicated region
      $region45: #{multitask_forward.1} parent=43 // pred_check
        %p278 = pneg %p277
      $region46: #{multitask_forward.1} parent=43 // pred_check_branch
        %280 = sbr.rel (%p278) target = $region48
      $region47: #{multitask_forward.1} parent=43 // pred_region
        %281 = vst [vmem:[#allocation2] sm:$0xff] 0.0
        %282 = vst [vmem:[#allocation2 + $0x8] sm:$0xff] 0.0
        %283 = vst [vmem:[#allocation2 + $0x10] sm:$0xff] 0.0
        %284 = vst [vmem:[#allocation2 + $0x18] sm:$0xff] 0.0
        %285 = vst [vmem:[#allocation2 + $0x20] sm:$0xff] 0.0
        %286 = vst [vmem:[#allocation2 + $0x28] sm:$0xff] 0.0
        %287 = vst [vmem:[#allocation2 + $0x30] sm:$0xff] 0.0
        %288 = vst [vmem:[#allocation2 + $0x38] sm:$0xff] 0.0
        %289 = vst [vmem:[#allocation2 + $0x40] sm:$0xff] 0.0
        %290 = vst [vmem:[#allocation2 + $0x48] sm:$0xff] 0.0
      $region48: #{multitask_forward.1} parent=43 // pred_fallthru
        _
      %v291 = vld [vmem:[%s271] sm:$0xf]
      %v292 = vld [vmem:[%s271 + $0x4] sm:$0xf]
      %v293 = vld [vmem:[%s271 + $0x8] sm:$0xf]
      %v294 = vld [vmem:[%s271 + $0xc] sm:$0xf]
      %v295 = vld [vmem:[%s271 + $0x10] sm:$0xf]
      %v296 = vld [vmem:[%s271 + $0x14] sm:$0xf]
      %v297 = vld [vmem:[%s271 + $0x18] sm:$0xf]
      %v298 = vld [vmem:[%s271 + $0x1c] sm:$0xf]
      %v299 = vld [vmem:[%s271 + $0x20] sm:$0xf]
      %v300 = vld [vmem:[%s271 + $0x24] sm:$0xf]
      %v301 = vld [vmem:[%s271 + $0x28] sm:$0xf]
      %v302 = vld [vmem:[%s271 + $0x2c] sm:$0xf]
      %v303 = vld [vmem:[%s271 + $0x30] sm:$0xf]
      %v304 = vld [vmem:[%s271 + $0x34] sm:$0xf]
      %v305 = vld [vmem:[%s271 + $0x38] sm:$0xf]
      %v306 = vld [vmem:[%s271 + $0x3c] sm:$0xf]
      %v307 = vld [vmem:[%s271 + $0x40] sm:$0xf]
      %v308 = vld [vmem:[%s271 + $0x44] sm:$0xf]
      %v309 = vld [vmem:[%s271 + $0x48] sm:$0xf]
      %v310 = vld [vmem:[%s271 + $0x4c] sm:$0xf]
      %v311 = vld [vmem:[%s271 + $0x50] sm:$0xf]
      %v312 = vld [vmem:[%s271 + $0x54] sm:$0xf]
      %v313 = vld [vmem:[%s271 + $0x58] sm:$0xf]
      %v314 = vld [vmem:[%s271 + $0x5c] sm:$0xf]
      %v315 = vld [vmem:[%s271 + $0x60] sm:$0xf]
      %v316 = vld [vmem:[%s271 + $0x64] sm:$0xf]
      %v317 = vld [vmem:[%s271 + $0x68] sm:$0xf]
      %v318 = vld [vmem:[%s271 + $0x6c] sm:$0xf]
      %v319 = vld [vmem:[%s271 + $0x70] sm:$0xf]
      %v320 = vld [vmem:[%s271 + $0x74] sm:$0xf]
      %v321 = vld [vmem:[%s271 + $0x78] sm:$0xf]
      %v322 = vld [vmem:[%s271 + $0x7c] sm:$0xf]
      %v323 = vld [vmem:[%s271 + $0x80] sm:$0xf]
      %v324 = vld [vmem:[%s271 + $0x84] sm:$0xf]
      %v325 = vld [vmem:[%s271 + $0x88] sm:$0xf]
      %v326 = vld [vmem:[%s271 + $0x8c] sm:$0xf]
      %v327 = vld [vmem:[%s271 + $0x90] sm:$0xf]
      %v328 = vld [vmem:[%s271 + $0x94] sm:$0xf]
      %v329 = vld [vmem:[%s271 + $0x98] sm:$0xf]
      %v330 = vld [vmem:[%s271 + $0x9c] sm:$0xf]
      %v331 = vld [vmem:[%s271 + $0xa0] sm:$0xf]
      %v332 = vld [vmem:[%s271 + $0xa4] sm:$0xf]
      %v333 = vld [vmem:[%s271 + $0xa8] sm:$0xf]
      %v334 = vld [vmem:[%s271 + $0xac] sm:$0xf]
      %v335 = vld [vmem:[%s271 + $0xb0] sm:$0xf]
      %v336 = vld [vmem:[%s271 + $0xb4] sm:$0xf]
      %v337 = vld [vmem:[%s271 + $0xb8] sm:$0xf]
      %v338 = vld [vmem:[%s271 + $0xbc] sm:$0xf]
      %v339 = vld [vmem:[%s271 + $0xc0] sm:$0xf]
      %v340 = vld [vmem:[%s271 + $0xc4] sm:$0xf]
      %v341 = vld [vmem:[%s271 + $0xc8] sm:$0xf]
      %v342 = vld [vmem:[%s271 + $0xcc] sm:$0xf]
      %v343 = vld [vmem:[%s271 + $0xd0] sm:$0xf]
      %v344 = vld [vmem:[%s271 + $0xd4] sm:$0xf]
      %v345 = vld [vmem:[%s271 + $0xd8] sm:$0xf]
      %v346 = vld [vmem:[%s271 + $0xdc] sm:$0xf]
      %v347 = vld [vmem:[%s271 + $0xe0] sm:$0xf]
      %v348 = vld [vmem:[%s271 + $0xe4] sm:$0xf]
      %v349 = vld [vmem:[%s271 + $0xe8] sm:$0xf]
      %v350 = vld [vmem:[%s271 + $0xec] sm:$0xf]
      %v351 = vld [vmem:[%s271 + $0xf0] sm:$0xf]
      %v352 = vld [vmem:[%s271 + $0xf4] sm:$0xf]
      %v353 = vld [vmem:[%s271 + $0xf8] sm:$0xf]
      %v354 = vld [vmem:[%s271 + $0xfc] sm:$0xf]
      %v355 = vld [vmem:[%s1] sm:$0xff]
      %v356 = vld [vmem:[%s1 + $0x8] sm:$0xff]
      %v357 = vld [vmem:[%s1 + $0x10] sm:$0xf]
      %v358 = vld [vmem:[%s2] sm:$0xff]
      %v359 = vld [vmem:[%s2 + $0x8] sm:$0x3]
      %v362 = vlaneseq
      %v363 = vshrl.u32 %v362, 7
      %v364 = vsub.s32 0, %v363
      %v365 = vrot.slane %v358, %v364
      %v366 = vlaneseq
      %v367 = vshrl.u32 %v366, 7
      %v368 = vsub.s32 1, %v367
      %v369 = vrot.slane %v358, %v368
      %v370 = vlaneseq
      %v371 = vshrl.u32 %v370, 7
      %v372 = vsub.s32 2, %v371
      %v373 = vrot.slane %v358, %v372
      %v374 = vlaneseq
      %v375 = vshrl.u32 %v374, 7
      %v376 = vsub.s32 3, %v375
      %v377 = vrot.slane %v358, %v376
      %v378 = vlaneseq
      %v379 = vshrl.u32 %v378, 7
      %v380 = vsub.s32 4, %v379
      %v381 = vrot.slane %v358, %v380
      %v382 = vlaneseq
      %v383 = vshrl.u32 %v382, 7
      %v384 = vsub.s32 5, %v383
      %v385 = vrot.slane %v358, %v384
      %v386 = vlaneseq
      %v387 = vshrl.u32 %v386, 7
      %v388 = vsub.s32 6, %v387
      %v389 = vrot.slane %v358, %v388
      %v390 = vlaneseq
      %v391 = vshrl.u32 %v390, 7
      %v392 = vsub.s32 7, %v391
      %v393 = vrot.slane %v358, %v392
      %v394 = vlaneseq
      %v395 = vshrl.u32 %v394, 7
      %v396 = vsub.s32 0, %v395
      %v397 = vrot.slane %v359, %v396
      %v398 = vlaneseq
      %v399 = vshrl.u32 %v398, 7
      %v400 = vsub.s32 1, %v399
      %v401 = vrot.slane %v359, %v400
      %v476 = vunpack.c.l.b16 %v291
      %v477 = vunpack.c.l.b16 %v292
      %v478 = vunpack.c.l.b16 %v293
      %v479 = vunpack.c.l.b16 %v294
      %v480 = vunpack.c.l.b16 %v295
      %v481 = vunpack.c.l.b16 %v296
      %v482 = vunpack.c.l.b16 %v297
      %v483 = vunpack.c.l.b16 %v298
      %v484 = vunpack.c.l.b16 %v299
      %v485 = vunpack.c.l.b16 %v300
      %v486 = vunpack.c.l.b16 %v301
      %v487 = vunpack.c.l.b16 %v302
      %v488 = vunpack.c.l.b16 %v303
      %v489 = vunpack.c.l.b16 %v304
      %v490 = vunpack.c.l.b16 %v305
      %v491 = vunpack.c.l.b16 %v306
      %v492 = vunpack.c.l.b16 %v307
      %v493 = vunpack.c.l.b16 %v308
      %v494 = vunpack.c.l.b16 %v309
      %v495 = vunpack.c.l.b16 %v310
      %v496 = vunpack.c.l.b16 %v311
      %v497 = vunpack.c.l.b16 %v312
      %v498 = vunpack.c.l.b16 %v313
      %v499 = vunpack.c.l.b16 %v314
      %v500 = vunpack.c.l.b16 %v315
      %v501 = vunpack.c.l.b16 %v316
      %v502 = vunpack.c.l.b16 %v317
      %v503 = vunpack.c.l.b16 %v318
      %v504 = vunpack.c.l.b16 %v319
      %v505 = vunpack.c.l.b16 %v320
      %v506 = vunpack.c.l.b16 %v321
      %v507 = vunpack.c.l.b16 %v322
      %v508 = vunpack.c.l.b16 %v323
      %v509 = vunpack.c.l.b16 %v324
      %v510 = vunpack.c.l.b16 %v325
      %v511 = vunpack.c.l.b16 %v326
      %v512 = vunpack.c.l.b16 %v327
      %v513 = vunpack.c.l.b16 %v328
      %v514 = vunpack.c.l.b16 %v329
      %v515 = vunpack.c.l.b16 %v330
      %v516 = vunpack.c.l.b16 %v331
      %v517 = vunpack.c.l.b16 %v332
      %v518 = vunpack.c.l.b16 %v333
      %v519 = vunpack.c.l.b16 %v334
      %v520 = vunpack.c.l.b16 %v335
      %v521 = vunpack.c.l.b16 %v336
      %v522 = vunpack.c.l.b16 %v337
      %v523 = vunpack.c.l.b16 %v338
      %v524 = vunpack.c.l.b16 %v339
      %v525 = vunpack.c.l.b16 %v340
      %v526 = vunpack.c.l.b16 %v341
      %v527 = vunpack.c.l.b16 %v342
      %v528 = vunpack.c.l.b16 %v343
      %v529 = vunpack.c.l.b16 %v344
      %v530 = vunpack.c.l.b16 %v345
      %v531 = vunpack.c.l.b16 %v346
      %v532 = vunpack.c.l.b16 %v347
      %v533 = vunpack.c.l.b16 %v348
      %v534 = vunpack.c.l.b16 %v349
      %v535 = vunpack.c.l.b16 %v350
      %v536 = vunpack.c.l.b16 %v351
      %v537 = vunpack.c.l.b16 %v352
      %v538 = vunpack.c.l.b16 %v353
      %v539 = vunpack.c.l.b16 %v354
      %v540 = vpack.c.b16 %v477, %v476
      %v541 = vpack.c.b16 %v479, %v478
      %v542 = vpack.c.b16 %v481, %v480
      %v543 = vpack.c.b16 %v483, %v482
      %v544 = vpack.c.b16 %v485, %v484
      %v545 = vpack.c.b16 %v487, %v486
      %v546 = vpack.c.b16 %v489, %v488
      %v547 = vpack.c.b16 %v491, %v490
      %v548 = vpack.c.b16 %v493, %v492
      %v549 = vpack.c.b16 %v495, %v494
      %v550 = vpack.c.b16 %v497, %v496
      %v551 = vpack.c.b16 %v499, %v498
      %v552 = vpack.c.b16 %v501, %v500
      %v553 = vpack.c.b16 %v503, %v502
      %v554 = vpack.c.b16 %v505, %v504
      %v555 = vpack.c.b16 %v507, %v506
      %v556 = vpack.c.b16 %v509, %v508
      %v557 = vpack.c.b16 %v511, %v510
      %v558 = vpack.c.b16 %v513, %v512
      %v559 = vpack.c.b16 %v515, %v514
      %v560 = vpack.c.b16 %v517, %v516
      %v561 = vpack.c.b16 %v519, %v518
      %v562 = vpack.c.b16 %v521, %v520
      %v563 = vpack.c.b16 %v523, %v522
      %v564 = vpack.c.b16 %v525, %v524
      %v565 = vpack.c.b16 %v527, %v526
      %v566 = vpack.c.b16 %v529, %v528
      %v567 = vpack.c.b16 %v531, %v530
      %v568 = vpack.c.b16 %v533, %v532
      %v569 = vpack.c.b16 %v535, %v534
      %v570 = vpack.c.b16 %v537, %v536
      %v571 = vpack.c.b16 %v539, %v538
      %v575 = vcombine.high %v355, %v355
      %v577 = vunpack.c.l.s4 1983009808
      %v578 = vunpack.c.0.s8 %v577
      %v579 = vlaneseq
      %v580 = vshrl.u32 %v579, 7
      %v581 = vsub.s32 %v578, %v580
      %v582 = vrot.slane %v355, %v581
      %v584 = vunpack.c.l.s4 1983009808
      %v585 = vunpack.c.0.s8 %v584
      %v586 = vlaneseq
      %v587 = vshrl.u32 %v586, 7
      %v588 = vsub.s32 %v585, %v587
      %v589 = vrot.slane %v575, %v588
      %v590 = vcombine.high %v582, %v582
      %v591 = vcombine.high %v589, %v589
      %v592 = vcombine.high %v356, %v356
      %v594 = vunpack.c.l.s4 1983009808
      %v595 = vunpack.c.0.s8 %v594
      %v596 = vlaneseq
      %v597 = vshrl.u32 %v596, 7
      %v598 = vsub.s32 %v595, %v597
      %v599 = vrot.slane %v356, %v598
      %v601 = vunpack.c.l.s4 1983009808
      %v602 = vunpack.c.0.s8 %v601
      %v603 = vlaneseq
      %v604 = vshrl.u32 %v603, 7
      %v605 = vsub.s32 %v602, %v604
      %v606 = vrot.slane %v592, %v605
      %v607 = vcombine.high %v599, %v599
      %v608 = vcombine.high %v606, %v606
      %v610 = vunpack.c.l.s4 1983009808
      %v611 = vunpack.c.0.s8 %v610
      %v612 = vlaneseq
      %v613 = vshrl.u32 %v612, 7
      %v614 = vsub.s32 %v611, %v613
      %v615 = vrot.slane %v357, %v614
      %v616 = vcombine.high %v615, %v615
      %vm617 = vcmask 23552
      %v619 = vsel %vm617, %v540, 0
      %v622 = vsel %vm617, %v541, 0
      %v625 = vsel %vm617, %v542, 0
      %v628 = vsel %vm617, %v543, 0
      %v631 = vsel %vm617, %v544, 0
      %v634 = vsel %vm617, %v545, 0
      %v637 = vsel %vm617, %v546, 0
      %v640 = vsel %vm617, %v547, 0
      %v643 = vsel %vm617, %v548, 0
      %v646 = vsel %vm617, %v549, 0
      %v649 = vsel %vm617, %v550, 0
      %v652 = vsel %vm617, %v551, 0
      %v655 = vsel %vm617, %v552, 0
      %v658 = vsel %vm617, %v553, 0
      %v661 = vsel %vm617, %v554, 0
      %v664 = vsel %vm617, %v555, 0
      %v667 = vsel %vm617, %v556, 0
      %v670 = vsel %vm617, %v557, 0
      %v673 = vsel %vm617, %v558, 0
      %v676 = vsel %vm617, %v559, 0
      %v679 = vsel %vm617, %v560, 0
      %v682 = vsel %vm617, %v561, 0
      %v685 = vsel %vm617, %v562, 0
      %v688 = vsel %vm617, %v563, 0
      %v691 = vsel %vm617, %v564, 0
      %v694 = vsel %vm617, %v565, 0
      %v697 = vsel %vm617, %v566, 0
      %v700 = vsel %vm617, %v567, 0
      %v703 = vsel %vm617, %v568, 0
      %v706 = vsel %vm617, %v569, 0
      %v709 = vsel %vm617, %v570, 0
      %v712 = vsel %vm617, %v571, 0
      %vm714 = vcmask 1040384
      %vm715 = vcmask 1041408
      %v716 = vsel %vm714, 4294967295, 65535
      %v717 = vsel %vm715, %v716, 0
      %v719 = vand.u32 %v582, %v717
      %v722 = vand.u32 %v590, %v717
      %v725 = vand.u32 %v589, %v717
      %v728 = vand.u32 %v591, %v717
      %v731 = vand.u32 %v599, %v717
      %v734 = vand.u32 %v607, %v717
      %v737 = vand.u32 %v606, %v717
      %v740 = vand.u32 %v608, %v717
      %v743 = vand.u32 %v615, %v717
      %v746 = vand.u32 %v616, %v717
      %748 = vmatprep.subr.bf16.mxu0 %v722
      %749 = vmatpush1.bf16.msra.mxu0 %v719
      %750 = vmatprep.subr.bf16.mxu0 0
      %751 = vmatpush1.bf16.msra.mxu0 0
      %752 = vmatprep.subr.bf16.mxu0 0
      %753 = vmatpush1.bf16.msra.mxu0 0
      %754 = vmatprep.subr.bf16.mxu0 0
      %755 = vmatpush1.bf16.msra.mxu0 0
      %756 = vmatprep.subr.bf16.mxu0 0
      %757 = vmatpush1.bf16.msra.mxu0 0
      %758 = vmatprep.subr.bf16.mxu0 0
      %759 = vmatpush1.bf16.msra.mxu0 0
      %760 = vmatprep.subr.bf16.mxu0 0
      %761 = vmatpush1.bf16.msra.mxu0 0
      %762 = vmatprep.subr.bf16.mxu0 0
      %763 = vmatpush1.bf16.msra.mxu0 0
      %764 = vmatprep.subr.bf16.mxu0 0
      %765 = vmatpush1.bf16.msra.mxu0 0
      %766 = vmatprep.subr.bf16.mxu0 0
      %767 = vmatpush1.bf16.msra.mxu0 0
      %768 = vmatprep.subr.bf16.mxu0 0
      %769 = vmatpush1.bf16.msra.mxu0 0
      %770 = vmatprep.subr.bf16.mxu0 0
      %771 = vmatpush1.bf16.msra.mxu0 0
      %772 = vmatprep.subr.bf16.mxu0 0
      %773 = vmatpush1.bf16.msra.mxu0 0
      %774 = vmatprep.subr.bf16.mxu0 0
      %775 = vmatpush1.bf16.msra.mxu0 0
      %776 = vmatprep.subr.bf16.mxu0 0
      %777 = vmatpush1.bf16.msra.mxu0 0
      %778 = vmatprep.subr.bf16.mxu0 0
      %779 = vmatpush1.bf16.msra.mxu0 0
      %780 = vmatprep.mubr.bf16.mxu0 0
      %781 = vmatmul.mubr.bf16.gmra.mrb[0].mxu0 %v619
      %v782 = vpop.f32.mrb[0].mxu0
      %v783 = vadd.f32 %v365, %v782
      %v784 = vpop.f32.mrb[0].mxu0
      %v785 = vadd.f32 %v369, %v784
      %v786 = vpop.f32.mrb[0].mxu0
      %v787 = vadd.f32 %v365, %v786
      %v788 = vpop.f32.mrb[0].mxu0
      %v789 = vadd.f32 %v369, %v788
      %790 = vmatprep.mubr.bf16.mxu0 0
      %791 = vmatmul.mubr.bf16.gmra.mrb[0].mxu0 %v622
      %v792 = vpop.f32.mrb[0].mxu0
      %v793 = vadd.f32 %v365, %v792
      %v794 = vpop.f32.mrb[0].mxu0
      %v795 = vadd.f32 %v369, %v794
      %v796 = vpop.f32.mrb[0].mxu0
      %v797 = vadd.f32 %v365, %v796
      %v798 = vpop.f32.mrb[0].mxu0
      %v799 = vadd.f32 %v369, %v798
      %800 = vmatprep.mubr.bf16.mxu0 0
      %801 = vmatmul.mubr.bf16.gmra.mrb[0].mxu0 %v625
      %v802 = vpop.f32.mrb[0].mxu0
      %v803 = vadd.f32 %v365, %v802
      %v804 = vpop.f32.mrb[0].mxu0
      %v805 = vadd.f32 %v369, %v804
      %v806 = vpop.f32.mrb[0].mxu0
      %v807 = vadd.f32 %v365, %v806
      %v808 = vpop.f32.mrb[0].mxu0
      %v809 = vadd.f32 %v369, %v808
      %810 = vmatprep.mubr.bf16.mxu0 0
      %811 = vmatmul.mubr.bf16.gmra.mrb[0].mxu0 %v628
      %v812 = vpop.f32.mrb[0].mxu0
      %v813 = vadd.f32 %v365, %v812
      %v814 = vpop.f32.mrb[0].mxu0
      %v815 = vadd.f32 %v369, %v814
      %v816 = vpop.f32.mrb[0].mxu0
      %v817 = vadd.f32 %v365, %v816
      %v818 = vpop.f32.mrb[0].mxu0
      %v819 = vadd.f32 %v369, %v818
      %820 = vmatprep.mubr.bf16.mxu0 0
      %821 = vmatmul.mubr.bf16.gmra.mrb[0].mxu0 %v631
      %v822 = vpop.f32.mrb[0].mxu0
      %v823 = vadd.f32 %v365, %v822
      %v824 = vpop.f32.mrb[0].mxu0
      %v825 = vadd.f32 %v369, %v824
      %v826 = vpop.f32.mrb[0].mxu0
      %v827 = vadd.f32 %v365, %v826
      %v828 = vpop.f32.mrb[0].mxu0
      %v829 = vadd.f32 %v369, %v828
      %830 = vmatprep.mubr.bf16.mxu0 0
      %831 = vmatmul.mubr.bf16.gmra.mrb[0].mxu0 %v634
      %v832 = vpop.f32.mrb[0].mxu0
      %v833 = vadd.f32 %v365, %v832
      %v834 = vpop.f32.mrb[0].mxu0
      %v835 = vadd.f32 %v369, %v834
      %v836 = vpop.f32.mrb[0].mxu0
      %v837 = vadd.f32 %v365, %v836
      %v838 = vpop.f32.mrb[0].mxu0
      %v839 = vadd.f32 %v369, %v838
      %840 = vmatprep.mubr.bf16.mxu0 0
      %841 = vmatmul.mubr.bf16.gmra.mrb[0].mxu0 %v637
      %v842 = vpop.f32.mrb[0].mxu0
      %v843 = vadd.f32 %v365, %v842
      %v844 = vpop.f32.mrb[0].mxu0
      %v845 = vadd.f32 %v369, %v844
      %v846 = vpop.f32.mrb[0].mxu0
      %v847 = vadd.f32 %v365, %v846
      %v848 = vpop.f32.mrb[0].mxu0
      %v849 = vadd.f32 %v369, %v848
      %850 = vmatprep.mubr.bf16.mxu0 0
      %851 = vmatmul.mubr.bf16.gmra.mrb[0].mxu0 %v640
      %v852 = vpop.f32.mrb[0].mxu0
      %v853 = vadd.f32 %v365, %v852
      %v854 = vpop.f32.mrb[0].mxu0
      %v855 = vadd.f32 %v369, %v854
      %v856 = vpop.f32.mrb[0].mxu0
      %v857 = vadd.f32 %v365, %v856
      %v858 = vpop.f32.mrb[0].mxu0
      %v859 = vadd.f32 %v369, %v858
      %860 = vmatprep.mubr.bf16.mxu0 0
      %861 = vmatmul.mubr.bf16.gmra.mrb[0].mxu0 %v643
      %v862 = vpop.f32.mrb[0].mxu0
      %v863 = vadd.f32 %v365, %v862
      %v864 = vpop.f32.mrb[0].mxu0
      %v865 = vadd.f32 %v369, %v864
      %v866 = vpop.f32.mrb[0].mxu0
      %v867 = vadd.f32 %v365, %v866
      %v868 = vpop.f32.mrb[0].mxu0
      %v869 = vadd.f32 %v369, %v868
      %870 = vmatprep.mubr.bf16.mxu0 0
      %871 = vmatmul.mubr.bf16.gmra.mrb[0].mxu0 %v646
      %v872 = vpop.f32.mrb[0].mxu0
      %v873 = vadd.f32 %v365, %v872
      %v874 = vpop.f32.mrb[0].mxu0
      %v875 = vadd.f32 %v369, %v874
      %v876 = vpop.f32.mrb[0].mxu0
      %v877 = vadd.f32 %v365, %v876
      %v878 = vpop.f32.mrb[0].mxu0
      %v879 = vadd.f32 %v369, %v878
      %880 = vmatprep.mubr.bf16.mxu0 0
      %881 = vmatmul.mubr.bf16.gmra.mrb[0].mxu0 %v649
      %v882 = vpop.f32.mrb[0].mxu0
      %v883 = vadd.f32 %v365, %v882
      %v884 = vpop.f32.mrb[0].mxu0
      %v885 = vadd.f32 %v369, %v884
      %v886 = vpop.f32.mrb[0].mxu0
      %v887 = vadd.f32 %v365, %v886
      %v888 = vpop.f32.mrb[0].mxu0
      %v889 = vadd.f32 %v369, %v888
      %890 = vmatprep.mubr.bf16.mxu0 0
      %891 = vmatmul.mubr.bf16.gmra.mrb[0].mxu0 %v652
      %v892 = vpop.f32.mrb[0].mxu0
      %v893 = vadd.f32 %v365, %v892
      %v894 = vpop.f32.mrb[0].mxu0
      %v895 = vadd.f32 %v369, %v894
      %v896 = vpop.f32.mrb[0].mxu0
      %v897 = vadd.f32 %v365, %v896
      %v898 = vpop.f32.mrb[0].mxu0
      %v899 = vadd.f32 %v369, %v898
      %900 = vmatprep.mubr.bf16.mxu0 0
      %901 = vmatmul.mubr.bf16.gmra.mrb[0].mxu0 %v655
      %v902 = vpop.f32.mrb[0].mxu0
      %v903 = vadd.f32 %v365, %v902
      %v904 = vpop.f32.mrb[0].mxu0
      %v905 = vadd.f32 %v369, %v904
      %v906 = vpop.f32.mrb[0].mxu0
      %v907 = vadd.f32 %v365, %v906
      %v908 = vpop.f32.mrb[0].mxu0
      %v909 = vadd.f32 %v369, %v908
      %910 = vmatprep.mubr.bf16.mxu0 0
      %911 = vmatmul.mubr.bf16.gmra.mrb[0].mxu0 %v658
      %v912 = vpop.f32.mrb[0].mxu0
      %v913 = vadd.f32 %v365, %v912
      %v914 = vpop.f32.mrb[0].mxu0
      %v915 = vadd.f32 %v369, %v914
      %v916 = vpop.f32.mrb[0].mxu0
      %v917 = vadd.f32 %v365, %v916
      %v918 = vpop.f32.mrb[0].mxu0
      %v919 = vadd.f32 %v369, %v918
      %920 = vmatprep.mubr.bf16.mxu0 0
      %921 = vmatmul.mubr.bf16.gmra.mrb[0].mxu0 %v661
      %v922 = vpop.f32.mrb[0].mxu0
      %v923 = vadd.f32 %v365, %v922
      %v924 = vpop.f32.mrb[0].mxu0
      %v925 = vadd.f32 %v369, %v924
      %v926 = vpop.f32.mrb[0].mxu0
      %v927 = vadd.f32 %v365, %v926
      %v928 = vpop.f32.mrb[0].mxu0
      %v929 = vadd.f32 %v369, %v928
      %930 = vmatprep.mubr.bf16.mxu0 0
      %931 = vmatmul.mubr.bf16.gmra.mrb[0].mxu0 %v664
      %v932 = vpop.f32.mrb[0].mxu0
      %v933 = vadd.f32 %v365, %v932
      %v934 = vpop.f32.mrb[0].mxu0
      %v935 = vadd.f32 %v369, %v934
      %v936 = vpop.f32.mrb[0].mxu0
      %v937 = vadd.f32 %v365, %v936
      %v938 = vpop.f32.mrb[0].mxu0
      %v939 = vadd.f32 %v369, %v938
      %940 = vmatprep.mubr.bf16.mxu0 0
      %941 = vmatmul.mubr.bf16.gmra.mrb[0].mxu0 %v667
      %v942 = vpop.f32.mrb[0].mxu0
      %v943 = vadd.f32 %v365, %v942
      %v944 = vpop.f32.mrb[0].mxu0
      %v945 = vadd.f32 %v369, %v944
      %v946 = vpop.f32.mrb[0].mxu0
      %v947 = vadd.f32 %v365, %v946
      %v948 = vpop.f32.mrb[0].mxu0
      %v949 = vadd.f32 %v369, %v948
      %950 = vmatprep.mubr.bf16.mxu0 0
      %951 = vmatmul.mubr.bf16.gmra.mrb[0].mxu0 %v670
      %v952 = vpop.f32.mrb[0].mxu0
      %v953 = vadd.f32 %v365, %v952
      %v954 = vpop.f32.mrb[0].mxu0
      %v955 = vadd.f32 %v369, %v954
      %v956 = vpop.f32.mrb[0].mxu0
      %v957 = vadd.f32 %v365, %v956
      %v958 = vpop.f32.mrb[0].mxu0
      %v959 = vadd.f32 %v369, %v958
      %960 = vmatprep.mubr.bf16.mxu0 0
      %961 = vmatmul.mubr.bf16.gmra.mrb[0].mxu0 %v673
      %v962 = vpop.f32.mrb[0].mxu0
      %v963 = vadd.f32 %v365, %v962
      %v964 = vpop.f32.mrb[0].mxu0
      %v965 = vadd.f32 %v369, %v964
      %v966 = vpop.f32.mrb[0].mxu0
      %v967 = vadd.f32 %v365, %v966
      %v968 = vpop.f32.mrb[0].mxu0
      %v969 = vadd.f32 %v369, %v968
      %970 = vmatprep.mubr.bf16.mxu0 0
      %971 = vmatmul.mubr.bf16.gmra.mrb[0].mxu0 %v676
      %v972 = vpop.f32.mrb[0].mxu0
      %v973 = vadd.f32 %v365, %v972
      %v974 = vpop.f32.mrb[0].mxu0
      %v975 = vadd.f32 %v369, %v974
      %v976 = vpop.f32.mrb[0].mxu0
      %v977 = vadd.f32 %v365, %v976
      %v978 = vpop.f32.mrb[0].mxu0
      %v979 = vadd.f32 %v369, %v978
      %980 = vmatprep.mubr.bf16.mxu0 0
      %981 = vmatmul.mubr.bf16.gmra.mrb[0].mxu0 %v679
      %v982 = vpop.f32.mrb[0].mxu0
      %v983 = vadd.f32 %v365, %v982
      %v984 = vpop.f32.mrb[0].mxu0
      %v985 = vadd.f32 %v369, %v984
      %v986 = vpop.f32.mrb[0].mxu0
      %v987 = vadd.f32 %v365, %v986
      %v988 = vpop.f32.mrb[0].mxu0
      %v989 = vadd.f32 %v369, %v988
      %990 = vmatprep.mubr.bf16.mxu0 0
      %991 = vmatmul.mubr.bf16.gmra.mrb[0].mxu0 %v682
      %v992 = vpop.f32.mrb[0].mxu0
      %v993 = vadd.f32 %v365, %v992
      %v994 = vpop.f32.mrb[0].mxu0
      %v995 = vadd.f32 %v369, %v994
      %v996 = vpop.f32.mrb[0].mxu0
      %v997 = vadd.f32 %v365, %v996
      %v998 = vpop.f32.mrb[0].mxu0
      %v999 = vadd.f32 %v369, %v998
      %1000 = vmatprep.mubr.bf16.mxu0 0
      %1001 = vmatmul.mubr.bf16.gmra.mrb[0].mxu0 %v685
      %v1002 = vpop.f32.mrb[0].mxu0
      %v1003 = vadd.f32 %v365, %v1002
      %v1004 = vpop.f32.mrb[0].mxu0
      %v1005 = vadd.f32 %v369, %v1004
      %v1006 = vpop.f32.mrb[0].mxu0
      %v1007 = vadd.f32 %v365, %v1006
      %v1008 = vpop.f32.mrb[0].mxu0
      %v1009 = vadd.f32 %v369, %v1008
      %1010 = vmatprep.mubr.bf16.mxu0 0
      %1011 = vmatmul.mubr.bf16.gmra.mrb[0].mxu0 %v688
      %v1012 = vpop.f32.mrb[0].mxu0
      %v1013 = vadd.f32 %v365, %v1012
      %v1014 = vpop.f32.mrb[0].mxu0
      %v1015 = vadd.f32 %v369, %v1014
      %v1016 = vpop.f32.mrb[0].mxu0
      %v1017 = vadd.f32 %v365, %v1016
      %v1018 = vpop.f32.mrb[0].mxu0
      %v1019 = vadd.f32 %v369, %v1018
      %1020 = vmatprep.mubr.bf16.mxu0 0
      %1021 = vmatmul.mubr.bf16.gmra.mrb[0].mxu0 %v691
      %v1022 = vpop.f32.mrb[0].mxu0
      %v1023 = vadd.f32 %v365, %v1022
      %v1024 = vpop.f32.mrb[0].mxu0
      %v1025 = vadd.f32 %v369, %v1024
      %v1026 = vpop.f32.mrb[0].mxu0
      %v1027 = vadd.f32 %v365, %v1026
      %v1028 = vpop.f32.mrb[0].mxu0
      %v1029 = vadd.f32 %v369, %v1028
      %1030 = vmatprep.mubr.bf16.mxu0 0
      %1031 = vmatmul.mubr.bf16.gmra.mrb[0].mxu0 %v694
      %v1032 = vpop.f32.mrb[0].mxu0
      %v1033 = vadd.f32 %v365, %v1032
      %v1034 = vpop.f32.mrb[0].mxu0
      %v1035 = vadd.f32 %v369, %v1034
      %v1036 = vpop.f32.mrb[0].mxu0
      %v1037 = vadd.f32 %v365, %v1036
      %v1038 = vpop.f32.mrb[0].mxu0
      %v1039 = vadd.f32 %v369, %v1038
      %1040 = vmatprep.mubr.bf16.mxu0 0
      %1041 = vmatmul.mubr.bf16.gmra.mrb[0].mxu0 %v697
      %v1042 = vpop.f32.mrb[0].mxu0
      %v1043 = vadd.f32 %v365, %v1042
      %v1044 = vpop.f32.mrb[0].mxu0
      %v1045 = vadd.f32 %v369, %v1044
      %v1046 = vpop.f32.mrb[0].mxu0
      %v1047 = vadd.f32 %v365, %v1046
      %v1048 = vpop.f32.mrb[0].mxu0
      %v1049 = vadd.f32 %v369, %v1048
      %1050 = vmatprep.mubr.bf16.mxu0 0
      %1051 = vmatmul.mubr.bf16.gmra.mrb[0].mxu0 %v700
      %v1052 = vpop.f32.mrb[0].mxu0
      %v1053 = vadd.f32 %v365, %v1052
      %v1054 = vpop.f32.mrb[0].mxu0
      %v1055 = vadd.f32 %v369, %v1054
      %v1056 = vpop.f32.mrb[0].mxu0
      %v1057 = vadd.f32 %v365, %v1056
      %v1058 = vpop.f32.mrb[0].mxu0
      %v1059 = vadd.f32 %v369, %v1058
      %1060 = vmatprep.mubr.bf16.mxu0 0
      %1061 = vmatmul.mubr.bf16.gmra.mrb[0].mxu0 %v703
      %v1062 = vpop.f32.mrb[0].mxu0
      %v1063 = vadd.f32 %v365, %v1062
      %v1064 = vpop.f32.mrb[0].mxu0
      %v1065 = vadd.f32 %v369, %v1064
      %v1066 = vpop.f32.mrb[0].mxu0
      %v1067 = vadd.f32 %v365, %v1066
      %v1068 = vpop.f32.mrb[0].mxu0
      %v1069 = vadd.f32 %v369, %v1068
      %1070 = vmatprep.mubr.bf16.mxu0 0
      %1071 = vmatmul.mubr.bf16.gmra.mrb[0].mxu0 %v706
      %v1072 = vpop.f32.mrb[0].mxu0
      %v1073 = vadd.f32 %v365, %v1072
      %v1074 = vpop.f32.mrb[0].mxu0
      %v1075 = vadd.f32 %v369, %v1074
      %v1076 = vpop.f32.mrb[0].mxu0
      %v1077 = vadd.f32 %v365, %v1076
      %v1078 = vpop.f32.mrb[0].mxu0
      %v1079 = vadd.f32 %v369, %v1078
      %1080 = vmatprep.mubr.bf16.mxu0 0
      %1081 = vmatmul.mubr.bf16.gmra.mrb[0].mxu0 %v709
      %v1082 = vpop.f32.mrb[0].mxu0
      %v1083 = vadd.f32 %v365, %v1082
      %v1084 = vpop.f32.mrb[0].mxu0
      %v1085 = vadd.f32 %v369, %v1084
      %v1086 = vpop.f32.mrb[0].mxu0
      %v1087 = vadd.f32 %v365, %v1086
      %v1088 = vpop.f32.mrb[0].mxu0
      %v1089 = vadd.f32 %v369, %v1088
      %1090 = vmatprep.mubr.bf16.mxu0 0
      %1091 = vmatmul.mubr.bf16.gmra.mrb[0].mxu0 %v712
      %v1092 = vpop.f32.mrb[0].mxu0
      %v1093 = vadd.f32 %v365, %v1092
      %v1094 = vpop.f32.mrb[0].mxu0
      %v1095 = vadd.f32 %v369, %v1094
      %v1096 = vpop.f32.mrb[0].mxu0
      %v1097 = vadd.f32 %v365, %v1096
      %v1098 = vpop.f32.mrb[0].mxu0
      %v1099 = vadd.f32 %v369, %v1098
      %1100 = vdwg.mxu0
      %1101 = vmatprep.subr.bf16.mxu0 %v728
      %1102 = vmatpush1.bf16.msra.mxu0 %v725
      %1103 = vmatprep.subr.bf16.mxu0 0
      %1104 = vmatpush1.bf16.msra.mxu0 0
      %1105 = vmatprep.subr.bf16.mxu0 0
      %1106 = vmatpush1.bf16.msra.mxu0 0
      %1107 = vmatprep.subr.bf16.mxu0 0
      %1108 = vmatpush1.bf16.msra.mxu0 0
      %1109 = vmatprep.subr.bf16.mxu0 0
      %1110 = vmatpush1.bf16.msra.mxu0 0
      %1111 = vmatprep.subr.bf16.mxu0 0
      %1112 = vmatpush1.bf16.msra.mxu0 0
      %1113 = vmatprep.subr.bf16.mxu0 0
      %1114 = vmatpush1.bf16.msra.mxu0 0
      %1115 = vmatprep.subr.bf16.mxu0 0
      %1116 = vmatpush1.bf16.msra.mxu0 0
      %1117 = vmatprep.subr.bf16.mxu0 0
      %1118 = vmatpush1.bf16.msra.mxu0 0
      %1119 = vmatprep.subr.bf16.mxu0 0
      %1120 = vmatpush1.bf16.msra.mxu0 0
      %1121 = vmatprep.subr.bf16.mxu0 0
      %1122 = vmatpush1.bf16.msra.mxu0 0
      %1123 = vmatprep.subr.bf16.mxu0 0
      %1124 = vmatpush1.bf16.msra.mxu0 0
      %1125 = vmatprep.subr.bf16.mxu0 0
      %1126 = vmatpush1.bf16.msra.mxu0 0
      %1127 = vmatprep.subr.bf16.mxu0 0
      %1128 = vmatpush1.bf16.msra.mxu0 0
      %1129 = vmatprep.subr.bf16.mxu0 0
      %1130 = vmatpush1.bf16.msra.mxu0 0
      %1131 = vmatprep.subr.bf16.mxu0 0
      %1132 = vmatpush1.bf16.msra.mxu0 0
      %1133 = vmatprep.mubr.bf16.mxu0 0
      %1134 = vmatmul.mubr.bf16.gmra.mrb[0].mxu0 %v619
      %v1135 = vpop.f32.mrb[0].mxu0
      %v1136 = vadd.f32 %v373, %v1135
      %v1137 = vpop.f32.mrb[0].mxu0
      %v1138 = vadd.f32 %v377, %v1137
      %v1139 = vpop.f32.mrb[0].mxu0
      %v1140 = vadd.f32 %v373, %v1139
      %v1141 = vpop.f32.mrb[0].mxu0
      %v1142 = vadd.f32 %v377, %v1141
      %1143 = vmatprep.mubr.bf16.mxu0 0
      %1144 = vmatmul.mubr.bf16.gmra.mrb[0].mxu0 %v622
      %v1145 = vpop.f32.mrb[0].mxu0
      %v1146 = vadd.f32 %v373, %v1145
      %v1147 = vpop.f32.mrb[0].mxu0
      %v1148 = vadd.f32 %v377, %v1147
      %v1149 = vpop.f32.mrb[0].mxu0
      %v1150 = vadd.f32 %v373, %v1149
      %v1151 = vpop.f32.mrb[0].mxu0
      %v1152 = vadd.f32 %v377, %v1151
      %1153 = vmatprep.mubr.bf16.mxu0 0
      %1154 = vmatmul.mubr.bf16.gmra.mrb[0].mxu0 %v625
      %v1155 = vpop.f32.mrb[0].mxu0
      %v1156 = vadd.f32 %v373, %v1155
      %v1157 = vpop.f32.mrb[0].mxu0
      %v1158 = vadd.f32 %v377, %v1157
      %v1159 = vpop.f32.mrb[0].mxu0
      %v1160 = vadd.f32 %v373, %v1159
      %v1161 = vpop.f32.mrb[0].mxu0
      %v1162 = vadd.f32 %v377, %v1161
      %1163 = vmatprep.mubr.bf16.mxu0 0
      %1164 = vmatmul.mubr.bf16.gmra.mrb[0].mxu0 %v628
      %v1165 = vpop.f32.mrb[0].mxu0
      %v1166 = vadd.f32 %v373, %v1165
      %v1167 = vpop.f32.mrb[0].mxu0
      %v1168 = vadd.f32 %v377, %v1167
      %v1169 = vpop.f32.mrb[0].mxu0
      %v1170 = vadd.f32 %v373, %v1169
      %v1171 = vpop.f32.mrb[0].mxu0
      %v1172 = vadd.f32 %v377, %v1171
      %1173 = vmatprep.mubr.bf16.mxu0 0
      %1174 = vmatmul.mubr.bf16.gmra.mrb[0].mxu0 %v631
      %v1175 = vpop.f32.mrb[0].mxu0
      %v1176 = vadd.f32 %v373, %v1175
      %v1177 = vpop.f32.mrb[0].mxu0
      %v1178 = vadd.f32 %v377, %v1177
      %v1179 = vpop.f32.mrb[0].mxu0
      %v1180 = vadd.f32 %v373, %v1179
      %v1181 = vpop.f32.mrb[0].mxu0
      %v1182 = vadd.f32 %v377, %v1181
      %1183 = vmatprep.mubr.bf16.mxu0 0
      %1184 = vmatmul.mubr.bf16.gmra.mrb[0].mxu0 %v634
      %v1185 = vpop.f32.mrb[0].mxu0
      %v1186 = vadd.f32 %v373, %v1185
      %v1187 = vpop.f32.mrb[0].mxu0
      %v1188 = vadd.f32 %v377, %v1187
      %v1189 = vpop.f32.mrb[0].mxu0
      %v1190 = vadd.f32 %v373, %v1189
      %v1191 = vpop.f32.mrb[0].mxu0
      %v1192 = vadd.f32 %v377, %v1191
      %1193 = vmatprep.mubr.bf16.mxu0 0
      %1194 = vmatmul.mubr.bf16.gmra.mrb[0].mxu0 %v637
      %v1195 = vpop.f32.mrb[0].mxu0
      %v1196 = vadd.f32 %v373, %v1195
      %v1197 = vpop.f32.mrb[0].mxu0
      %v1198 = vadd.f32 %v377, %v1197
      %v1199 = vpop.f32.mrb[0].mxu0
      %v1200 = vadd.f32 %v373, %v1199
      %v1201 = vpop.f32.mrb[0].mxu0
      %v1202 = vadd.f32 %v377, %v1201
      %1203 = vmatprep.mubr.bf16.mxu0 0
      %1204 = vmatmul.mubr.bf16.gmra.mrb[0].mxu0 %v640
      %v1205 = vpop.f32.mrb[0].mxu0
      %v1206 = vadd.f32 %v373, %v1205
      %v1207 = vpop.f32.mrb[0].mxu0
      %v1208 = vadd.f32 %v377, %v1207
      %v1209 = vpop.f32.mrb[0].mxu0
      %v1210 = vadd.f32 %v373, %v1209
      %v1211 = vpop.f32.mrb[0].mxu0
      %v1212 = vadd.f32 %v377, %v1211
      %1213 = vmatprep.mubr.bf16.mxu0 0
      %1214 = vmatmul.mubr.bf16.gmra.mrb[0].mxu0 %v643
      %v1215 = vpop.f32.mrb[0].mxu0
      %v1216 = vadd.f32 %v373, %v1215
      %v1217 = vpop.f32.mrb[0].mxu0
      %v1218 = vadd.f32 %v377, %v1217
      %v1219 = vpop.f32.mrb[0].mxu0
      %v1220 = vadd.f32 %v373, %v1219
      %v1221 = vpop.f32.mrb[0].mxu0
      %v1222 = vadd.f32 %v377, %v1221
      %1223 = vmatprep.mubr.bf16.mxu0 0
      %1224 = vmatmul.mubr.bf16.gmra.mrb[0].mxu0 %v646
      %v1225 = vpop.f32.mrb[0].mxu0
      %v1226 = vadd.f32 %v373, %v1225
      %v1227 = vpop.f32.mrb[0].mxu0
      %v1228 = vadd.f32 %v377, %v1227
      %v1229 = vpop.f32.mrb[0].mxu0
      %v1230 = vadd.f32 %v373, %v1229
      %v1231 = vpop.f32.mrb[0].mxu0
      %v1232 = vadd.f32 %v377, %v1231
      %1233 = vmatprep.mubr.bf16.mxu0 0
      %1234 = vmatmul.mubr.bf16.gmra.mrb[0].mxu0 %v649
      %v1235 = vpop.f32.mrb[0].mxu0
      %v1236 = vadd.f32 %v373, %v1235
      %v1237 = vpop.f32.mrb[0].mxu0
      %v1238 = vadd.f32 %v377, %v1237
      %v1239 = vpop.f32.mrb[0].mxu0
      %v1240 = vadd.f32 %v373, %v1239
      %v1241 = vpop.f32.mrb[0].mxu0
      %v1242 = vadd.f32 %v377, %v1241
      %1243 = vmatprep.mubr.bf16.mxu0 0
      %1244 = vmatmul.mubr.bf16.gmra.mrb[0].mxu0 %v652
      %v1245 = vpop.f32.mrb[0].mxu0
      %v1246 = vadd.f32 %v373, %v1245
      %v1247 = vpop.f32.mrb[0].mxu0
      %v1248 = vadd.f32 %v377, %v1247
      %v1249 = vpop.f32.mrb[0].mxu0
      %v1250 = vadd.f32 %v373, %v1249
      %v1251 = vpop.f32.mrb[0].mxu0
      %v1252 = vadd.f32 %v377, %v1251
      %1253 = vmatprep.mubr.bf16.mxu0 0
      %1254 = vmatmul.mubr.bf16.gmra.mrb[0].mxu0 %v655
      %v1255 = vpop.f32.mrb[0].mxu0
      %v1256 = vadd.f32 %v373, %v1255
      %v1257 = vpop.f32.mrb[0].mxu0
      %v1258 = vadd.f32 %v377, %v1257
      %v1259 = vpop.f32.mrb[0].mxu0
      %v1260 = vadd.f32 %v373, %v1259
      %v1261 = vpop.f32.mrb[0].mxu0
      %v1262 = vadd.f32 %v377, %v1261
      %1263 = vmatprep.mubr.bf16.mxu0 0
      %1264 = vmatmul.mubr.bf16.gmra.mrb[0].mxu0 %v658
      %v1265 = vpop.f32.mrb[0].mxu0
      %v1266 = vadd.f32 %v373, %v1265
      %v1267 = vpop.f32.mrb[0].mxu0
      %v1268 = vadd.f32 %v377, %v1267
      %v1269 = vpop.f32.mrb[0].mxu0
      %v1270 = vadd.f32 %v373, %v1269
      %v1271 = vpop.f32.mrb[0].mxu0
      %v1272 = vadd.f32 %v377, %v1271
      %1273 = vmatprep.mubr.bf16.mxu0 0
      %1274 = vmatmul.mubr.bf16.gmra.mrb[0].mxu0 %v661
      %v1275 = vpop.f32.mrb[0].mxu0
      %v1276 = vadd.f32 %v373, %v1275
      %v1277 = vpop.f32.mrb[0].mxu0
      %v1278 = vadd.f32 %v377, %v1277
      %v1279 = vpop.f32.mrb[0].mxu0
      %v1280 = vadd.f32 %v373, %v1279
      %v1281 = vpop.f32.mrb[0].mxu0
      %v1282 = vadd.f32 %v377, %v1281
      %1283 = vmatprep.mubr.bf16.mxu0 0
      %1284 = vmatmul.mubr.bf16.gmra.mrb[0].mxu0 %v664
      %v1285 = vpop.f32.mrb[0].mxu0
      %v1286 = vadd.f32 %v373, %v1285
      %v1287 = vpop.f32.mrb[0].mxu0
      %v1288 = vadd.f32 %v377, %v1287
      %v1289 = vpop.f32.mrb[0].mxu0
      %v1290 = vadd.f32 %v373, %v1289
      %v1291 = vpop.f32.mrb[0].mxu0
      %v1292 = vadd.f32 %v377, %v1291
      %1293 = vmatprep.mubr.bf16.mxu0 0
      %1294 = vmatmul.mubr.bf16.gmra.mrb[0].mxu0 %v667
      %v1295 = vpop.f32.mrb[0].mxu0
      %v1296 = vadd.f32 %v373, %v1295
      %v1297 = vpop.f32.mrb[0].mxu0
      %v1298 = vadd.f32 %v377, %v1297
      %v1299 = vpop.f32.mrb[0].mxu0
      %v1300 = vadd.f32 %v373, %v1299
      %v1301 = vpop.f32.mrb[0].mxu0
      %v1302 = vadd.f32 %v377, %v1301
      %1303 = vmatprep.mubr.bf16.mxu0 0
      %1304 = vmatmul.mubr.bf16.gmra.mrb[0].mxu0 %v670
      %v1305 = vpop.f32.mrb[0].mxu0
      %v1306 = vadd.f32 %v373, %v1305
      %v1307 = vpop.f32.mrb[0].mxu0
      %v1308 = vadd.f32 %v377, %v1307
      %v1309 = vpop.f32.mrb[0].mxu0
      %v1310 = vadd.f32 %v373, %v1309
      %v1311 = vpop.f32.mrb[0].mxu0
      %v1312 = vadd.f32 %v377, %v1311
      %1313 = vmatprep.mubr.bf16.mxu0 0
      %1314 = vmatmul.mubr.bf16.gmra.mrb[0].mxu0 %v673
      %v1315 = vpop.f32.mrb[0].mxu0
      %v1316 = vadd.f32 %v373, %v1315
      %v1317 = vpop.f32.mrb[0].mxu0
      %v1318 = vadd.f32 %v377, %v1317
      %v1319 = vpop.f32.mrb[0].mxu0
      %v1320 = vadd.f32 %v373, %v1319
      %v1321 = vpop.f32.mrb[0].mxu0
      %v1322 = vadd.f32 %v377, %v1321
      %1323 = vmatprep.mubr.bf16.mxu0 0
      %1324 = vmatmul.mubr.bf16.gmra.mrb[0].mxu0 %v676
      %v1325 = vpop.f32.mrb[0].mxu0
      %v1326 = vadd.f32 %v373, %v1325
      %v1327 = vpop.f32.mrb[0].mxu0
      %v1328 = vadd.f32 %v377, %v1327
      %v1329 = vpop.f32.mrb[0].mxu0
      %v1330 = vadd.f32 %v373, %v1329
      %v1331 = vpop.f32.mrb[0].mxu0
      %v1332 = vadd.f32 %v377, %v1331
      %1333 = vmatprep.mubr.bf16.mxu0 0
      %1334 = vmatmul.mubr.bf16.gmra.mrb[0].mxu0 %v679
      %v1335 = vpop.f32.mrb[0].mxu0
      %v1336 = vadd.f32 %v373, %v1335
      %v1337 = vpop.f32.mrb[0].mxu0
      %v1338 = vadd.f32 %v377, %v1337
      %v1339 = vpop.f32.mrb[0].mxu0
      %v1340 = vadd.f32 %v373, %v1339
      %v1341 = vpop.f32.mrb[0].mxu0
      %v1342 = vadd.f32 %v377, %v1341
      %1343 = vmatprep.mubr.bf16.mxu0 0
      %1344 = vmatmul.mubr.bf16.gmra.mrb[0].mxu0 %v682
      %v1345 = vpop.f32.mrb[0].mxu0
      %v1346 = vadd.f32 %v373, %v1345
      %v1347 = vpop.f32.mrb[0].mxu0
      %v1348 = vadd.f32 %v377, %v1347
      %v1349 = vpop.f32.mrb[0].mxu0
      %v1350 = vadd.f32 %v373, %v1349
      %v1351 = vpop.f32.mrb[0].mxu0
      %v1352 = vadd.f32 %v377, %v1351
      %1353 = vmatprep.mubr.bf16.mxu0 0
      %1354 = vmatmul.mubr.bf16.gmra.mrb[0].mxu0 %v685
      %v1355 = vpop.f32.mrb[0].mxu0
      %v1356 = vadd.f32 %v373, %v1355
      %v1357 = vpop.f32.mrb[0].mxu0
      %v1358 = vadd.f32 %v377, %v1357
      %v1359 = vpop.f32.mrb[0].mxu0
      %v1360 = vadd.f32 %v373, %v1359
      %v1361 = vpop.f32.mrb[0].mxu0
      %v1362 = vadd.f32 %v377, %v1361
      %1363 = vmatprep.mubr.bf16.mxu0 0
      %1364 = vmatmul.mubr.bf16.gmra.mrb[0].mxu0 %v688
      %v1365 = vpop.f32.mrb[0].mxu0
      %v1366 = vadd.f32 %v373, %v1365
      %v1367 = vpop.f32.mrb[0].mxu0
      %v1368 = vadd.f32 %v377, %v1367
      %v1369 = vpop.f32.mrb[0].mxu0
      %v1370 = vadd.f32 %v373, %v1369
      %v1371 = vpop.f32.mrb[0].mxu0
      %v1372 = vadd.f32 %v377, %v1371
      %1373 = vmatprep.mubr.bf16.mxu0 0
      %1374 = vmatmul.mubr.bf16.gmra.mrb[0].mxu0 %v691
      %v1375 = vpop.f32.mrb[0].mxu0
      %v1376 = vadd.f32 %v373, %v1375
      %v1377 = vpop.f32.mrb[0].mxu0
      %v1378 = vadd.f32 %v377, %v1377
      %v1379 = vpop.f32.mrb[0].mxu0
      %v1380 = vadd.f32 %v373, %v1379
      %v1381 = vpop.f32.mrb[0].mxu0
      %v1382 = vadd.f32 %v377, %v1381
      %1383 = vmatprep.mubr.bf16.mxu0 0
      %1384 = vmatmul.mubr.bf16.gmra.mrb[0].mxu0 %v694
      %v1385 = vpop.f32.mrb[0].mxu0
      %v1386 = vadd.f32 %v373, %v1385
      %v1387 = vpop.f32.mrb[0].mxu0
      %v1388 = vadd.f32 %v377, %v1387
      %v1389 = vpop.f32.mrb[0].mxu0
      %v1390 = vadd.f32 %v373, %v1389
      %v1391 = vpop.f32.mrb[0].mxu0
      %v1392 = vadd.f32 %v377, %v1391
      %1393 = vmatprep.mubr.bf16.mxu0 0
      %1394 = vmatmul.mubr.bf16.gmra.mrb[0].mxu0 %v697
      %v1395 = vpop.f32.mrb[0].mxu0
      %v1396 = vadd.f32 %v373, %v1395
      %v1397 = vpop.f32.mrb[0].mxu0
      %v1398 = vadd.f32 %v377, %v1397
      %v1399 = vpop.f32.mrb[0].mxu0
      %v1400 = vadd.f32 %v373, %v1399
      %v1401 = vpop.f32.mrb[0].mxu0
      %v1402 = vadd.f32 %v377, %v1401
      %1403 = vmatprep.mubr.bf16.mxu0 0
      %1404 = vmatmul.mubr.bf16.gmra.mrb[0].mxu0 %v700
      %v1405 = vpop.f32.mrb[0].mxu0
      %v1406 = vadd.f32 %v373, %v1405
      %v1407 = vpop.f32.mrb[0].mxu0
      %v1408 = vadd.f32 %v377, %v1407
      %v1409 = vpop.f32.mrb[0].mxu0
      %v1410 = vadd.f32 %v373, %v1409
      %v1411 = vpop.f32.mrb[0].mxu0
      %v1412 = vadd.f32 %v377, %v1411
      %1413 = vmatprep.mubr.bf16.mxu0 0
      %1414 = vmatmul.mubr.bf16.gmra.mrb[0].mxu0 %v703
      %v1415 = vpop.f32.mrb[0].mxu0
      %v1416 = vadd.f32 %v373, %v1415
      %v1417 = vpop.f32.mrb[0].mxu0
      %v1418 = vadd.f32 %v377, %v1417
      %v1419 = vpop.f32.mrb[0].mxu0
      %v1420 = vadd.f32 %v373, %v1419
      %v1421 = vpop.f32.mrb[0].mxu0
      %v1422 = vadd.f32 %v377, %v1421
      %1423 = vmatprep.mubr.bf16.mxu0 0
      %1424 = vmatmul.mubr.bf16.gmra.mrb[0].mxu0 %v706
      %v1425 = vpop.f32.mrb[0].mxu0
      %v1426 = vadd.f32 %v373, %v1425
      %v1427 = vpop.f32.mrb[0].mxu0
      %v1428 = vadd.f32 %v377, %v1427
      %v1429 = vpop.f32.mrb[0].mxu0
      %v1430 = vadd.f32 %v373, %v1429
      %v1431 = vpop.f32.mrb[0].mxu0
      %v1432 = vadd.f32 %v377, %v1431
      %1433 = vmatprep.mubr.bf16.mxu0 0
      %1434 = vmatmul.mubr.bf16.gmra.mrb[0].mxu0 %v709
      %v1435 = vpop.f32.mrb[0].mxu0
      %v1436 = vadd.f32 %v373, %v1435
      %v1437 = vpop.f32.mrb[0].mxu0
      %v1438 = vadd.f32 %v377, %v1437
      %v1439 = vpop.f32.mrb[0].mxu0
      %v1440 = vadd.f32 %v373, %v1439
      %v1441 = vpop.f32.mrb[0].mxu0
      %v1442 = vadd.f32 %v377, %v1441
      %1443 = vmatprep.mubr.bf16.mxu0 0
      %1444 = vmatmul.mubr.bf16.gmra.mrb[0].mxu0 %v712
      %v1445 = vpop.f32.mrb[0].mxu0
      %v1446 = vadd.f32 %v373, %v1445
      %v1447 = vpop.f32.mrb[0].mxu0
      %v1448 = vadd.f32 %v377, %v1447
      %v1449 = vpop.f32.mrb[0].mxu0
      %v1450 = vadd.f32 %v373, %v1449
      %v1451 = vpop.f32.mrb[0].mxu0
      %v1452 = vadd.f32 %v377, %v1451
      %1453 = vdwg.mxu0
      %1454 = vmatprep.subr.bf16.mxu0 %v734
      %1455 = vmatpush1.bf16.msra.mxu0 %v731
      %1456 = vmatprep.subr.bf16.mxu0 0
      %1457 = vmatpush1.bf16.msra.mxu0 0
      %1458 = vmatprep.subr.bf16.mxu0 0
      %1459 = vmatpush1.bf16.msra.mxu0 0
      %1460 = vmatprep.subr.bf16.mxu0 0
      %1461 = vmatpush1.bf16.msra.mxu0 0
      %1462 = vmatprep.subr.bf16.mxu0 0
      %1463 = vmatpush1.bf16.msra.mxu0 0
      %1464 = vmatprep.subr.bf16.mxu0 0
      %1465 = vmatpush1.bf16.msra.mxu0 0
      %1466 = vmatprep.subr.bf16.mxu0 0
      %1467 = vmatpush1.bf16.msra.mxu0 0
      %1468 = vmatprep.subr.bf16.mxu0 0
      %1469 = vmatpush1.bf16.msra.mxu0 0
      %1470 = vmatprep.subr.bf16.mxu0 0
      %1471 = vmatpush1.bf16.msra.mxu0 0
      %1472 = vmatprep.subr.bf16.mxu0 0
      %1473 = vmatpush1.bf16.msra.mxu0 0
      %1474 = vmatprep.subr.bf16.mxu0 0
      %1475 = vmatpush1.bf16.msra.mxu0 0
      %1476 = vmatprep.subr.bf16.mxu0 0
      %1477 = vmatpush1.bf16.msra.mxu0 0
      %1478 = vmatprep.subr.bf16.mxu0 0
      %1479 = vmatpush1.bf16.msra.mxu0 0
      %1480 = vmatprep.subr.bf16.mxu0 0
      %1481 = vmatpush1.bf16.msra.mxu0 0
      %1482 = vmatprep.subr.bf16.mxu0 0
      %1483 = vmatpush1.bf16.msra.mxu0 0
      %1484 = vmatprep.subr.bf16.mxu0 0
      %1485 = vmatpush1.bf16.msra.mxu0 0
      %1486 = vmatprep.mubr.bf16.mxu0 0
      %1487 = vmatmul.mubr.bf16.gmra.mrb[0].mxu0 %v619
      %v1488 = vpop.f32.mrb[0].mxu0
      %v1489 = vadd.f32 %v381, %v1488
      %v1490 = vpop.f32.mrb[0].mxu0
      %v1491 = vadd.f32 %v385, %v1490
      %v1492 = vpop.f32.mrb[0].mxu0
      %v1493 = vadd.f32 %v381, %v1492
      %v1494 = vpop.f32.mrb[0].mxu0
      %v1495 = vadd.f32 %v385, %v1494
      %1496 = vmatprep.mubr.bf16.mxu0 0
      %1497 = vmatmul.mubr.bf16.gmra.mrb[0].mxu0 %v622
      %v1498 = vpop.f32.mrb[0].mxu0
      %v1499 = vadd.f32 %v381, %v1498
      %v1500 = vpop.f32.mrb[0].mxu0
      %v1501 = vadd.f32 %v385, %v1500
      %v1502 = vpop.f32.mrb[0].mxu0
      %v1503 = vadd.f32 %v381, %v1502
      %v1504 = vpop.f32.mrb[0].mxu0
      %v1505 = vadd.f32 %v385, %v1504
      %1506 = vmatprep.mubr.bf16.mxu0 0
      %1507 = vmatmul.mubr.bf16.gmra.mrb[0].mxu0 %v625
      %v1508 = vpop.f32.mrb[0].mxu0
      %v1509 = vadd.f32 %v381, %v1508
      %v1510 = vpop.f32.mrb[0].mxu0
      %v1511 = vadd.f32 %v385, %v1510
      %v1512 = vpop.f32.mrb[0].mxu0
      %v1513 = vadd.f32 %v381, %v1512
      %v1514 = vpop.f32.mrb[0].mxu0
      %v1515 = vadd.f32 %v385, %v1514
      %1516 = vmatprep.mubr.bf16.mxu0 0
      %1517 = vmatmul.mubr.bf16.gmra.mrb[0].mxu0 %v628
      %v1518 = vpop.f32.mrb[0].mxu0
      %v1519 = vadd.f32 %v381, %v1518
      %v1520 = vpop.f32.mrb[0].mxu0
      %v1521 = vadd.f32 %v385, %v1520
      %v1522 = vpop.f32.mrb[0].mxu0
      %v1523 = vadd.f32 %v381, %v1522
      %v1524 = vpop.f32.mrb[0].mxu0
      %v1525 = vadd.f32 %v385, %v1524
      %1526 = vmatprep.mubr.bf16.mxu0 0
      %1527 = vmatmul.mubr.bf16.gmra.mrb[0].mxu0 %v631
      %v1528 = vpop.f32.mrb[0].mxu0
      %v1529 = vadd.f32 %v381, %v1528
      %v1530 = vpop.f32.mrb[0].mxu0
      %v1531 = vadd.f32 %v385, %v1530
      %v1532 = vpop.f32.mrb[0].mxu0
      %v1533 = vadd.f32 %v381, %v1532
      %v1534 = vpop.f32.mrb[0].mxu0
      %v1535 = vadd.f32 %v385, %v1534
      %1536 = vmatprep.mubr.bf16.mxu0 0
      %1537 = vmatmul.mubr.bf16.gmra.mrb[0].mxu0 %v634
      %v1538 = vpop.f32.mrb[0].mxu0
      %v1539 = vadd.f32 %v381, %v1538
      %v1540 = vpop.f32.mrb[0].mxu0
      %v1541 = vadd.f32 %v385, %v1540
      %v1542 = vpop.f32.mrb[0].mxu0
      %v1543 = vadd.f32 %v381, %v1542
      %v1544 = vpop.f32.mrb[0].mxu0
      %v1545 = vadd.f32 %v385, %v1544
      %1546 = vmatprep.mubr.bf16.mxu0 0
      %1547 = vmatmul.mubr.bf16.gmra.mrb[0].mxu0 %v637
      %v1548 = vpop.f32.mrb[0].mxu0
      %v1549 = vadd.f32 %v381, %v1548
      %v1550 = vpop.f32.mrb[0].mxu0
      %v1551 = vadd.f32 %v385, %v1550
      %v1552 = vpop.f32.mrb[0].mxu0
      %v1553 = vadd.f32 %v381, %v1552
      %v1554 = vpop.f32.mrb[0].mxu0
      %v1555 = vadd.f32 %v385, %v1554
      %1556 = vmatprep.mubr.bf16.mxu0 0
      %1557 = vmatmul.mubr.bf16.gmra.mrb[0].mxu0 %v640
      %v1558 = vpop.f32.mrb[0].mxu0
      %v1559 = vadd.f32 %v381, %v1558
      %v1560 = vpop.f32.mrb[0].mxu0
      %v1561 = vadd.f32 %v385, %v1560
      %v1562 = vpop.f32.mrb[0].mxu0
      %v1563 = vadd.f32 %v381, %v1562
      %v1564 = vpop.f32.mrb[0].mxu0
      %v1565 = vadd.f32 %v385, %v1564
      %1566 = vmatprep.mubr.bf16.mxu0 0
      %1567 = vmatmul.mubr.bf16.gmra.mrb[0].mxu0 %v643
      %v1568 = vpop.f32.mrb[0].mxu0
      %v1569 = vadd.f32 %v381, %v1568
      %v1570 = vpop.f32.mrb[0].mxu0
      %v1571 = vadd.f32 %v385, %v1570
      %v1572 = vpop.f32.mrb[0].mxu0
      %v1573 = vadd.f32 %v381, %v1572
      %v1574 = vpop.f32.mrb[0].mxu0
      %v1575 = vadd.f32 %v385, %v1574
      %1576 = vmatprep.mubr.bf16.mxu0 0
      %1577 = vmatmul.mubr.bf16.gmra.mrb[0].mxu0 %v646
      %v1578 = vpop.f32.mrb[0].mxu0
      %v1579 = vadd.f32 %v381, %v1578
      %v1580 = vpop.f32.mrb[0].mxu0
      %v1581 = vadd.f32 %v385, %v1580
      %v1582 = vpop.f32.mrb[0].mxu0
      %v1583 = vadd.f32 %v381, %v1582
      %v1584 = vpop.f32.mrb[0].mxu0
      %v1585 = vadd.f32 %v385, %v1584
      %1586 = vmatprep.mubr.bf16.mxu0 0
      %1587 = vmatmul.mubr.bf16.gmra.mrb[0].mxu0 %v649
      %v1588 = vpop.f32.mrb[0].mxu0
      %v1589 = vadd.f32 %v381, %v1588
      %v1590 = vpop.f32.mrb[0].mxu0
      %v1591 = vadd.f32 %v385, %v1590
      %v1592 = vpop.f32.mrb[0].mxu0
      %v1593 = vadd.f32 %v381, %v1592
      %v1594 = vpop.f32.mrb[0].mxu0
      %v1595 = vadd.f32 %v385, %v1594
      %1596 = vmatprep.mubr.bf16.mxu0 0
      %1597 = vmatmul.mubr.bf16.gmra.mrb[0].mxu0 %v652
      %v1598 = vpop.f32.mrb[0].mxu0
      %v1599 = vadd.f32 %v381, %v1598
      %v1600 = vpop.f32.mrb[0].mxu0
      %v1601 = vadd.f32 %v385, %v1600
      %v1602 = vpop.f32.mrb[0].mxu0
      %v1603 = vadd.f32 %v381, %v1602
      %v1604 = vpop.f32.mrb[0].mxu0
      %v1605 = vadd.f32 %v385, %v1604
      %1606 = vmatprep.mubr.bf16.mxu0 0
      %1607 = vmatmul.mubr.bf16.gmra.mrb[0].mxu0 %v655
      %v1608 = vpop.f32.mrb[0].mxu0
      %v1609 = vadd.f32 %v381, %v1608
      %v1610 = vpop.f32.mrb[0].mxu0
      %v1611 = vadd.f32 %v385, %v1610
      %v1612 = vpop.f32.mrb[0].mxu0
      %v1613 = vadd.f32 %v381, %v1612
      %v1614 = vpop.f32.mrb[0].mxu0
      %v1615 = vadd.f32 %v385, %v1614
      %1616 = vmatprep.mubr.bf16.mxu0 0
      %1617 = vmatmul.mubr.bf16.gmra.mrb[0].mxu0 %v658
      %v1618 = vpop.f32.mrb[0].mxu0
      %v1619 = vadd.f32 %v381, %v1618
      %v1620 = vpop.f32.mrb[0].mxu0
      %v1621 = vadd.f32 %v385, %v1620
      %v1622 = vpop.f32.mrb[0].mxu0
      %v1623 = vadd.f32 %v381, %v1622
      %v1624 = vpop.f32.mrb[0].mxu0
      %v1625 = vadd.f32 %v385, %v1624
      %1626 = vmatprep.mubr.bf16.mxu0 0
      %1627 = vmatmul.mubr.bf16.gmra.mrb[0].mxu0 %v661
      %v1628 = vpop.f32.mrb[0].mxu0
      %v1629 = vadd.f32 %v381, %v1628
      %v1630 = vpop.f32.mrb[0].mxu0
      %v1631 = vadd.f32 %v385, %v1630
      %v1632 = vpop.f32.mrb[0].mxu0
      %v1633 = vadd.f32 %v381, %v1632
      %v1634 = vpop.f32.mrb[0].mxu0
      %v1635 = vadd.f32 %v385, %v1634
      %1636 = vmatprep.mubr.bf16.mxu0 0
      %1637 = vmatmul.mubr.bf16.gmra.mrb[0].mxu0 %v664
      %v1638 = vpop.f32.mrb[0].mxu0
      %v1639 = vadd.f32 %v381, %v1638
      %v1640 = vpop.f32.mrb[0].mxu0
      %v1641 = vadd.f32 %v385, %v1640
      %v1642 = vpop.f32.mrb[0].mxu0
      %v1643 = vadd.f32 %v381, %v1642
      %v1644 = vpop.f32.mrb[0].mxu0
      %v1645 = vadd.f32 %v385, %v1644
      %1646 = vmatprep.mubr.bf16.mxu0 0
      %1647 = vmatmul.mubr.bf16.gmra.mrb[0].mxu0 %v667
      %v1648 = vpop.f32.mrb[0].mxu0
      %v1649 = vadd.f32 %v381, %v1648
      %v1650 = vpop.f32.mrb[0].mxu0
      %v1651 = vadd.f32 %v385, %v1650
      %v1652 = vpop.f32.mrb[0].mxu0
      %v1653 = vadd.f32 %v381, %v1652
      %v1654 = vpop.f32.mrb[0].mxu0
      %v1655 = vadd.f32 %v385, %v1654
      %1656 = vmatprep.mubr.bf16.mxu0 0
      %1657 = vmatmul.mubr.bf16.gmra.mrb[0].mxu0 %v670
      %v1658 = vpop.f32.mrb[0].mxu0
      %v1659 = vadd.f32 %v381, %v1658
      %v1660 = vpop.f32.mrb[0].mxu0
      %v1661 = vadd.f32 %v385, %v1660
      %v1662 = vpop.f32.mrb[0].mxu0
      %v1663 = vadd.f32 %v381, %v1662
      %v1664 = vpop.f32.mrb[0].mxu0
      %v1665 = vadd.f32 %v385, %v1664
      %1666 = vmatprep.mubr.bf16.mxu0 0
      %1667 = vmatmul.mubr.bf16.gmra.mrb[0].mxu0 %v673
      %v1668 = vpop.f32.mrb[0].mxu0
      %v1669 = vadd.f32 %v381, %v1668
      %v1670 = vpop.f32.mrb[0].mxu0
      %v1671 = vadd.f32 %v385, %v1670
      %v1672 = vpop.f32.mrb[0].mxu0
      %v1673 = vadd.f32 %v381, %v1672
      %v1674 = vpop.f32.mrb[0].mxu0
      %v1675 = vadd.f32 %v385, %v1674
      %1676 = vmatprep.mubr.bf16.mxu0 0
      %1677 = vmatmul.mubr.bf16.gmra.mrb[0].mxu0 %v676
      %v1678 = vpop.f32.mrb[0].mxu0
      %v1679 = vadd.f32 %v381, %v1678
      %v1680 = vpop.f32.mrb[0].mxu0
      %v1681 = vadd.f32 %v385, %v1680
      %v1682 = vpop.f32.mrb[0].mxu0
      %v1683 = vadd.f32 %v381, %v1682
      %v1684 = vpop.f32.mrb[0].mxu0
      %v1685 = vadd.f32 %v385, %v1684
      %1686 = vmatprep.mubr.bf16.mxu0 0
      %1687 = vmatmul.mubr.bf16.gmra.mrb[0].mxu0 %v679
      %v1688 = vpop.f32.mrb[0].mxu0
      %v1689 = vadd.f32 %v381, %v1688
      %v1690 = vpop.f32.mrb[0].mxu0
      %v1691 = vadd.f32 %v385, %v1690
      %v1692 = vpop.f32.mrb[0].mxu0
      %v1693 = vadd.f32 %v381, %v1692
      %v1694 = vpop.f32.mrb[0].mxu0
      %v1695 = vadd.f32 %v385, %v1694
      %1696 = vmatprep.mubr.bf16.mxu0 0
      %1697 = vmatmul.mubr.bf16.gmra.mrb[0].mxu0 %v682
      %v1698 = vpop.f32.mrb[0].mxu0
      %v1699 = vadd.f32 %v381, %v1698
      %v1700 = vpop.f32.mrb[0].mxu0
      %v1701 = vadd.f32 %v385, %v1700
      %v1702 = vpop.f32.mrb[0].mxu0
      %v1703 = vadd.f32 %v381, %v1702
      %v1704 = vpop.f32.mrb[0].mxu0
      %v1705 = vadd.f32 %v385, %v1704
      %1706 = vmatprep.mubr.bf16.mxu0 0
      %1707 = vmatmul.mubr.bf16.gmra.mrb[0].mxu0 %v685
      %v1708 = vpop.f32.mrb[0].mxu0
      %v1709 = vadd.f32 %v381, %v1708
      %v1710 = vpop.f32.mrb[0].mxu0
      %v1711 = vadd.f32 %v385, %v1710
      %v1712 = vpop.f32.mrb[0].mxu0
      %v1713 = vadd.f32 %v381, %v1712
      %v1714 = vpop.f32.mrb[0].mxu0
      %v1715 = vadd.f32 %v385, %v1714
      %1716 = vmatprep.mubr.bf16.mxu0 0
      %1717 = vmatmul.mubr.bf16.gmra.mrb[0].mxu0 %v688
      %v1718 = vpop.f32.mrb[0].mxu0
      %v1719 = vadd.f32 %v381, %v1718
      %v1720 = vpop.f32.mrb[0].mxu0
      %v1721 = vadd.f32 %v385, %v1720
      %v1722 = vpop.f32.mrb[0].mxu0
      %v1723 = vadd.f32 %v381, %v1722
      %v1724 = vpop.f32.mrb[0].mxu0
      %v1725 = vadd.f32 %v385, %v1724
      %1726 = vmatprep.mubr.bf16.mxu0 0
      %1727 = vmatmul.mubr.bf16.gmra.mrb[0].mxu0 %v691
      %v1728 = vpop.f32.mrb[0].mxu0
      %v1729 = vadd.f32 %v381, %v1728
      %v1730 = vpop.f32.mrb[0].mxu0
      %v1731 = vadd.f32 %v385, %v1730
      %v1732 = vpop.f32.mrb[0].mxu0
      %v1733 = vadd.f32 %v381, %v1732
      %v1734 = vpop.f32.mrb[0].mxu0
      %v1735 = vadd.f32 %v385, %v1734
      %1736 = vmatprep.mubr.bf16.mxu0 0
      %1737 = vmatmul.mubr.bf16.gmra.mrb[0].mxu0 %v694
      %v1738 = vpop.f32.mrb[0].mxu0
      %v1739 = vadd.f32 %v381, %v1738
      %v1740 = vpop.f32.mrb[0].mxu0
      %v1741 = vadd.f32 %v385, %v1740
      %v1742 = vpop.f32.mrb[0].mxu0
      %v1743 = vadd.f32 %v381, %v1742
      %v1744 = vpop.f32.mrb[0].mxu0
      %v1745 = vadd.f32 %v385, %v1744
      %1746 = vmatprep.mubr.bf16.mxu0 0
      %1747 = vmatmul.mubr.bf16.gmra.mrb[0].mxu0 %v697
      %v1748 = vpop.f32.mrb[0].mxu0
      %v1749 = vadd.f32 %v381, %v1748
      %v1750 = vpop.f32.mrb[0].mxu0
      %v1751 = vadd.f32 %v385, %v1750
      %v1752 = vpop.f32.mrb[0].mxu0
      %v1753 = vadd.f32 %v381, %v1752
      %v1754 = vpop.f32.mrb[0].mxu0
      %v1755 = vadd.f32 %v385, %v1754
      %1756 = vmatprep.mubr.bf16.mxu0 0
      %1757 = vmatmul.mubr.bf16.gmra.mrb[0].mxu0 %v700
      %v1758 = vpop.f32.mrb[0].mxu0
      %v1759 = vadd.f32 %v381, %v1758
      %v1760 = vpop.f32.mrb[0].mxu0
      %v1761 = vadd.f32 %v385, %v1760
      %v1762 = vpop.f32.mrb[0].mxu0
      %v1763 = vadd.f32 %v381, %v1762
      %v1764 = vpop.f32.mrb[0].mxu0
      %v1765 = vadd.f32 %v385, %v1764
      %1766 = vmatprep.mubr.bf16.mxu0 0
      %1767 = vmatmul.mubr.bf16.gmra.mrb[0].mxu0 %v703
      %v1768 = vpop.f32.mrb[0].mxu0
      %v1769 = vadd.f32 %v381, %v1768
      %v1770 = vpop.f32.mrb[0].mxu0
      %v1771 = vadd.f32 %v385, %v1770
      %v1772 = vpop.f32.mrb[0].mxu0
      %v1773 = vadd.f32 %v381, %v1772
      %v1774 = vpop.f32.mrb[0].mxu0
      %v1775 = vadd.f32 %v385, %v1774
      %1776 = vmatprep.mubr.bf16.mxu0 0
      %1777 = vmatmul.mubr.bf16.gmra.mrb[0].mxu0 %v706
      %v1778 = vpop.f32.mrb[0].mxu0
      %v1779 = vadd.f32 %v381, %v1778
      %v1780 = vpop.f32.mrb[0].mxu0
      %v1781 = vadd.f32 %v385, %v1780
      %v1782 = vpop.f32.mrb[0].mxu0
      %v1783 = vadd.f32 %v381, %v1782
      %v1784 = vpop.f32.mrb[0].mxu0
      %v1785 = vadd.f32 %v385, %v1784
      %1786 = vmatprep.mubr.bf16.mxu0 0
      %1787 = vmatmul.mubr.bf16.gmra.mrb[0].mxu0 %v709
      %v1788 = vpop.f32.mrb[0].mxu0
      %v1789 = vadd.f32 %v381, %v1788
      %v1790 = vpop.f32.mrb[0].mxu0
      %v1791 = vadd.f32 %v385, %v1790
      %v1792 = vpop.f32.mrb[0].mxu0
      %v1793 = vadd.f32 %v381, %v1792
      %v1794 = vpop.f32.mrb[0].mxu0
      %v1795 = vadd.f32 %v385, %v1794
      %1796 = vmatprep.mubr.bf16.mxu0 0
      %1797 = vmatmul.mubr.bf16.gmra.mrb[0].mxu0 %v712
      %v1798 = vpop.f32.mrb[0].mxu0
      %v1799 = vadd.f32 %v381, %v1798
      %v1800 = vpop.f32.mrb[0].mxu0
      %v1801 = vadd.f32 %v385, %v1800
      %v1802 = vpop.f32.mrb[0].mxu0
      %v1803 = vadd.f32 %v381, %v1802
      %v1804 = vpop.f32.mrb[0].mxu0
      %v1805 = vadd.f32 %v385, %v1804
      %1806 = vdwg.mxu0
      %1807 = vmatprep.subr.bf16.mxu0 %v740
      %1808 = vmatpush1.bf16.msra.mxu0 %v737
      %1809 = vmatprep.subr.bf16.mxu0 0
      %1810 = vmatpush1.bf16.msra.mxu0 0
      %1811 = vmatprep.subr.bf16.mxu0 0
      %1812 = vmatpush1.bf16.msra.mxu0 0
      %1813 = vmatprep.subr.bf16.mxu0 0
      %1814 = vmatpush1.bf16.msra.mxu0 0
      %1815 = vmatprep.subr.bf16.mxu0 0
      %1816 = vmatpush1.bf16.msra.mxu0 0
      %1817 = vmatprep.subr.bf16.mxu0 0
      %1818 = vmatpush1.bf16.msra.mxu0 0
      %1819 = vmatprep.subr.bf16.mxu0 0
      %1820 = vmatpush1.bf16.msra.mxu0 0
      %1821 = vmatprep.subr.bf16.mxu0 0
      %1822 = vmatpush1.bf16.msra.mxu0 0
      %1823 = vmatprep.subr.bf16.mxu0 0
      %1824 = vmatpush1.bf16.msra.mxu0 0
      %1825 = vmatprep.subr.bf16.mxu0 0
      %1826 = vmatpush1.bf16.msra.mxu0 0
      %1827 = vmatprep.subr.bf16.mxu0 0
      %1828 = vmatpush1.bf16.msra.mxu0 0
      %1829 = vmatprep.subr.bf16.mxu0 0
      %1830 = vmatpush1.bf16.msra.mxu0 0
      %1831 = vmatprep.subr.bf16.mxu0 0
      %1832 = vmatpush1.bf16.msra.mxu0 0
      %1833 = vmatprep.subr.bf16.mxu0 0
      %1834 = vmatpush1.bf16.msra.mxu0 0
      %1835 = vmatprep.subr.bf16.mxu0 0
      %1836 = vmatpush1.bf16.msra.mxu0 0
      %1837 = vmatprep.subr.bf16.mxu0 0
      %1838 = vmatpush1.bf16.msra.mxu0 0
      %1839 = vmatprep.mubr.bf16.mxu0 0
      %1840 = vmatmul.mubr.bf16.gmra.mrb[0].mxu0 %v619
      %v1841 = vpop.f32.mrb[0].mxu0
      %v1842 = vadd.f32 %v389, %v1841
      %v1843 = vpop.f32.mrb[0].mxu0
      %v1844 = vadd.f32 %v393, %v1843
      %v1845 = vpop.f32.mrb[0].mxu0
      %v1846 = vadd.f32 %v389, %v1845
      %v1847 = vpop.f32.mrb[0].mxu0
      %v1848 = vadd.f32 %v393, %v1847
      %1849 = vmatprep.mubr.bf16.mxu0 0
      %1850 = vmatmul.mubr.bf16.gmra.mrb[0].mxu0 %v622
      %v1851 = vpop.f32.mrb[0].mxu0
      %v1852 = vadd.f32 %v389, %v1851
      %v1853 = vpop.f32.mrb[0].mxu0
      %v1854 = vadd.f32 %v393, %v1853
      %v1855 = vpop.f32.mrb[0].mxu0
      %v1856 = vadd.f32 %v389, %v1855
      %v1857 = vpop.f32.mrb[0].mxu0
      %v1858 = vadd.f32 %v393, %v1857
      %1859 = vmatprep.mubr.bf16.mxu0 0
      %1860 = vmatmul.mubr.bf16.gmra.mrb[0].mxu0 %v625
      %v1861 = vpop.f32.mrb[0].mxu0
      %v1862 = vadd.f32 %v389, %v1861
      %v1863 = vpop.f32.mrb[0].mxu0
      %v1864 = vadd.f32 %v393, %v1863
      %v1865 = vpop.f32.mrb[0].mxu0
      %v1866 = vadd.f32 %v389, %v1865
      %v1867 = vpop.f32.mrb[0].mxu0
      %v1868 = vadd.f32 %v393, %v1867
      %1869 = vmatprep.mubr.bf16.mxu0 0
      %1870 = vmatmul.mubr.bf16.gmra.mrb[0].mxu0 %v628
      %v1871 = vpop.f32.mrb[0].mxu0
      %v1872 = vadd.f32 %v389, %v1871
      %v1873 = vpop.f32.mrb[0].mxu0
      %v1874 = vadd.f32 %v393, %v1873
      %v1875 = vpop.f32.mrb[0].mxu0
      %v1876 = vadd.f32 %v389, %v1875
      %v1877 = vpop.f32.mrb[0].mxu0
      %v1878 = vadd.f32 %v393, %v1877
      %1879 = vmatprep.mubr.bf16.mxu0 0
      %1880 = vmatmul.mubr.bf16.gmra.mrb[0].mxu0 %v631
      %v1881 = vpop.f32.mrb[0].mxu0
      %v1882 = vadd.f32 %v389, %v1881
      %v1883 = vpop.f32.mrb[0].mxu0
      %v1884 = vadd.f32 %v393, %v1883
      %v1885 = vpop.f32.mrb[0].mxu0
      %v1886 = vadd.f32 %v389, %v1885
      %v1887 = vpop.f32.mrb[0].mxu0
      %v1888 = vadd.f32 %v393, %v1887
      %1889 = vmatprep.mubr.bf16.mxu0 0
      %1890 = vmatmul.mubr.bf16.gmra.mrb[0].mxu0 %v634
      %v1891 = vpop.f32.mrb[0].mxu0
      %v1892 = vadd.f32 %v389, %v1891
      %v1893 = vpop.f32.mrb[0].mxu0
      %v1894 = vadd.f32 %v393, %v1893
      %v1895 = vpop.f32.mrb[0].mxu0
      %v1896 = vadd.f32 %v389, %v1895
      %v1897 = vpop.f32.mrb[0].mxu0
      %v1898 = vadd.f32 %v393, %v1897
      %1899 = vmatprep.mubr.bf16.mxu0 0
      %1900 = vmatmul.mubr.bf16.gmra.mrb[0].mxu0 %v637
      %v1901 = vpop.f32.mrb[0].mxu0
      %v1902 = vadd.f32 %v389, %v1901
      %v1903 = vpop.f32.mrb[0].mxu0
      %v1904 = vadd.f32 %v393, %v1903
      %v1905 = vpop.f32.mrb[0].mxu0
      %v1906 = vadd.f32 %v389, %v1905
      %v1907 = vpop.f32.mrb[0].mxu0
      %v1908 = vadd.f32 %v393, %v1907
      %1909 = vmatprep.mubr.bf16.mxu0 0
      %1910 = vmatmul.mubr.bf16.gmra.mrb[0].mxu0 %v640
      %v1911 = vpop.f32.mrb[0].mxu0
      %v1912 = vadd.f32 %v389, %v1911
      %v1913 = vpop.f32.mrb[0].mxu0
      %v1914 = vadd.f32 %v393, %v1913
      %v1915 = vpop.f32.mrb[0].mxu0
      %v1916 = vadd.f32 %v389, %v1915
      %v1917 = vpop.f32.mrb[0].mxu0
      %v1918 = vadd.f32 %v393, %v1917
      %1919 = vmatprep.mubr.bf16.mxu0 0
      %1920 = vmatmul.mubr.bf16.gmra.mrb[0].mxu0 %v643
      %v1921 = vpop.f32.mrb[0].mxu0
      %v1922 = vadd.f32 %v389, %v1921
      %v1923 = vpop.f32.mrb[0].mxu0
      %v1924 = vadd.f32 %v393, %v1923
      %v1925 = vpop.f32.mrb[0].mxu0
      %v1926 = vadd.f32 %v389, %v1925
      %v1927 = vpop.f32.mrb[0].mxu0
      %v1928 = vadd.f32 %v393, %v1927
      %1929 = vmatprep.mubr.bf16.mxu0 0
      %1930 = vmatmul.mubr.bf16.gmra.mrb[0].mxu0 %v646
      %v1931 = vpop.f32.mrb[0].mxu0
      %v1932 = vadd.f32 %v389, %v1931
      %v1933 = vpop.f32.mrb[0].mxu0
      %v1934 = vadd.f32 %v393, %v1933
      %v1935 = vpop.f32.mrb[0].mxu0
      %v1936 = vadd.f32 %v389, %v1935
      %v1937 = vpop.f32.mrb[0].mxu0
      %v1938 = vadd.f32 %v393, %v1937
      %1939 = vmatprep.mubr.bf16.mxu0 0
      %1940 = vmatmul.mubr.bf16.gmra.mrb[0].mxu0 %v649
      %v1941 = vpop.f32.mrb[0].mxu0
      %v1942 = vadd.f32 %v389, %v1941
      %v1943 = vpop.f32.mrb[0].mxu0
      %v1944 = vadd.f32 %v393, %v1943
      %v1945 = vpop.f32.mrb[0].mxu0
      %v1946 = vadd.f32 %v389, %v1945
      %v1947 = vpop.f32.mrb[0].mxu0
      %v1948 = vadd.f32 %v393, %v1947
      %1949 = vmatprep.mubr.bf16.mxu0 0
      %1950 = vmatmul.mubr.bf16.gmra.mrb[0].mxu0 %v652
      %v1951 = vpop.f32.mrb[0].mxu0
      %v1952 = vadd.f32 %v389, %v1951
      %v1953 = vpop.f32.mrb[0].mxu0
      %v1954 = vadd.f32 %v393, %v1953
      %v1955 = vpop.f32.mrb[0].mxu0
      %v1956 = vadd.f32 %v389, %v1955
      %v1957 = vpop.f32.mrb[0].mxu0
      %v1958 = vadd.f32 %v393, %v1957
      %1959 = vmatprep.mubr.bf16.mxu0 0
      %1960 = vmatmul.mubr.bf16.gmra.mrb[0].mxu0 %v655
      %v1961 = vpop.f32.mrb[0].mxu0
      %v1962 = vadd.f32 %v389, %v1961
      %v1963 = vpop.f32.mrb[0].mxu0
      %v1964 = vadd.f32 %v393, %v1963
      %v1965 = vpop.f32.mrb[0].mxu0
      %v1966 = vadd.f32 %v389, %v1965
      %v1967 = vpop.f32.mrb[0].mxu0
      %v1968 = vadd.f32 %v393, %v1967
      %1969 = vmatprep.mubr.bf16.mxu0 0
      %1970 = vmatmul.mubr.bf16.gmra.mrb[0].mxu0 %v658
      %v1971 = vpop.f32.mrb[0].mxu0
      %v1972 = vadd.f32 %v389, %v1971
      %v1973 = vpop.f32.mrb[0].mxu0
      %v1974 = vadd.f32 %v393, %v1973
      %v1975 = vpop.f32.mrb[0].mxu0
      %v1976 = vadd.f32 %v389, %v1975
      %v1977 = vpop.f32.mrb[0].mxu0
      %v1978 = vadd.f32 %v393, %v1977
      %1979 = vmatprep.mubr.bf16.mxu0 0
      %1980 = vmatmul.mubr.bf16.gmra.mrb[0].mxu0 %v661
      %v1981 = vpop.f32.mrb[0].mxu0
      %v1982 = vadd.f32 %v389, %v1981
      %v1983 = vpop.f32.mrb[0].mxu0
      %v1984 = vadd.f32 %v393, %v1983
      %v1985 = vpop.f32.mrb[0].mxu0
      %v1986 = vadd.f32 %v389, %v1985
      %v1987 = vpop.f32.mrb[0].mxu0
      %v1988 = vadd.f32 %v393, %v1987
      %1989 = vmatprep.mubr.bf16.mxu0 0
      %1990 = vmatmul.mubr.bf16.gmra.mrb[0].mxu0 %v664
      %v1991 = vpop.f32.mrb[0].mxu0
      %v1992 = vadd.f32 %v389, %v1991
      %v1993 = vpop.f32.mrb[0].mxu0
      %v1994 = vadd.f32 %v393, %v1993
      %v1995 = vpop.f32.mrb[0].mxu0
      %v1996 = vadd.f32 %v389, %v1995
      %v1997 = vpop.f32.mrb[0].mxu0
      %v1998 = vadd.f32 %v393, %v1997
      %1999 = vmatprep.mubr.bf16.mxu0 0
      %2000 = vmatmul.mubr.bf16.gmra.mrb[0].mxu0 %v667
      %v2001 = vpop.f32.mrb[0].mxu0
      %v2002 = vadd.f32 %v389, %v2001
      %v2003 = vpop.f32.mrb[0].mxu0
      %v2004 = vadd.f32 %v393, %v2003
      %v2005 = vpop.f32.mrb[0].mxu0
      %v2006 = vadd.f32 %v389, %v2005
      %v2007 = vpop.f32.mrb[0].mxu0
      %v2008 = vadd.f32 %v393, %v2007
      %2009 = vmatprep.mubr.bf16.mxu0 0
      %2010 = vmatmul.mubr.bf16.gmra.mrb[0].mxu0 %v670
      %v2011 = vpop.f32.mrb[0].mxu0
      %v2012 = vadd.f32 %v389, %v2011
      %v2013 = vpop.f32.mrb[0].mxu0
      %v2014 = vadd.f32 %v393, %v2013
      %v2015 = vpop.f32.mrb[0].mxu0
      %v2016 = vadd.f32 %v389, %v2015
      %v2017 = vpop.f32.mrb[0].mxu0
      %v2018 = vadd.f32 %v393, %v2017
      %2019 = vmatprep.mubr.bf16.mxu0 0
      %2020 = vmatmul.mubr.bf16.gmra.mrb[0].mxu0 %v673
      %v2021 = vpop.f32.mrb[0].mxu0
      %v2022 = vadd.f32 %v389, %v2021
      %v2023 = vpop.f32.mrb[0].mxu0
      %v2024 = vadd.f32 %v393, %v2023
      %v2025 = vpop.f32.mrb[0].mxu0
      %v2026 = vadd.f32 %v389, %v2025
      %v2027 = vpop.f32.mrb[0].mxu0
      %v2028 = vadd.f32 %v393, %v2027
      %2029 = vmatprep.mubr.bf16.mxu0 0
      %2030 = vmatmul.mubr.bf16.gmra.mrb[0].mxu0 %v676
      %v2031 = vpop.f32.mrb[0].mxu0
      %v2032 = vadd.f32 %v389, %v2031
      %v2033 = vpop.f32.mrb[0].mxu0
      %v2034 = vadd.f32 %v393, %v2033
      %v2035 = vpop.f32.mrb[0].mxu0
      %v2036 = vadd.f32 %v389, %v2035
      %v2037 = vpop.f32.mrb[0].mxu0
      %v2038 = vadd.f32 %v393, %v2037
      %2039 = vmatprep.mubr.bf16.mxu0 0
      %2040 = vmatmul.mubr.bf16.gmra.mrb[0].mxu0 %v679
      %v2041 = vpop.f32.mrb[0].mxu0
      %v2042 = vadd.f32 %v389, %v2041
      %v2043 = vpop.f32.mrb[0].mxu0
      %v2044 = vadd.f32 %v393, %v2043
      %v2045 = vpop.f32.mrb[0].mxu0
      %v2046 = vadd.f32 %v389, %v2045
      %v2047 = vpop.f32.mrb[0].mxu0
      %v2048 = vadd.f32 %v393, %v2047
      %2049 = vmatprep.mubr.bf16.mxu0 0
      %2050 = vmatmul.mubr.bf16.gmra.mrb[0].mxu0 %v682
      %v2051 = vpop.f32.mrb[0].mxu0
      %v2052 = vadd.f32 %v389, %v2051
      %v2053 = vpop.f32.mrb[0].mxu0
      %v2054 = vadd.f32 %v393, %v2053
      %v2055 = vpop.f32.mrb[0].mxu0
      %v2056 = vadd.f32 %v389, %v2055
      %v2057 = vpop.f32.mrb[0].mxu0
      %v2058 = vadd.f32 %v393, %v2057
      %2059 = vmatprep.mubr.bf16.mxu0 0
      %2060 = vmatmul.mubr.bf16.gmra.mrb[0].mxu0 %v685
      %v2061 = vpop.f32.mrb[0].mxu0
      %v2062 = vadd.f32 %v389, %v2061
      %v2063 = vpop.f32.mrb[0].mxu0
      %v2064 = vadd.f32 %v393, %v2063
      %v2065 = vpop.f32.mrb[0].mxu0
      %v2066 = vadd.f32 %v389, %v2065
      %v2067 = vpop.f32.mrb[0].mxu0
      %v2068 = vadd.f32 %v393, %v2067
      %2069 = vmatprep.mubr.bf16.mxu0 0
      %2070 = vmatmul.mubr.bf16.gmra.mrb[0].mxu0 %v688
      %v2071 = vpop.f32.mrb[0].mxu0
      %v2072 = vadd.f32 %v389, %v2071
      %v2073 = vpop.f32.mrb[0].mxu0
      %v2074 = vadd.f32 %v393, %v2073
      %v2075 = vpop.f32.mrb[0].mxu0
      %v2076 = vadd.f32 %v389, %v2075
      %v2077 = vpop.f32.mrb[0].mxu0
      %v2078 = vadd.f32 %v393, %v2077
      %2079 = vmatprep.mubr.bf16.mxu0 0
      %2080 = vmatmul.mubr.bf16.gmra.mrb[0].mxu0 %v691
      %v2081 = vpop.f32.mrb[0].mxu0
      %v2082 = vadd.f32 %v389, %v2081
      %v2083 = vpop.f32.mrb[0].mxu0
      %v2084 = vadd.f32 %v393, %v2083
      %v2085 = vpop.f32.mrb[0].mxu0
      %v2086 = vadd.f32 %v389, %v2085
      %v2087 = vpop.f32.mrb[0].mxu0
      %v2088 = vadd.f32 %v393, %v2087
      %2089 = vmatprep.mubr.bf16.mxu0 0
      %2090 = vmatmul.mubr.bf16.gmra.mrb[0].mxu0 %v694
      %v2091 = vpop.f32.mrb[0].mxu0
      %v2092 = vadd.f32 %v389, %v2091
      %v2093 = vpop.f32.mrb[0].mxu0
      %v2094 = vadd.f32 %v393, %v2093
      %v2095 = vpop.f32.mrb[0].mxu0
      %v2096 = vadd.f32 %v389, %v2095
      %v2097 = vpop.f32.mrb[0].mxu0
      %v2098 = vadd.f32 %v393, %v2097
      %2099 = vmatprep.mubr.bf16.mxu0 0
      %2100 = vmatmul.mubr.bf16.gmra.mrb[0].mxu0 %v697
      %v2101 = vpop.f32.mrb[0].mxu0
      %v2102 = vadd.f32 %v389, %v2101
      %v2103 = vpop.f32.mrb[0].mxu0
      %v2104 = vadd.f32 %v393, %v2103
      %v2105 = vpop.f32.mrb[0].mxu0
      %v2106 = vadd.f32 %v389, %v2105
      %v2107 = vpop.f32.mrb[0].mxu0
      %v2108 = vadd.f32 %v393, %v2107
      %2109 = vmatprep.mubr.bf16.mxu0 0
      %2110 = vmatmul.mubr.bf16.gmra.mrb[0].mxu0 %v700
      %v2111 = vpop.f32.mrb[0].mxu0
      %v2112 = vadd.f32 %v389, %v2111
      %v2113 = vpop.f32.mrb[0].mxu0
      %v2114 = vadd.f32 %v393, %v2113
      %v2115 = vpop.f32.mrb[0].mxu0
      %v2116 = vadd.f32 %v389, %v2115
      %v2117 = vpop.f32.mrb[0].mxu0
      %v2118 = vadd.f32 %v393, %v2117
      %2119 = vmatprep.mubr.bf16.mxu0 0
      %2120 = vmatmul.mubr.bf16.gmra.mrb[0].mxu0 %v703
      %v2121 = vpop.f32.mrb[0].mxu0
      %v2122 = vadd.f32 %v389, %v2121
      %v2123 = vpop.f32.mrb[0].mxu0
      %v2124 = vadd.f32 %v393, %v2123
      %v2125 = vpop.f32.mrb[0].mxu0
      %v2126 = vadd.f32 %v389, %v2125
      %v2127 = vpop.f32.mrb[0].mxu0
      %v2128 = vadd.f32 %v393, %v2127
      %2129 = vmatprep.mubr.bf16.mxu0 0
      %2130 = vmatmul.mubr.bf16.gmra.mrb[0].mxu0 %v706
      %v2131 = vpop.f32.mrb[0].mxu0
      %v2132 = vadd.f32 %v389, %v2131
      %v2133 = vpop.f32.mrb[0].mxu0
      %v2134 = vadd.f32 %v393, %v2133
      %v2135 = vpop.f32.mrb[0].mxu0
      %v2136 = vadd.f32 %v389, %v2135
      %v2137 = vpop.f32.mrb[0].mxu0
      %v2138 = vadd.f32 %v393, %v2137
      %2139 = vmatprep.mubr.bf16.mxu0 0
      %2140 = vmatmul.mubr.bf16.gmra.mrb[0].mxu0 %v709
      %v2141 = vpop.f32.mrb[0].mxu0
      %v2142 = vadd.f32 %v389, %v2141
      %v2143 = vpop.f32.mrb[0].mxu0
      %v2144 = vadd.f32 %v393, %v2143
      %v2145 = vpop.f32.mrb[0].mxu0
      %v2146 = vadd.f32 %v389, %v2145
      %v2147 = vpop.f32.mrb[0].mxu0
      %v2148 = vadd.f32 %v393, %v2147
      %2149 = vmatprep.mubr.bf16.mxu0 0
      %2150 = vmatmul.mubr.bf16.gmra.mrb[0].mxu0 %v712
      %v2151 = vpop.f32.mrb[0].mxu0
      %v2152 = vadd.f32 %v389, %v2151
      %v2153 = vpop.f32.mrb[0].mxu0
      %v2154 = vadd.f32 %v393, %v2153
      %v2155 = vpop.f32.mrb[0].mxu0
      %v2156 = vadd.f32 %v389, %v2155
      %v2157 = vpop.f32.mrb[0].mxu0
      %v2158 = vadd.f32 %v393, %v2157
      %2159 = vdwg.mxu0
      %2160 = vmatprep.subr.bf16.mxu0 %v746
      %2161 = vmatpush1.bf16.msra.mxu0 %v743
      %2162 = vmatprep.subr.bf16.mxu0 0
      %2163 = vmatpush1.bf16.msra.mxu0 0
      %2164 = vmatprep.subr.bf16.mxu0 0
      %2165 = vmatpush1.bf16.msra.mxu0 0
      %2166 = vmatprep.subr.bf16.mxu0 0
      %2167 = vmatpush1.bf16.msra.mxu0 0
      %2168 = vmatprep.subr.bf16.mxu0 0
      %2169 = vmatpush1.bf16.msra.mxu0 0
      %2170 = vmatprep.subr.bf16.mxu0 0
      %2171 = vmatpush1.bf16.msra.mxu0 0
      %2172 = vmatprep.subr.bf16.mxu0 0
      %2173 = vmatpush1.bf16.msra.mxu0 0
      %2174 = vmatprep.subr.bf16.mxu0 0
      %2175 = vmatpush1.bf16.msra.mxu0 0
      %2176 = vmatprep.subr.bf16.mxu0 0
      %2177 = vmatpush1.bf16.msra.mxu0 0
      %2178 = vmatprep.subr.bf16.mxu0 0
      %2179 = vmatpush1.bf16.msra.mxu0 0
      %2180 = vmatprep.subr.bf16.mxu0 0
      %2181 = vmatpush1.bf16.msra.mxu0 0
      %2182 = vmatprep.subr.bf16.mxu0 0
      %2183 = vmatpush1.bf16.msra.mxu0 0
      %2184 = vmatprep.subr.bf16.mxu0 0
      %2185 = vmatpush1.bf16.msra.mxu0 0
      %2186 = vmatprep.subr.bf16.mxu0 0
      %2187 = vmatpush1.bf16.msra.mxu0 0
      %2188 = vmatprep.subr.bf16.mxu0 0
      %2189 = vmatpush1.bf16.msra.mxu0 0
      %2190 = vmatprep.subr.bf16.mxu0 0
      %2191 = vmatpush1.bf16.msra.mxu0 0
      %2192 = vmatprep.mubr.bf16.mxu0 0
      %2193 = vmatmul.mubr.bf16.gmra.mrb[0].mxu0 %v619
      %v2194 = vpop.f32.mrb[0].mxu0
      %v2195 = vadd.f32 %v397, %v2194
      %v2196 = vpop.f32.mrb[0].mxu0
      %v2197 = vadd.f32 %v401, %v2196
      %v2198 = vpop.f32.mrb[0].mxu0
      %v2199 = vadd.f32 %v397, %v2198
      %v2200 = vpop.f32.mrb[0].mxu0
      %v2201 = vadd.f32 %v401, %v2200
      %2202 = vmatprep.mubr.bf16.mxu0 0
      %2203 = vmatmul.mubr.bf16.gmra.mrb[0].mxu0 %v622
      %v2204 = vpop.f32.mrb[0].mxu0
      %v2205 = vadd.f32 %v397, %v2204
      %v2206 = vpop.f32.mrb[0].mxu0
      %v2207 = vadd.f32 %v401, %v2206
      %v2208 = vpop.f32.mrb[0].mxu0
      %v2209 = vadd.f32 %v397, %v2208
      %v2210 = vpop.f32.mrb[0].mxu0
      %v2211 = vadd.f32 %v401, %v2210
      %2212 = vmatprep.mubr.bf16.mxu0 0
      %2213 = vmatmul.mubr.bf16.gmra.mrb[0].mxu0 %v625
      %v2214 = vpop.f32.mrb[0].mxu0
      %v2215 = vadd.f32 %v397, %v2214
      %v2216 = vpop.f32.mrb[0].mxu0
      %v2217 = vadd.f32 %v401, %v2216
      %v2218 = vpop.f32.mrb[0].mxu0
      %v2219 = vadd.f32 %v397, %v2218
      %v2220 = vpop.f32.mrb[0].mxu0
      %v2221 = vadd.f32 %v401, %v2220
      %2222 = vmatprep.mubr.bf16.mxu0 0
      %2223 = vmatmul.mubr.bf16.gmra.mrb[0].mxu0 %v628
      %v2224 = vpop.f32.mrb[0].mxu0
      %v2225 = vadd.f32 %v397, %v2224
      %v2226 = vpop.f32.mrb[0].mxu0
      %v2227 = vadd.f32 %v401, %v2226
      %v2228 = vpop.f32.mrb[0].mxu0
      %v2229 = vadd.f32 %v397, %v2228
      %v2230 = vpop.f32.mrb[0].mxu0
      %v2231 = vadd.f32 %v401, %v2230
      %2232 = vmatprep.mubr.bf16.mxu0 0
      %2233 = vmatmul.mubr.bf16.gmra.mrb[0].mxu0 %v631
      %v2234 = vpop.f32.mrb[0].mxu0
      %v2235 = vadd.f32 %v397, %v2234
      %v2236 = vpop.f32.mrb[0].mxu0
      %v2237 = vadd.f32 %v401, %v2236
      %v2238 = vpop.f32.mrb[0].mxu0
      %v2239 = vadd.f32 %v397, %v2238
      %v2240 = vpop.f32.mrb[0].mxu0
      %v2241 = vadd.f32 %v401, %v2240
      %2242 = vmatprep.mubr.bf16.mxu0 0
      %2243 = vmatmul.mubr.bf16.gmra.mrb[0].mxu0 %v634
      %v2244 = vpop.f32.mrb[0].mxu0
      %v2245 = vadd.f32 %v397, %v2244
      %v2246 = vpop.f32.mrb[0].mxu0
      %v2247 = vadd.f32 %v401, %v2246
      %v2248 = vpop.f32.mrb[0].mxu0
      %v2249 = vadd.f32 %v397, %v2248
      %v2250 = vpop.f32.mrb[0].mxu0
      %v2251 = vadd.f32 %v401, %v2250
      %2252 = vmatprep.mubr.bf16.mxu0 0
      %2253 = vmatmul.mubr.bf16.gmra.mrb[0].mxu0 %v637
      %v2254 = vpop.f32.mrb[0].mxu0
      %v2255 = vadd.f32 %v397, %v2254
      %v2256 = vpop.f32.mrb[0].mxu0
      %v2257 = vadd.f32 %v401, %v2256
      %v2258 = vpop.f32.mrb[0].mxu0
      %v2259 = vadd.f32 %v397, %v2258
      %v2260 = vpop.f32.mrb[0].mxu0
      %v2261 = vadd.f32 %v401, %v2260
      %2262 = vmatprep.mubr.bf16.mxu0 0
      %2263 = vmatmul.mubr.bf16.gmra.mrb[0].mxu0 %v640
      %v2264 = vpop.f32.mrb[0].mxu0
      %v2265 = vadd.f32 %v397, %v2264
      %v2266 = vpop.f32.mrb[0].mxu0
      %v2267 = vadd.f32 %v401, %v2266
      %v2268 = vpop.f32.mrb[0].mxu0
      %v2269 = vadd.f32 %v397, %v2268
      %v2270 = vpop.f32.mrb[0].mxu0
      %v2271 = vadd.f32 %v401, %v2270
      %2272 = vmatprep.mubr.bf16.mxu0 0
      %2273 = vmatmul.mubr.bf16.gmra.mrb[0].mxu0 %v643
      %v2274 = vpop.f32.mrb[0].mxu0
      %v2275 = vadd.f32 %v397, %v2274
      %v2276 = vpop.f32.mrb[0].mxu0
      %v2277 = vadd.f32 %v401, %v2276
      %v2278 = vpop.f32.mrb[0].mxu0
      %v2279 = vadd.f32 %v397, %v2278
      %v2280 = vpop.f32.mrb[0].mxu0
      %v2281 = vadd.f32 %v401, %v2280
      %2282 = vmatprep.mubr.bf16.mxu0 0
      %2283 = vmatmul.mubr.bf16.gmra.mrb[0].mxu0 %v646
      %v2284 = vpop.f32.mrb[0].mxu0
      %v2285 = vadd.f32 %v397, %v2284
      %v2286 = vpop.f32.mrb[0].mxu0
      %v2287 = vadd.f32 %v401, %v2286
      %v2288 = vpop.f32.mrb[0].mxu0
      %v2289 = vadd.f32 %v397, %v2288
      %v2290 = vpop.f32.mrb[0].mxu0
      %v2291 = vadd.f32 %v401, %v2290
      %2292 = vmatprep.mubr.bf16.mxu0 0
      %2293 = vmatmul.mubr.bf16.gmra.mrb[0].mxu0 %v649
      %v2294 = vpop.f32.mrb[0].mxu0
      %v2295 = vadd.f32 %v397, %v2294
      %v2296 = vpop.f32.mrb[0].mxu0
      %v2297 = vadd.f32 %v401, %v2296
      %v2298 = vpop.f32.mrb[0].mxu0
      %v2299 = vadd.f32 %v397, %v2298
      %v2300 = vpop.f32.mrb[0].mxu0
      %v2301 = vadd.f32 %v401, %v2300
      %2302 = vmatprep.mubr.bf16.mxu0 0
      %2303 = vmatmul.mubr.bf16.gmra.mrb[0].mxu0 %v652
      %v2304 = vpop.f32.mrb[0].mxu0
      %v2305 = vadd.f32 %v397, %v2304
      %v2306 = vpop.f32.mrb[0].mxu0
      %v2307 = vadd.f32 %v401, %v2306
      %v2308 = vpop.f32.mrb[0].mxu0
      %v2309 = vadd.f32 %v397, %v2308
      %v2310 = vpop.f32.mrb[0].mxu0
      %v2311 = vadd.f32 %v401, %v2310
      %2312 = vmatprep.mubr.bf16.mxu0 0
      %2313 = vmatmul.mubr.bf16.gmra.mrb[0].mxu0 %v655
      %v2314 = vpop.f32.mrb[0].mxu0
      %v2315 = vadd.f32 %v397, %v2314
      %v2316 = vpop.f32.mrb[0].mxu0
      %v2317 = vadd.f32 %v401, %v2316
      %v2318 = vpop.f32.mrb[0].mxu0
      %v2319 = vadd.f32 %v397, %v2318
      %v2320 = vpop.f32.mrb[0].mxu0
      %v2321 = vadd.f32 %v401, %v2320
      %2322 = vmatprep.mubr.bf16.mxu0 0
      %2323 = vmatmul.mubr.bf16.gmra.mrb[0].mxu0 %v658
      %v2324 = vpop.f32.mrb[0].mxu0
      %v2325 = vadd.f32 %v397, %v2324
      %v2326 = vpop.f32.mrb[0].mxu0
      %v2327 = vadd.f32 %v401, %v2326
      %v2328 = vpop.f32.mrb[0].mxu0
      %v2329 = vadd.f32 %v397, %v2328
      %v2330 = vpop.f32.mrb[0].mxu0
      %v2331 = vadd.f32 %v401, %v2330
      %2332 = vmatprep.mubr.bf16.mxu0 0
      %2333 = vmatmul.mubr.bf16.gmra.mrb[0].mxu0 %v661
      %v2334 = vpop.f32.mrb[0].mxu0
      %v2335 = vadd.f32 %v397, %v2334
      %v2336 = vpop.f32.mrb[0].mxu0
      %v2337 = vadd.f32 %v401, %v2336
      %v2338 = vpop.f32.mrb[0].mxu0
      %v2339 = vadd.f32 %v397, %v2338
      %v2340 = vpop.f32.mrb[0].mxu0
      %v2341 = vadd.f32 %v401, %v2340
      %2342 = vmatprep.mubr.bf16.mxu0 0
      %2343 = vmatmul.mubr.bf16.gmra.mrb[0].mxu0 %v664
      %v2344 = vpop.f32.mrb[0].mxu0
      %v2345 = vadd.f32 %v397, %v2344
      %v2346 = vpop.f32.mrb[0].mxu0
      %v2347 = vadd.f32 %v401, %v2346
      %v2348 = vpop.f32.mrb[0].mxu0
      %v2349 = vadd.f32 %v397, %v2348
      %v2350 = vpop.f32.mrb[0].mxu0
      %v2351 = vadd.f32 %v401, %v2350
      %2352 = vmatprep.mubr.bf16.mxu0 0
      %2353 = vmatmul.mubr.bf16.gmra.mrb[0].mxu0 %v667
      %v2354 = vpop.f32.mrb[0].mxu0
      %v2355 = vadd.f32 %v397, %v2354
      %v2356 = vpop.f32.mrb[0].mxu0
      %v2357 = vadd.f32 %v401, %v2356
      %v2358 = vpop.f32.mrb[0].mxu0
      %v2359 = vadd.f32 %v397, %v2358
      %v2360 = vpop.f32.mrb[0].mxu0
      %v2361 = vadd.f32 %v401, %v2360
      %2362 = vmatprep.mubr.bf16.mxu0 0
      %2363 = vmatmul.mubr.bf16.gmra.mrb[0].mxu0 %v670
      %v2364 = vpop.f32.mrb[0].mxu0
      %v2365 = vadd.f32 %v397, %v2364
      %v2366 = vpop.f32.mrb[0].mxu0
      %v2367 = vadd.f32 %v401, %v2366
      %v2368 = vpop.f32.mrb[0].mxu0
      %v2369 = vadd.f32 %v397, %v2368
      %v2370 = vpop.f32.mrb[0].mxu0
      %v2371 = vadd.f32 %v401, %v2370
      %2372 = vmatprep.mubr.bf16.mxu0 0
      %2373 = vmatmul.mubr.bf16.gmra.mrb[0].mxu0 %v673
      %v2374 = vpop.f32.mrb[0].mxu0
      %v2375 = vadd.f32 %v397, %v2374
      %v2376 = vpop.f32.mrb[0].mxu0
      %v2377 = vadd.f32 %v401, %v2376
      %v2378 = vpop.f32.mrb[0].mxu0
      %v2379 = vadd.f32 %v397, %v2378
      %v2380 = vpop.f32.mrb[0].mxu0
      %v2381 = vadd.f32 %v401, %v2380
      %2382 = vmatprep.mubr.bf16.mxu0 0
      %2383 = vmatmul.mubr.bf16.gmra.mrb[0].mxu0 %v676
      %v2384 = vpop.f32.mrb[0].mxu0
      %v2385 = vadd.f32 %v397, %v2384
      %v2386 = vpop.f32.mrb[0].mxu0
      %v2387 = vadd.f32 %v401, %v2386
      %v2388 = vpop.f32.mrb[0].mxu0
      %v2389 = vadd.f32 %v397, %v2388
      %v2390 = vpop.f32.mrb[0].mxu0
      %v2391 = vadd.f32 %v401, %v2390
      %2392 = vmatprep.mubr.bf16.mxu0 0
      %2393 = vmatmul.mubr.bf16.gmra.mrb[0].mxu0 %v679
      %v2394 = vpop.f32.mrb[0].mxu0
      %v2395 = vadd.f32 %v397, %v2394
      %v2396 = vpop.f32.mrb[0].mxu0
      %v2397 = vadd.f32 %v401, %v2396
      %v2398 = vpop.f32.mrb[0].mxu0
      %v2399 = vadd.f32 %v397, %v2398
      %v2400 = vpop.f32.mrb[0].mxu0
      %v2401 = vadd.f32 %v401, %v2400
      %2402 = vmatprep.mubr.bf16.mxu0 0
      %2403 = vmatmul.mubr.bf16.gmra.mrb[0].mxu0 %v682
      %v2404 = vpop.f32.mrb[0].mxu0
      %v2405 = vadd.f32 %v397, %v2404
      %v2406 = vpop.f32.mrb[0].mxu0
      %v2407 = vadd.f32 %v401, %v2406
      %v2408 = vpop.f32.mrb[0].mxu0
      %v2409 = vadd.f32 %v397, %v2408
      %v2410 = vpop.f32.mrb[0].mxu0
      %v2411 = vadd.f32 %v401, %v2410
      %2412 = vmatprep.mubr.bf16.mxu0 0
      %2413 = vmatmul.mubr.bf16.gmra.mrb[0].mxu0 %v685
      %v2414 = vpop.f32.mrb[0].mxu0
      %v2415 = vadd.f32 %v397, %v2414
      %v2416 = vpop.f32.mrb[0].mxu0
      %v2417 = vadd.f32 %v401, %v2416
      %v2418 = vpop.f32.mrb[0].mxu0
      %v2419 = vadd.f32 %v397, %v2418
      %v2420 = vpop.f32.mrb[0].mxu0
      %v2421 = vadd.f32 %v401, %v2420
      %2422 = vmatprep.mubr.bf16.mxu0 0
      %2423 = vmatmul.mubr.bf16.gmra.mrb[0].mxu0 %v688
      %v2424 = vpop.f32.mrb[0].mxu0
      %v2425 = vadd.f32 %v397, %v2424
      %v2426 = vpop.f32.mrb[0].mxu0
      %v2427 = vadd.f32 %v401, %v2426
      %v2428 = vpop.f32.mrb[0].mxu0
      %v2429 = vadd.f32 %v397, %v2428
      %v2430 = vpop.f32.mrb[0].mxu0
      %v2431 = vadd.f32 %v401, %v2430
      %2432 = vmatprep.mubr.bf16.mxu0 0
      %2433 = vmatmul.mubr.bf16.gmra.mrb[0].mxu0 %v691
      %v2434 = vpop.f32.mrb[0].mxu0
      %v2435 = vadd.f32 %v397, %v2434
      %v2436 = vpop.f32.mrb[0].mxu0
      %v2437 = vadd.f32 %v401, %v2436
      %v2438 = vpop.f32.mrb[0].mxu0
      %v2439 = vadd.f32 %v397, %v2438
      %v2440 = vpop.f32.mrb[0].mxu0
      %v2441 = vadd.f32 %v401, %v2440
      %2442 = vmatprep.mubr.bf16.mxu0 0
      %2443 = vmatmul.mubr.bf16.gmra.mrb[0].mxu0 %v694
      %v2444 = vpop.f32.mrb[0].mxu0
      %v2445 = vadd.f32 %v397, %v2444
      %v2446 = vpop.f32.mrb[0].mxu0
      %v2447 = vadd.f32 %v401, %v2446
      %v2448 = vpop.f32.mrb[0].mxu0
      %v2449 = vadd.f32 %v397, %v2448
      %v2450 = vpop.f32.mrb[0].mxu0
      %v2451 = vadd.f32 %v401, %v2450
      %2452 = vmatprep.mubr.bf16.mxu0 0
      %2453 = vmatmul.mubr.bf16.gmra.mrb[0].mxu0 %v697
      %v2454 = vpop.f32.mrb[0].mxu0
      %v2455 = vadd.f32 %v397, %v2454
      %v2456 = vpop.f32.mrb[0].mxu0
      %v2457 = vadd.f32 %v401, %v2456
      %v2458 = vpop.f32.mrb[0].mxu0
      %v2459 = vadd.f32 %v397, %v2458
      %v2460 = vpop.f32.mrb[0].mxu0
      %v2461 = vadd.f32 %v401, %v2460
      %2462 = vmatprep.mubr.bf16.mxu0 0
      %2463 = vmatmul.mubr.bf16.gmra.mrb[0].mxu0 %v700
      %v2464 = vpop.f32.mrb[0].mxu0
      %v2465 = vadd.f32 %v397, %v2464
      %v2466 = vpop.f32.mrb[0].mxu0
      %v2467 = vadd.f32 %v401, %v2466
      %v2468 = vpop.f32.mrb[0].mxu0
      %v2469 = vadd.f32 %v397, %v2468
      %v2470 = vpop.f32.mrb[0].mxu0
      %v2471 = vadd.f32 %v401, %v2470
      %2472 = vmatprep.mubr.bf16.mxu0 0
      %2473 = vmatmul.mubr.bf16.gmra.mrb[0].mxu0 %v703
      %v2474 = vpop.f32.mrb[0].mxu0
      %v2475 = vadd.f32 %v397, %v2474
      %v2476 = vpop.f32.mrb[0].mxu0
      %v2477 = vadd.f32 %v401, %v2476
      %v2478 = vpop.f32.mrb[0].mxu0
      %v2479 = vadd.f32 %v397, %v2478
      %v2480 = vpop.f32.mrb[0].mxu0
      %v2481 = vadd.f32 %v401, %v2480
      %2482 = vmatprep.mubr.bf16.mxu0 0
      %2483 = vmatmul.mubr.bf16.gmra.mrb[0].mxu0 %v706
      %v2484 = vpop.f32.mrb[0].mxu0
      %v2485 = vadd.f32 %v397, %v2484
      %v2486 = vpop.f32.mrb[0].mxu0
      %v2487 = vadd.f32 %v401, %v2486
      %v2488 = vpop.f32.mrb[0].mxu0
      %v2489 = vadd.f32 %v397, %v2488
      %v2490 = vpop.f32.mrb[0].mxu0
      %v2491 = vadd.f32 %v401, %v2490
      %2492 = vmatprep.mubr.bf16.mxu0 0
      %2493 = vmatmul.mubr.bf16.gmra.mrb[0].mxu0 %v709
      %v2494 = vpop.f32.mrb[0].mxu0
      %v2495 = vadd.f32 %v397, %v2494
      %v2496 = vpop.f32.mrb[0].mxu0
      %v2497 = vadd.f32 %v401, %v2496
      %v2498 = vpop.f32.mrb[0].mxu0
      %v2499 = vadd.f32 %v397, %v2498
      %v2500 = vpop.f32.mrb[0].mxu0
      %v2501 = vadd.f32 %v401, %v2500
      %2502 = vmatprep.mubr.bf16.mxu0 0
      %2503 = vmatmul.mubr.bf16.gmra.mrb[0].mxu0 %v712
      %v2504 = vpop.f32.mrb[0].mxu0
      %v2505 = vadd.f32 %v397, %v2504
      %v2506 = vpop.f32.mrb[0].mxu0
      %v2507 = vadd.f32 %v401, %v2506
      %v2508 = vpop.f32.mrb[0].mxu0
      %v2509 = vadd.f32 %v397, %v2508
      %v2510 = vpop.f32.mrb[0].mxu0
      %v2511 = vadd.f32 %v401, %v2510
      %2512 = vdwg.mxu0
      %v2513 = vmax.f32 %v783, 0.0
      %v2514 = vmax.f32 %v785, 0.0
      %v2515 = vmax.f32 %v1136, 0.0
      %v2516 = vmax.f32 %v1138, 0.0
      %v2517 = vmax.f32 %v1489, 0.0
      %v2518 = vmax.f32 %v1491, 0.0
      %v2519 = vmax.f32 %v1842, 0.0
      %v2520 = vmax.f32 %v1844, 0.0
      %v2521 = vmax.f32 %v2195, 0.0
      %v2522 = vmax.f32 %v2197, 0.0
      %v2523 = vmax.f32 %v787, 0.0
      %v2524 = vmax.f32 %v789, 0.0
      %v2525 = vmax.f32 %v1140, 0.0
      %v2526 = vmax.f32 %v1142, 0.0
      %v2527 = vmax.f32 %v1493, 0.0
      %v2528 = vmax.f32 %v1495, 0.0
      %v2529 = vmax.f32 %v1846, 0.0
      %v2530 = vmax.f32 %v1848, 0.0
      %v2531 = vmax.f32 %v2199, 0.0
      %v2532 = vmax.f32 %v2201, 0.0
      %v2533 = vmax.f32 %v793, 0.0
      %v2534 = vmax.f32 %v795, 0.0
      %v2535 = vmax.f32 %v1146, 0.0
      %v2536 = vmax.f32 %v1148, 0.0
      %v2537 = vmax.f32 %v1499, 0.0
      %v2538 = vmax.f32 %v1501, 0.0
      %v2539 = vmax.f32 %v1852, 0.0
      %v2540 = vmax.f32 %v1854, 0.0
      %v2541 = vmax.f32 %v2205, 0.0
      %v2542 = vmax.f32 %v2207, 0.0
      %v2543 = vmax.f32 %v797, 0.0
      %v2544 = vmax.f32 %v799, 0.0
      %v2545 = vmax.f32 %v1150, 0.0
      %v2546 = vmax.f32 %v1152, 0.0
      %v2547 = vmax.f32 %v1503, 0.0
      %v2548 = vmax.f32 %v1505, 0.0
      %v2549 = vmax.f32 %v1856, 0.0
      %v2550 = vmax.f32 %v1858, 0.0
      %v2551 = vmax.f32 %v2209, 0.0
      %v2552 = vmax.f32 %v2211, 0.0
      %v2553 = vmax.f32 %v803, 0.0
      %v2554 = vmax.f32 %v805, 0.0
      %v2555 = vmax.f32 %v1156, 0.0
      %v2556 = vmax.f32 %v1158, 0.0
      %v2557 = vmax.f32 %v1509, 0.0
      %v2558 = vmax.f32 %v1511, 0.0
      %v2559 = vmax.f32 %v1862, 0.0
      %v2560 = vmax.f32 %v1864, 0.0
      %v2561 = vmax.f32 %v2215, 0.0
      %v2562 = vmax.f32 %v2217, 0.0
      %v2563 = vmax.f32 %v807, 0.0
      %v2564 = vmax.f32 %v809, 0.0
      %v2565 = vmax.f32 %v1160, 0.0
      %v2566 = vmax.f32 %v1162, 0.0
      %v2567 = vmax.f32 %v1513, 0.0
      %v2568 = vmax.f32 %v1515, 0.0
      %v2569 = vmax.f32 %v1866, 0.0
      %v2570 = vmax.f32 %v1868, 0.0
      %v2571 = vmax.f32 %v2219, 0.0
      %v2572 = vmax.f32 %v2221, 0.0
      %v2573 = vmax.f32 %v813, 0.0
      %v2574 = vmax.f32 %v815, 0.0
      %v2575 = vmax.f32 %v1166, 0.0
      %v2576 = vmax.f32 %v1168, 0.0
      %v2577 = vmax.f32 %v1519, 0.0
      %v2578 = vmax.f32 %v1521, 0.0
      %v2579 = vmax.f32 %v1872, 0.0
      %v2580 = vmax.f32 %v1874, 0.0
      %v2581 = vmax.f32 %v2225, 0.0
      %v2582 = vmax.f32 %v2227, 0.0
      %v2583 = vmax.f32 %v817, 0.0
      %v2584 = vmax.f32 %v819, 0.0
      %v2585 = vmax.f32 %v1170, 0.0
      %v2586 = vmax.f32 %v1172, 0.0
      %v2587 = vmax.f32 %v1523, 0.0
      %v2588 = vmax.f32 %v1525, 0.0
      %v2589 = vmax.f32 %v1876, 0.0
      %v2590 = vmax.f32 %v1878, 0.0
      %v2591 = vmax.f32 %v2229, 0.0
      %v2592 = vmax.f32 %v2231, 0.0
      %v2593 = vmax.f32 %v823, 0.0
      %v2594 = vmax.f32 %v825, 0.0
      %v2595 = vmax.f32 %v1176, 0.0
      %v2596 = vmax.f32 %v1178, 0.0
      %v2597 = vmax.f32 %v1529, 0.0
      %v2598 = vmax.f32 %v1531, 0.0
      %v2599 = vmax.f32 %v1882, 0.0
      %v2600 = vmax.f32 %v1884, 0.0
      %v2601 = vmax.f32 %v2235, 0.0
      %v2602 = vmax.f32 %v2237, 0.0
      %v2603 = vmax.f32 %v827, 0.0
      %v2604 = vmax.f32 %v829, 0.0
      %v2605 = vmax.f32 %v1180, 0.0
      %v2606 = vmax.f32 %v1182, 0.0
      %v2607 = vmax.f32 %v1533, 0.0
      %v2608 = vmax.f32 %v1535, 0.0
      %v2609 = vmax.f32 %v1886, 0.0
      %v2610 = vmax.f32 %v1888, 0.0
      %v2611 = vmax.f32 %v2239, 0.0
      %v2612 = vmax.f32 %v2241, 0.0
      %v2613 = vmax.f32 %v833, 0.0
      %v2614 = vmax.f32 %v835, 0.0
      %v2615 = vmax.f32 %v1186, 0.0
      %v2616 = vmax.f32 %v1188, 0.0
      %v2617 = vmax.f32 %v1539, 0.0
      %v2618 = vmax.f32 %v1541, 0.0
      %v2619 = vmax.f32 %v1892, 0.0
      %v2620 = vmax.f32 %v1894, 0.0
      %v2621 = vmax.f32 %v2245, 0.0
      %v2622 = vmax.f32 %v2247, 0.0
      %v2623 = vmax.f32 %v837, 0.0
      %v2624 = vmax.f32 %v839, 0.0
      %v2625 = vmax.f32 %v1190, 0.0
      %v2626 = vmax.f32 %v1192, 0.0
      %v2627 = vmax.f32 %v1543, 0.0
      %v2628 = vmax.f32 %v1545, 0.0
      %v2629 = vmax.f32 %v1896, 0.0
      %v2630 = vmax.f32 %v1898, 0.0
      %v2631 = vmax.f32 %v2249, 0.0
      %v2632 = vmax.f32 %v2251, 0.0
      %v2633 = vmax.f32 %v843, 0.0
      %v2634 = vmax.f32 %v845, 0.0
      %v2635 = vmax.f32 %v1196, 0.0
      %v2636 = vmax.f32 %v1198, 0.0
      %v2637 = vmax.f32 %v1549, 0.0
      %v2638 = vmax.f32 %v1551, 0.0
      %v2639 = vmax.f32 %v1902, 0.0
      %v2640 = vmax.f32 %v1904, 0.0
      %v2641 = vmax.f32 %v2255, 0.0
      %v2642 = vmax.f32 %v2257, 0.0
      %v2643 = vmax.f32 %v847, 0.0
      %v2644 = vmax.f32 %v849, 0.0
      %v2645 = vmax.f32 %v1200, 0.0
      %v2646 = vmax.f32 %v1202, 0.0
      %v2647 = vmax.f32 %v1553, 0.0
      %v2648 = vmax.f32 %v1555, 0.0
      %v2649 = vmax.f32 %v1906, 0.0
      %v2650 = vmax.f32 %v1908, 0.0
      %v2651 = vmax.f32 %v2259, 0.0
      %v2652 = vmax.f32 %v2261, 0.0
      %v2653 = vmax.f32 %v853, 0.0
      %v2654 = vmax.f32 %v855, 0.0
      %v2655 = vmax.f32 %v1206, 0.0
      %v2656 = vmax.f32 %v1208, 0.0
      %v2657 = vmax.f32 %v1559, 0.0
      %v2658 = vmax.f32 %v1561, 0.0
      %v2659 = vmax.f32 %v1912, 0.0
      %v2660 = vmax.f32 %v1914, 0.0
      %v2661 = vmax.f32 %v2265, 0.0
      %v2662 = vmax.f32 %v2267, 0.0
      %v2663 = vmax.f32 %v857, 0.0
      %v2664 = vmax.f32 %v859, 0.0
      %v2665 = vmax.f32 %v1210, 0.0
      %v2666 = vmax.f32 %v1212, 0.0
      %v2667 = vmax.f32 %v1563, 0.0
      %v2668 = vmax.f32 %v1565, 0.0
      %v2669 = vmax.f32 %v1916, 0.0
      %v2670 = vmax.f32 %v1918, 0.0
      %v2671 = vmax.f32 %v2269, 0.0
      %v2672 = vmax.f32 %v2271, 0.0
      %v2673 = vmax.f32 %v863, 0.0
      %v2674 = vmax.f32 %v865, 0.0
      %v2675 = vmax.f32 %v1216, 0.0
      %v2676 = vmax.f32 %v1218, 0.0
      %v2677 = vmax.f32 %v1569, 0.0
      %v2678 = vmax.f32 %v1571, 0.0
      %v2679 = vmax.f32 %v1922, 0.0
      %v2680 = vmax.f32 %v1924, 0.0
      %v2681 = vmax.f32 %v2275, 0.0
      %v2682 = vmax.f32 %v2277, 0.0
      %v2683 = vmax.f32 %v867, 0.0
      %v2684 = vmax.f32 %v869, 0.0
      %v2685 = vmax.f32 %v1220, 0.0
      %v2686 = vmax.f32 %v1222, 0.0
      %v2687 = vmax.f32 %v1573, 0.0
      %v2688 = vmax.f32 %v1575, 0.0
      %v2689 = vmax.f32 %v1926, 0.0
      %v2690 = vmax.f32 %v1928, 0.0
      %v2691 = vmax.f32 %v2279, 0.0
      %v2692 = vmax.f32 %v2281, 0.0
      %v2693 = vmax.f32 %v873, 0.0
      %v2694 = vmax.f32 %v875, 0.0
      %v2695 = vmax.f32 %v1226, 0.0
      %v2696 = vmax.f32 %v1228, 0.0
      %v2697 = vmax.f32 %v1579, 0.0
      %v2698 = vmax.f32 %v1581, 0.0
      %v2699 = vmax.f32 %v1932, 0.0
      %v2700 = vmax.f32 %v1934, 0.0
      %v2701 = vmax.f32 %v2285, 0.0
      %v2702 = vmax.f32 %v2287, 0.0
      %v2703 = vmax.f32 %v877, 0.0
      %v2704 = vmax.f32 %v879, 0.0
      %v2705 = vmax.f32 %v1230, 0.0
      %v2706 = vmax.f32 %v1232, 0.0
      %v2707 = vmax.f32 %v1583, 0.0
      %v2708 = vmax.f32 %v1585, 0.0
      %v2709 = vmax.f32 %v1936, 0.0
      %v2710 = vmax.f32 %v1938, 0.0
      %v2711 = vmax.f32 %v2289, 0.0
      %v2712 = vmax.f32 %v2291, 0.0
      %v2713 = vmax.f32 %v883, 0.0
      %v2714 = vmax.f32 %v885, 0.0
      %v2715 = vmax.f32 %v1236, 0.0
      %v2716 = vmax.f32 %v1238, 0.0
      %v2717 = vmax.f32 %v1589, 0.0
      %v2718 = vmax.f32 %v1591, 0.0
      %v2719 = vmax.f32 %v1942, 0.0
      %v2720 = vmax.f32 %v1944, 0.0
      %v2721 = vmax.f32 %v2295, 0.0
      %v2722 = vmax.f32 %v2297, 0.0
      %v2723 = vmax.f32 %v887, 0.0
      %v2724 = vmax.f32 %v889, 0.0
      %v2725 = vmax.f32 %v1240, 0.0
      %v2726 = vmax.f32 %v1242, 0.0
      %v2727 = vmax.f32 %v1593, 0.0
      %v2728 = vmax.f32 %v1595, 0.0
      %v2729 = vmax.f32 %v1946, 0.0
      %v2730 = vmax.f32 %v1948, 0.0
      %v2731 = vmax.f32 %v2299, 0.0
      %v2732 = vmax.f32 %v2301, 0.0
      %v2733 = vmax.f32 %v893, 0.0
      %v2734 = vmax.f32 %v895, 0.0
      %v2735 = vmax.f32 %v1246, 0.0
      %v2736 = vmax.f32 %v1248, 0.0
      %v2737 = vmax.f32 %v1599, 0.0
      %v2738 = vmax.f32 %v1601, 0.0
      %v2739 = vmax.f32 %v1952, 0.0
      %v2740 = vmax.f32 %v1954, 0.0
      %v2741 = vmax.f32 %v2305, 0.0
      %v2742 = vmax.f32 %v2307, 0.0
      %v2743 = vmax.f32 %v897, 0.0
      %v2744 = vmax.f32 %v899, 0.0
      %v2745 = vmax.f32 %v1250, 0.0
      %v2746 = vmax.f32 %v1252, 0.0
      %v2747 = vmax.f32 %v1603, 0.0
      %v2748 = vmax.f32 %v1605, 0.0
      %v2749 = vmax.f32 %v1956, 0.0
      %v2750 = vmax.f32 %v1958, 0.0
      %v2751 = vmax.f32 %v2309, 0.0
      %v2752 = vmax.f32 %v2311, 0.0
      %v2753 = vmax.f32 %v903, 0.0
      %v2754 = vmax.f32 %v905, 0.0
      %v2755 = vmax.f32 %v1256, 0.0
      %v2756 = vmax.f32 %v1258, 0.0
      %v2757 = vmax.f32 %v1609, 0.0
      %v2758 = vmax.f32 %v1611, 0.0
      %v2759 = vmax.f32 %v1962, 0.0
      %v2760 = vmax.f32 %v1964, 0.0
      %v2761 = vmax.f32 %v2315, 0.0
      %v2762 = vmax.f32 %v2317, 0.0
      %v2763 = vmax.f32 %v907, 0.0
      %v2764 = vmax.f32 %v909, 0.0
      %v2765 = vmax.f32 %v1260, 0.0
      %v2766 = vmax.f32 %v1262, 0.0
      %v2767 = vmax.f32 %v1613, 0.0
      %v2768 = vmax.f32 %v1615, 0.0
      %v2769 = vmax.f32 %v1966, 0.0
      %v2770 = vmax.f32 %v1968, 0.0
      %v2771 = vmax.f32 %v2319, 0.0
      %v2772 = vmax.f32 %v2321, 0.0
      %v2773 = vmax.f32 %v913, 0.0
      %v2774 = vmax.f32 %v915, 0.0
      %v2775 = vmax.f32 %v1266, 0.0
      %v2776 = vmax.f32 %v1268, 0.0
      %v2777 = vmax.f32 %v1619, 0.0
      %v2778 = vmax.f32 %v1621, 0.0
      %v2779 = vmax.f32 %v1972, 0.0
      %v2780 = vmax.f32 %v1974, 0.0
      %v2781 = vmax.f32 %v2325, 0.0
      %v2782 = vmax.f32 %v2327, 0.0
      %v2783 = vmax.f32 %v917, 0.0
      %v2784 = vmax.f32 %v919, 0.0
      %v2785 = vmax.f32 %v1270, 0.0
      %v2786 = vmax.f32 %v1272, 0.0
      %v2787 = vmax.f32 %v1623, 0.0
      %v2788 = vmax.f32 %v1625, 0.0
      %v2789 = vmax.f32 %v1976, 0.0
      %v2790 = vmax.f32 %v1978, 0.0
      %v2791 = vmax.f32 %v2329, 0.0
      %v2792 = vmax.f32 %v2331, 0.0
      %v2793 = vmax.f32 %v923, 0.0
      %v2794 = vmax.f32 %v925, 0.0
      %v2795 = vmax.f32 %v1276, 0.0
      %v2796 = vmax.f32 %v1278, 0.0
      %v2797 = vmax.f32 %v1629, 0.0
      %v2798 = vmax.f32 %v1631, 0.0
      %v2799 = vmax.f32 %v1982, 0.0
      %v2800 = vmax.f32 %v1984, 0.0
      %v2801 = vmax.f32 %v2335, 0.0
      %v2802 = vmax.f32 %v2337, 0.0
      %v2803 = vmax.f32 %v927, 0.0
      %v2804 = vmax.f32 %v929, 0.0
      %v2805 = vmax.f32 %v1280, 0.0
      %v2806 = vmax.f32 %v1282, 0.0
      %v2807 = vmax.f32 %v1633, 0.0
      %v2808 = vmax.f32 %v1635, 0.0
      %v2809 = vmax.f32 %v1986, 0.0
      %v2810 = vmax.f32 %v1988, 0.0
      %v2811 = vmax.f32 %v2339, 0.0
      %v2812 = vmax.f32 %v2341, 0.0
      %v2813 = vmax.f32 %v933, 0.0
      %v2814 = vmax.f32 %v935, 0.0
      %v2815 = vmax.f32 %v1286, 0.0
      %v2816 = vmax.f32 %v1288, 0.0
      %v2817 = vmax.f32 %v1639, 0.0
      %v2818 = vmax.f32 %v1641, 0.0
      %v2819 = vmax.f32 %v1992, 0.0
      %v2820 = vmax.f32 %v1994, 0.0
      %v2821 = vmax.f32 %v2345, 0.0
      %v2822 = vmax.f32 %v2347, 0.0
      %v2823 = vmax.f32 %v937, 0.0
      %v2824 = vmax.f32 %v939, 0.0
      %v2825 = vmax.f32 %v1290, 0.0
      %v2826 = vmax.f32 %v1292, 0.0
      %v2827 = vmax.f32 %v1643, 0.0
      %v2828 = vmax.f32 %v1645, 0.0
      %v2829 = vmax.f32 %v1996, 0.0
      %v2830 = vmax.f32 %v1998, 0.0
      %v2831 = vmax.f32 %v2349, 0.0
      %v2832 = vmax.f32 %v2351, 0.0
      %v2833 = vmax.f32 %v943, 0.0
      %v2834 = vmax.f32 %v945, 0.0
      %v2835 = vmax.f32 %v1296, 0.0
      %v2836 = vmax.f32 %v1298, 0.0
      %v2837 = vmax.f32 %v1649, 0.0
      %v2838 = vmax.f32 %v1651, 0.0
      %v2839 = vmax.f32 %v2002, 0.0
      %v2840 = vmax.f32 %v2004, 0.0
      %v2841 = vmax.f32 %v2355, 0.0
      %v2842 = vmax.f32 %v2357, 0.0
      %v2843 = vmax.f32 %v947, 0.0
      %v2844 = vmax.f32 %v949, 0.0
      %v2845 = vmax.f32 %v1300, 0.0
      %v2846 = vmax.f32 %v1302, 0.0
      %v2847 = vmax.f32 %v1653, 0.0
      %v2848 = vmax.f32 %v1655, 0.0
      %v2849 = vmax.f32 %v2006, 0.0
      %v2850 = vmax.f32 %v2008, 0.0
      %v2851 = vmax.f32 %v2359, 0.0
      %v2852 = vmax.f32 %v2361, 0.0
      %v2853 = vmax.f32 %v953, 0.0
      %v2854 = vmax.f32 %v955, 0.0
      %v2855 = vmax.f32 %v1306, 0.0
      %v2856 = vmax.f32 %v1308, 0.0
      %v2857 = vmax.f32 %v1659, 0.0
      %v2858 = vmax.f32 %v1661, 0.0
      %v2859 = vmax.f32 %v2012, 0.0
      %v2860 = vmax.f32 %v2014, 0.0
      %v2861 = vmax.f32 %v2365, 0.0
      %v2862 = vmax.f32 %v2367, 0.0
      %v2863 = vmax.f32 %v957, 0.0
      %v2864 = vmax.f32 %v959, 0.0
      %v2865 = vmax.f32 %v1310, 0.0
      %v2866 = vmax.f32 %v1312, 0.0
      %v2867 = vmax.f32 %v1663, 0.0
      %v2868 = vmax.f32 %v1665, 0.0
      %v2869 = vmax.f32 %v2016, 0.0
      %v2870 = vmax.f32 %v2018, 0.0
      %v2871 = vmax.f32 %v2369, 0.0
      %v2872 = vmax.f32 %v2371, 0.0
      %v2873 = vmax.f32 %v963, 0.0
      %v2874 = vmax.f32 %v965, 0.0
      %v2875 = vmax.f32 %v1316, 0.0
      %v2876 = vmax.f32 %v1318, 0.0
      %v2877 = vmax.f32 %v1669, 0.0
      %v2878 = vmax.f32 %v1671, 0.0
      %v2879 = vmax.f32 %v2022, 0.0
      %v2880 = vmax.f32 %v2024, 0.0
      %v2881 = vmax.f32 %v2375, 0.0
      %v2882 = vmax.f32 %v2377, 0.0
      %v2883 = vmax.f32 %v967, 0.0
      %v2884 = vmax.f32 %v969, 0.0
      %v2885 = vmax.f32 %v1320, 0.0
      %v2886 = vmax.f32 %v1322, 0.0
      %v2887 = vmax.f32 %v1673, 0.0
      %v2888 = vmax.f32 %v1675, 0.0
      %v2889 = vmax.f32 %v2026, 0.0
      %v2890 = vmax.f32 %v2028, 0.0
      %v2891 = vmax.f32 %v2379, 0.0
      %v2892 = vmax.f32 %v2381, 0.0
      %v2893 = vmax.f32 %v973, 0.0
      %v2894 = vmax.f32 %v975, 0.0
      %v2895 = vmax.f32 %v1326, 0.0
      %v2896 = vmax.f32 %v1328, 0.0
      %v2897 = vmax.f32 %v1679, 0.0
      %v2898 = vmax.f32 %v1681, 0.0
      %v2899 = vmax.f32 %v2032, 0.0
      %v2900 = vmax.f32 %v2034, 0.0
      %v2901 = vmax.f32 %v2385, 0.0
      %v2902 = vmax.f32 %v2387, 0.0
      %v2903 = vmax.f32 %v977, 0.0
      %v2904 = vmax.f32 %v979, 0.0
      %v2905 = vmax.f32 %v1330, 0.0
      %v2906 = vmax.f32 %v1332, 0.0
      %v2907 = vmax.f32 %v1683, 0.0
      %v2908 = vmax.f32 %v1685, 0.0
      %v2909 = vmax.f32 %v2036, 0.0
      %v2910 = vmax.f32 %v2038, 0.0
      %v2911 = vmax.f32 %v2389, 0.0
      %v2912 = vmax.f32 %v2391, 0.0
      %v2913 = vmax.f32 %v983, 0.0
      %v2914 = vmax.f32 %v985, 0.0
      %v2915 = vmax.f32 %v1336, 0.0
      %v2916 = vmax.f32 %v1338, 0.0
      %v2917 = vmax.f32 %v1689, 0.0
      %v2918 = vmax.f32 %v1691, 0.0
      %v2919 = vmax.f32 %v2042, 0.0
      %v2920 = vmax.f32 %v2044, 0.0
      %v2921 = vmax.f32 %v2395, 0.0
      %v2922 = vmax.f32 %v2397, 0.0
      %v2923 = vmax.f32 %v987, 0.0
      %v2924 = vmax.f32 %v989, 0.0
      %v2925 = vmax.f32 %v1340, 0.0
      %v2926 = vmax.f32 %v1342, 0.0
      %v2927 = vmax.f32 %v1693, 0.0
      %v2928 = vmax.f32 %v1695, 0.0
      %v2929 = vmax.f32 %v2046, 0.0
      %v2930 = vmax.f32 %v2048, 0.0
      %v2931 = vmax.f32 %v2399, 0.0
      %v2932 = vmax.f32 %v2401, 0.0
      %v2933 = vmax.f32 %v993, 0.0
      %v2934 = vmax.f32 %v995, 0.0
      %v2935 = vmax.f32 %v1346, 0.0
      %v2936 = vmax.f32 %v1348, 0.0
      %v2937 = vmax.f32 %v1699, 0.0
      %v2938 = vmax.f32 %v1701, 0.0
      %v2939 = vmax.f32 %v2052, 0.0
      %v2940 = vmax.f32 %v2054, 0.0
      %v2941 = vmax.f32 %v2405, 0.0
      %v2942 = vmax.f32 %v2407, 0.0
      %v2943 = vmax.f32 %v997, 0.0
      %v2944 = vmax.f32 %v999, 0.0
      %v2945 = vmax.f32 %v1350, 0.0
      %v2946 = vmax.f32 %v1352, 0.0
      %v2947 = vmax.f32 %v1703, 0.0
      %v2948 = vmax.f32 %v1705, 0.0
      %v2949 = vmax.f32 %v2056, 0.0
      %v2950 = vmax.f32 %v2058, 0.0
      %v2951 = vmax.f32 %v2409, 0.0
      %v2952 = vmax.f32 %v2411, 0.0
      %v2953 = vmax.f32 %v1003, 0.0
      %v2954 = vmax.f32 %v1005, 0.0
      %v2955 = vmax.f32 %v1356, 0.0
      %v2956 = vmax.f32 %v1358, 0.0
      %v2957 = vmax.f32 %v1709, 0.0
      %v2958 = vmax.f32 %v1711, 0.0
      %v2959 = vmax.f32 %v2062, 0.0
      %v2960 = vmax.f32 %v2064, 0.0
      %v2961 = vmax.f32 %v2415, 0.0
      %v2962 = vmax.f32 %v2417, 0.0
      %v2963 = vmax.f32 %v1007, 0.0
      %v2964 = vmax.f32 %v1009, 0.0
      %v2965 = vmax.f32 %v1360, 0.0
      %v2966 = vmax.f32 %v1362, 0.0
      %v2967 = vmax.f32 %v1713, 0.0
      %v2968 = vmax.f32 %v1715, 0.0
      %v2969 = vmax.f32 %v2066, 0.0
      %v2970 = vmax.f32 %v2068, 0.0
      %v2971 = vmax.f32 %v2419, 0.0
      %v2972 = vmax.f32 %v2421, 0.0
      %v2973 = vmax.f32 %v1013, 0.0
      %v2974 = vmax.f32 %v1015, 0.0
      %v2975 = vmax.f32 %v1366, 0.0
      %v2976 = vmax.f32 %v1368, 0.0
      %v2977 = vmax.f32 %v1719, 0.0
      %v2978 = vmax.f32 %v1721, 0.0
      %v2979 = vmax.f32 %v2072, 0.0
      %v2980 = vmax.f32 %v2074, 0.0
      %v2981 = vmax.f32 %v2425, 0.0
      %v2982 = vmax.f32 %v2427, 0.0
      %v2983 = vmax.f32 %v1017, 0.0
      %v2984 = vmax.f32 %v1019, 0.0
      %v2985 = vmax.f32 %v1370, 0.0
      %v2986 = vmax.f32 %v1372, 0.0
      %v2987 = vmax.f32 %v1723, 0.0
      %v2988 = vmax.f32 %v1725, 0.0
      %v2989 = vmax.f32 %v2076, 0.0
      %v2990 = vmax.f32 %v2078, 0.0
      %v2991 = vmax.f32 %v2429, 0.0
      %v2992 = vmax.f32 %v2431, 0.0
      %v2993 = vmax.f32 %v1023, 0.0
      %v2994 = vmax.f32 %v1025, 0.0
      %v2995 = vmax.f32 %v1376, 0.0
      %v2996 = vmax.f32 %v1378, 0.0
      %v2997 = vmax.f32 %v1729, 0.0
      %v2998 = vmax.f32 %v1731, 0.0
      %v2999 = vmax.f32 %v2082, 0.0
      %v3000 = vmax.f32 %v2084, 0.0
      %v3001 = vmax.f32 %v2435, 0.0
      %v3002 = vmax.f32 %v2437, 0.0
      %v3003 = vmax.f32 %v1027, 0.0
      %v3004 = vmax.f32 %v1029, 0.0
      %v3005 = vmax.f32 %v1380, 0.0
      %v3006 = vmax.f32 %v1382, 0.0
      %v3007 = vmax.f32 %v1733, 0.0
      %v3008 = vmax.f32 %v1735, 0.0
      %v3009 = vmax.f32 %v2086, 0.0
      %v3010 = vmax.f32 %v2088, 0.0
      %v3011 = vmax.f32 %v2439, 0.0
      %v3012 = vmax.f32 %v2441, 0.0
      %v3013 = vmax.f32 %v1033, 0.0
      %v3014 = vmax.f32 %v1035, 0.0
      %v3015 = vmax.f32 %v1386, 0.0
      %v3016 = vmax.f32 %v1388, 0.0
      %v3017 = vmax.f32 %v1739, 0.0
      %v3018 = vmax.f32 %v1741, 0.0
      %v3019 = vmax.f32 %v2092, 0.0
      %v3020 = vmax.f32 %v2094, 0.0
      %v3021 = vmax.f32 %v2445, 0.0
      %v3022 = vmax.f32 %v2447, 0.0
      %v3023 = vmax.f32 %v1037, 0.0
      %v3024 = vmax.f32 %v1039, 0.0
      %v3025 = vmax.f32 %v1390, 0.0
      %v3026 = vmax.f32 %v1392, 0.0
      %v3027 = vmax.f32 %v1743, 0.0
      %v3028 = vmax.f32 %v1745, 0.0
      %v3029 = vmax.f32 %v2096, 0.0
      %v3030 = vmax.f32 %v2098, 0.0
      %v3031 = vmax.f32 %v2449, 0.0
      %v3032 = vmax.f32 %v2451, 0.0
      %v3033 = vmax.f32 %v1043, 0.0
      %v3034 = vmax.f32 %v1045, 0.0
      %v3035 = vmax.f32 %v1396, 0.0
      %v3036 = vmax.f32 %v1398, 0.0
      %v3037 = vmax.f32 %v1749, 0.0
      %v3038 = vmax.f32 %v1751, 0.0
      %v3039 = vmax.f32 %v2102, 0.0
      %v3040 = vmax.f32 %v2104, 0.0
      %v3041 = vmax.f32 %v2455, 0.0
      %v3042 = vmax.f32 %v2457, 0.0
      %v3043 = vmax.f32 %v1047, 0.0
      %v3044 = vmax.f32 %v1049, 0.0
      %v3045 = vmax.f32 %v1400, 0.0
      %v3046 = vmax.f32 %v1402, 0.0
      %v3047 = vmax.f32 %v1753, 0.0
      %v3048 = vmax.f32 %v1755, 0.0
      %v3049 = vmax.f32 %v2106, 0.0
      %v3050 = vmax.f32 %v2108, 0.0
      %v3051 = vmax.f32 %v2459, 0.0
      %v3052 = vmax.f32 %v2461, 0.0
      %v3053 = vmax.f32 %v1053, 0.0
      %v3054 = vmax.f32 %v1055, 0.0
      %v3055 = vmax.f32 %v1406, 0.0
      %v3056 = vmax.f32 %v1408, 0.0
      %v3057 = vmax.f32 %v1759, 0.0
      %v3058 = vmax.f32 %v1761, 0.0
      %v3059 = vmax.f32 %v2112, 0.0
      %v3060 = vmax.f32 %v2114, 0.0
      %v3061 = vmax.f32 %v2465, 0.0
      %v3062 = vmax.f32 %v2467, 0.0
      %v3063 = vmax.f32 %v1057, 0.0
      %v3064 = vmax.f32 %v1059, 0.0
      %v3065 = vmax.f32 %v1410, 0.0
      %v3066 = vmax.f32 %v1412, 0.0
      %v3067 = vmax.f32 %v1763, 0.0
      %v3068 = vmax.f32 %v1765, 0.0
      %v3069 = vmax.f32 %v2116, 0.0
      %v3070 = vmax.f32 %v2118, 0.0
      %v3071 = vmax.f32 %v2469, 0.0
      %v3072 = vmax.f32 %v2471, 0.0
      %v3073 = vmax.f32 %v1063, 0.0
      %v3074 = vmax.f32 %v1065, 0.0
      %v3075 = vmax.f32 %v1416, 0.0
      %v3076 = vmax.f32 %v1418, 0.0
      %v3077 = vmax.f32 %v1769, 0.0
      %v3078 = vmax.f32 %v1771, 0.0
      %v3079 = vmax.f32 %v2122, 0.0
      %v3080 = vmax.f32 %v2124, 0.0
      %v3081 = vmax.f32 %v2475, 0.0
      %v3082 = vmax.f32 %v2477, 0.0
      %v3083 = vmax.f32 %v1067, 0.0
      %v3084 = vmax.f32 %v1069, 0.0
      %v3085 = vmax.f32 %v1420, 0.0
      %v3086 = vmax.f32 %v1422, 0.0
      %v3087 = vmax.f32 %v1773, 0.0
      %v3088 = vmax.f32 %v1775, 0.0
      %v3089 = vmax.f32 %v2126, 0.0
      %v3090 = vmax.f32 %v2128, 0.0
      %v3091 = vmax.f32 %v2479, 0.0
      %v3092 = vmax.f32 %v2481, 0.0
      %v3093 = vmax.f32 %v1073, 0.0
      %v3094 = vmax.f32 %v1075, 0.0
      %v3095 = vmax.f32 %v1426, 0.0
      %v3096 = vmax.f32 %v1428, 0.0
      %v3097 = vmax.f32 %v1779, 0.0
      %v3098 = vmax.f32 %v1781, 0.0
      %v3099 = vmax.f32 %v2132, 0.0
      %v3100 = vmax.f32 %v2134, 0.0
      %v3101 = vmax.f32 %v2485, 0.0
      %v3102 = vmax.f32 %v2487, 0.0
      %v3103 = vmax.f32 %v1077, 0.0
      %v3104 = vmax.f32 %v1079, 0.0
      %v3105 = vmax.f32 %v1430, 0.0
      %v3106 = vmax.f32 %v1432, 0.0
      %v3107 = vmax.f32 %v1783, 0.0
      %v3108 = vmax.f32 %v1785, 0.0
      %v3109 = vmax.f32 %v2136, 0.0
      %v3110 = vmax.f32 %v2138, 0.0
      %v3111 = vmax.f32 %v2489, 0.0
      %v3112 = vmax.f32 %v2491, 0.0
      %v3113 = vmax.f32 %v1083, 0.0
      %v3114 = vmax.f32 %v1085, 0.0
      %v3115 = vmax.f32 %v1436, 0.0
      %v3116 = vmax.f32 %v1438, 0.0
      %v3117 = vmax.f32 %v1789, 0.0
      %v3118 = vmax.f32 %v1791, 0.0
      %v3119 = vmax.f32 %v2142, 0.0
      %v3120 = vmax.f32 %v2144, 0.0
      %v3121 = vmax.f32 %v2495, 0.0
      %v3122 = vmax.f32 %v2497, 0.0
      %v3123 = vmax.f32 %v1087, 0.0
      %v3124 = vmax.f32 %v1089, 0.0
      %v3125 = vmax.f32 %v1440, 0.0
      %v3126 = vmax.f32 %v1442, 0.0
      %v3127 = vmax.f32 %v1793, 0.0
      %v3128 = vmax.f32 %v1795, 0.0
      %v3129 = vmax.f32 %v2146, 0.0
      %v3130 = vmax.f32 %v2148, 0.0
      %v3131 = vmax.f32 %v2499, 0.0
      %v3132 = vmax.f32 %v2501, 0.0
      %v3133 = vmax.f32 %v1093, 0.0
      %v3134 = vmax.f32 %v1095, 0.0
      %v3135 = vmax.f32 %v1446, 0.0
      %v3136 = vmax.f32 %v1448, 0.0
      %v3137 = vmax.f32 %v1799, 0.0
      %v3138 = vmax.f32 %v1801, 0.0
      %v3139 = vmax.f32 %v2152, 0.0
      %v3140 = vmax.f32 %v2154, 0.0
      %v3141 = vmax.f32 %v2505, 0.0
      %v3142 = vmax.f32 %v2507, 0.0
      %v3143 = vmax.f32 %v1097, 0.0
      %v3144 = vmax.f32 %v1099, 0.0
      %v3145 = vmax.f32 %v1450, 0.0
      %v3146 = vmax.f32 %v1452, 0.0
      %v3147 = vmax.f32 %v1803, 0.0
      %v3148 = vmax.f32 %v1805, 0.0
      %v3149 = vmax.f32 %v2156, 0.0
      %v3150 = vmax.f32 %v2158, 0.0
      %v3151 = vmax.f32 %v2509, 0.0
      %v3152 = vmax.f32 %v2511, 0.0
      %v3153 = vld [vmem:[#allocation2] sm:$0xff]
      %v3154 = vld [vmem:[#allocation2 + $0x8] sm:$0xff]
      %v3155 = vld [vmem:[#allocation2 + $0x10] sm:$0xff]
      %v3156 = vld [vmem:[#allocation2 + $0x18] sm:$0xff]
      %v3157 = vld [vmem:[#allocation2 + $0x20] sm:$0xff]
      %v3158 = vld [vmem:[#allocation2 + $0x28] sm:$0xff]
      %v3159 = vld [vmem:[#allocation2 + $0x30] sm:$0xff]
      %v3160 = vld [vmem:[#allocation2 + $0x38] sm:$0xff]
      %v3161 = vld [vmem:[#allocation2 + $0x40] sm:$0xff]
      %v3162 = vld [vmem:[#allocation2 + $0x48] sm:$0xff]
      %v3163 = vld [vmem:[%s5] sm:$0xff]
      %v3164 = vld [vmem:[%s5 + $0x8] sm:$0xff]
      %v3165 = vpack.c.bf16 %v2523, %v2513
      %v3166 = vpack.c.bf16 %v2524, %v2514
      %v3167 = vpack.c.bf16 %v2525, %v2515
      %v3168 = vpack.c.bf16 %v2526, %v2516
      %v3169 = vpack.c.bf16 %v2527, %v2517
      %v3170 = vpack.c.bf16 %v2528, %v2518
      %v3171 = vpack.c.bf16 %v2529, %v2519
      %v3172 = vpack.c.bf16 %v2530, %v2520
      %v3173 = vpack.c.bf16 %v2531, %v2521
      %v3174 = vpack.c.bf16 %v2532, %v2522
      %v3175 = vpack.c.bf16 %v2543, %v2533
      %v3176 = vpack.c.bf16 %v2544, %v2534
      %v3177 = vpack.c.bf16 %v2545, %v2535
      %v3178 = vpack.c.bf16 %v2546, %v2536
      %v3179 = vpack.c.bf16 %v2547, %v2537
      %v3180 = vpack.c.bf16 %v2548, %v2538
      %v3181 = vpack.c.bf16 %v2549, %v2539
      %v3182 = vpack.c.bf16 %v2550, %v2540
      %v3183 = vpack.c.bf16 %v2551, %v2541
      %v3184 = vpack.c.bf16 %v2552, %v2542
      %v3185 = vpack.c.bf16 %v2563, %v2553
      %v3186 = vpack.c.bf16 %v2564, %v2554
      %v3187 = vpack.c.bf16 %v2565, %v2555
      %v3188 = vpack.c.bf16 %v2566, %v2556
      %v3189 = vpack.c.bf16 %v2567, %v2557
      %v3190 = vpack.c.bf16 %v2568, %v2558
      %v3191 = vpack.c.bf16 %v2569, %v2559
      %v3192 = vpack.c.bf16 %v2570, %v2560
      %v3193 = vpack.c.bf16 %v2571, %v2561
      %v3194 = vpack.c.bf16 %v2572, %v2562
      %v3195 = vpack.c.bf16 %v2583, %v2573
      %v3196 = vpack.c.bf16 %v2584, %v2574
      %v3197 = vpack.c.bf16 %v2585, %v2575
      %v3198 = vpack.c.bf16 %v2586, %v2576
      %v3199 = vpack.c.bf16 %v2587, %v2577
      %v3200 = vpack.c.bf16 %v2588, %v2578
      %v3201 = vpack.c.bf16 %v2589, %v2579
      %v3202 = vpack.c.bf16 %v2590, %v2580
      %v3203 = vpack.c.bf16 %v2591, %v2581
      %v3204 = vpack.c.bf16 %v2592, %v2582
      %v3205 = vpack.c.bf16 %v2603, %v2593
      %v3206 = vpack.c.bf16 %v2604, %v2594
      %v3207 = vpack.c.bf16 %v2605, %v2595
      %v3208 = vpack.c.bf16 %v2606, %v2596
      %v3209 = vpack.c.bf16 %v2607, %v2597
      %v3210 = vpack.c.bf16 %v2608, %v2598
      %v3211 = vpack.c.bf16 %v2609, %v2599
      %v3212 = vpack.c.bf16 %v2610, %v2600
      %v3213 = vpack.c.bf16 %v2611, %v2601
      %v3214 = vpack.c.bf16 %v2612, %v2602
      %v3215 = vpack.c.bf16 %v2623, %v2613
      %v3216 = vpack.c.bf16 %v2624, %v2614
      %v3217 = vpack.c.bf16 %v2625, %v2615
      %v3218 = vpack.c.bf16 %v2626, %v2616
      %v3219 = vpack.c.bf16 %v2627, %v2617
      %v3220 = vpack.c.bf16 %v2628, %v2618
      %v3221 = vpack.c.bf16 %v2629, %v2619
      %v3222 = vpack.c.bf16 %v2630, %v2620
      %v3223 = vpack.c.bf16 %v2631, %v2621
      %v3224 = vpack.c.bf16 %v2632, %v2622
      %v3225 = vpack.c.bf16 %v2643, %v2633
      %v3226 = vpack.c.bf16 %v2644, %v2634
      %v3227 = vpack.c.bf16 %v2645, %v2635
      %v3228 = vpack.c.bf16 %v2646, %v2636
      %v3229 = vpack.c.bf16 %v2647, %v2637
      %v3230 = vpack.c.bf16 %v2648, %v2638
      %v3231 = vpack.c.bf16 %v2649, %v2639
      %v3232 = vpack.c.bf16 %v2650, %v2640
      %v3233 = vpack.c.bf16 %v2651, %v2641
      %v3234 = vpack.c.bf16 %v2652, %v2642
      %v3235 = vpack.c.bf16 %v2663, %v2653
      %v3236 = vpack.c.bf16 %v2664, %v2654
      %v3237 = vpack.c.bf16 %v2665, %v2655
      %v3238 = vpack.c.bf16 %v2666, %v2656
      %v3239 = vpack.c.bf16 %v2667, %v2657
      %v3240 = vpack.c.bf16 %v2668, %v2658
      %v3241 = vpack.c.bf16 %v2669, %v2659
      %v3242 = vpack.c.bf16 %v2670, %v2660
      %v3243 = vpack.c.bf16 %v2671, %v2661
      %v3244 = vpack.c.bf16 %v2672, %v2662
      %v3245 = vpack.c.bf16 %v2683, %v2673
      %v3246 = vpack.c.bf16 %v2684, %v2674
      %v3247 = vpack.c.bf16 %v2685, %v2675
      %v3248 = vpack.c.bf16 %v2686, %v2676
      %v3249 = vpack.c.bf16 %v2687, %v2677
      %v3250 = vpack.c.bf16 %v2688, %v2678
      %v3251 = vpack.c.bf16 %v2689, %v2679
      %v3252 = vpack.c.bf16 %v2690, %v2680
      %v3253 = vpack.c.bf16 %v2691, %v2681
      %v3254 = vpack.c.bf16 %v2692, %v2682
      %v3255 = vpack.c.bf16 %v2703, %v2693
      %v3256 = vpack.c.bf16 %v2704, %v2694
      %v3257 = vpack.c.bf16 %v2705, %v2695
      %v3258 = vpack.c.bf16 %v2706, %v2696
      %v3259 = vpack.c.bf16 %v2707, %v2697
      %v3260 = vpack.c.bf16 %v2708, %v2698
      %v3261 = vpack.c.bf16 %v2709, %v2699
      %v3262 = vpack.c.bf16 %v2710, %v2700
      %v3263 = vpack.c.bf16 %v2711, %v2701
      %v3264 = vpack.c.bf16 %v2712, %v2702
      %v3265 = vpack.c.bf16 %v2723, %v2713
      %v3266 = vpack.c.bf16 %v2724, %v2714
      %v3267 = vpack.c.bf16 %v2725, %v2715
      %v3268 = vpack.c.bf16 %v2726, %v2716
      %v3269 = vpack.c.bf16 %v2727, %v2717
      %v3270 = vpack.c.bf16 %v2728, %v2718
      %v3271 = vpack.c.bf16 %v2729, %v2719
      %v3272 = vpack.c.bf16 %v2730, %v2720
      %v3273 = vpack.c.bf16 %v2731, %v2721
      %v3274 = vpack.c.bf16 %v2732, %v2722
      %v3275 = vpack.c.bf16 %v2743, %v2733
      %v3276 = vpack.c.bf16 %v2744, %v2734
      %v3277 = vpack.c.bf16 %v2745, %v2735
      %v3278 = vpack.c.bf16 %v2746, %v2736
      %v3279 = vpack.c.bf16 %v2747, %v2737
      %v3280 = vpack.c.bf16 %v2748, %v2738
      %v3281 = vpack.c.bf16 %v2749, %v2739
      %v3282 = vpack.c.bf16 %v2750, %v2740
      %v3283 = vpack.c.bf16 %v2751, %v2741
      %v3284 = vpack.c.bf16 %v2752, %v2742
      %v3285 = vpack.c.bf16 %v2763, %v2753
      %v3286 = vpack.c.bf16 %v2764, %v2754
      %v3287 = vpack.c.bf16 %v2765, %v2755
      %v3288 = vpack.c.bf16 %v2766, %v2756
      %v3289 = vpack.c.bf16 %v2767, %v2757
      %v3290 = vpack.c.bf16 %v2768, %v2758
      %v3291 = vpack.c.bf16 %v2769, %v2759
      %v3292 = vpack.c.bf16 %v2770, %v2760
      %v3293 = vpack.c.bf16 %v2771, %v2761
      %v3294 = vpack.c.bf16 %v2772, %v2762
      %v3295 = vpack.c.bf16 %v2783, %v2773
      %v3296 = vpack.c.bf16 %v2784, %v2774
      %v3297 = vpack.c.bf16 %v2785, %v2775
      %v3298 = vpack.c.bf16 %v2786, %v2776
      %v3299 = vpack.c.bf16 %v2787, %v2777
      %v3300 = vpack.c.bf16 %v2788, %v2778
      %v3301 = vpack.c.bf16 %v2789, %v2779
      %v3302 = vpack.c.bf16 %v2790, %v2780
      %v3303 = vpack.c.bf16 %v2791, %v2781
      %v3304 = vpack.c.bf16 %v2792, %v2782
      %v3305 = vpack.c.bf16 %v2803, %v2793
      %v3306 = vpack.c.bf16 %v2804, %v2794
      %v3307 = vpack.c.bf16 %v2805, %v2795
      %v3308 = vpack.c.bf16 %v2806, %v2796
      %v3309 = vpack.c.bf16 %v2807, %v2797
      %v3310 = vpack.c.bf16 %v2808, %v2798
      %v3311 = vpack.c.bf16 %v2809, %v2799
      %v3312 = vpack.c.bf16 %v2810, %v2800
      %v3313 = vpack.c.bf16 %v2811, %v2801
      %v3314 = vpack.c.bf16 %v2812, %v2802
      %v3315 = vpack.c.bf16 %v2823, %v2813
      %v3316 = vpack.c.bf16 %v2824, %v2814
      %v3317 = vpack.c.bf16 %v2825, %v2815
      %v3318 = vpack.c.bf16 %v2826, %v2816
      %v3319 = vpack.c.bf16 %v2827, %v2817
      %v3320 = vpack.c.bf16 %v2828, %v2818
      %v3321 = vpack.c.bf16 %v2829, %v2819
      %v3322 = vpack.c.bf16 %v2830, %v2820
      %v3323 = vpack.c.bf16 %v2831, %v2821
      %v3324 = vpack.c.bf16 %v2832, %v2822
      %v3325 = vpack.c.bf16 %v2843, %v2833
      %v3326 = vpack.c.bf16 %v2844, %v2834
      %v3327 = vpack.c.bf16 %v2845, %v2835
      %v3328 = vpack.c.bf16 %v2846, %v2836
      %v3329 = vpack.c.bf16 %v2847, %v2837
      %v3330 = vpack.c.bf16 %v2848, %v2838
      %v3331 = vpack.c.bf16 %v2849, %v2839
      %v3332 = vpack.c.bf16 %v2850, %v2840
      %v3333 = vpack.c.bf16 %v2851, %v2841
      %v3334 = vpack.c.bf16 %v2852, %v2842
      %v3335 = vpack.c.bf16 %v2863, %v2853
      %v3336 = vpack.c.bf16 %v2864, %v2854
      %v3337 = vpack.c.bf16 %v2865, %v2855
      %v3338 = vpack.c.bf16 %v2866, %v2856
      %v3339 = vpack.c.bf16 %v2867, %v2857
      %v3340 = vpack.c.bf16 %v2868, %v2858
      %v3341 = vpack.c.bf16 %v2869, %v2859
      %v3342 = vpack.c.bf16 %v2870, %v2860
      %v3343 = vpack.c.bf16 %v2871, %v2861
      %v3344 = vpack.c.bf16 %v2872, %v2862
      %v3345 = vpack.c.bf16 %v2883, %v2873
      %v3346 = vpack.c.bf16 %v2884, %v2874
      %v3347 = vpack.c.bf16 %v2885, %v2875
      %v3348 = vpack.c.bf16 %v2886, %v2876
      %v3349 = vpack.c.bf16 %v2887, %v2877
      %v3350 = vpack.c.bf16 %v2888, %v2878
      %v3351 = vpack.c.bf16 %v2889, %v2879
      %v3352 = vpack.c.bf16 %v2890, %v2880
      %v3353 = vpack.c.bf16 %v2891, %v2881
      %v3354 = vpack.c.bf16 %v2892, %v2882
      %v3355 = vpack.c.bf16 %v2903, %v2893
      %v3356 = vpack.c.bf16 %v2904, %v2894
      %v3357 = vpack.c.bf16 %v2905, %v2895
      %v3358 = vpack.c.bf16 %v2906, %v2896
      %v3359 = vpack.c.bf16 %v2907, %v2897
      %v3360 = vpack.c.bf16 %v2908, %v2898
      %v3361 = vpack.c.bf16 %v2909, %v2899
      %v3362 = vpack.c.bf16 %v2910, %v2900
      %v3363 = vpack.c.bf16 %v2911, %v2901
      %v3364 = vpack.c.bf16 %v2912, %v2902
      %v3365 = vpack.c.bf16 %v2923, %v2913
      %v3366 = vpack.c.bf16 %v2924, %v2914
      %v3367 = vpack.c.bf16 %v2925, %v2915
      %v3368 = vpack.c.bf16 %v2926, %v2916
      %v3369 = vpack.c.bf16 %v2927, %v2917
      %v3370 = vpack.c.bf16 %v2928, %v2918
      %v3371 = vpack.c.bf16 %v2929, %v2919
      %v3372 = vpack.c.bf16 %v2930, %v2920
      %v3373 = vpack.c.bf16 %v2931, %v2921
      %v3374 = vpack.c.bf16 %v2932, %v2922
      %v3375 = vpack.c.bf16 %v2943, %v2933
      %v3376 = vpack.c.bf16 %v2944, %v2934
      %v3377 = vpack.c.bf16 %v2945, %v2935
      %v3378 = vpack.c.bf16 %v2946, %v2936
      %v3379 = vpack.c.bf16 %v2947, %v2937
      %v3380 = vpack.c.bf16 %v2948, %v2938
      %v3381 = vpack.c.bf16 %v2949, %v2939
      %v3382 = vpack.c.bf16 %v2950, %v2940
      %v3383 = vpack.c.bf16 %v2951, %v2941
      %v3384 = vpack.c.bf16 %v2952, %v2942
      %v3385 = vpack.c.bf16 %v2963, %v2953
      %v3386 = vpack.c.bf16 %v2964, %v2954
      %v3387 = vpack.c.bf16 %v2965, %v2955
      %v3388 = vpack.c.bf16 %v2966, %v2956
      %v3389 = vpack.c.bf16 %v2967, %v2957
      %v3390 = vpack.c.bf16 %v2968, %v2958
      %v3391 = vpack.c.bf16 %v2969, %v2959
      %v3392 = vpack.c.bf16 %v2970, %v2960
      %v3393 = vpack.c.bf16 %v2971, %v2961
      %v3394 = vpack.c.bf16 %v2972, %v2962
      %v3395 = vpack.c.bf16 %v2983, %v2973
      %v3396 = vpack.c.bf16 %v2984, %v2974
      %v3397 = vpack.c.bf16 %v2985, %v2975
      %v3398 = vpack.c.bf16 %v2986, %v2976
      %v3399 = vpack.c.bf16 %v2987, %v2977
      %v3400 = vpack.c.bf16 %v2988, %v2978
      %v3401 = vpack.c.bf16 %v2989, %v2979
      %v3402 = vpack.c.bf16 %v2990, %v2980
      %v3403 = vpack.c.bf16 %v2991, %v2981
      %v3404 = vpack.c.bf16 %v2992, %v2982
      %v3405 = vpack.c.bf16 %v3003, %v2993
      %v3406 = vpack.c.bf16 %v3004, %v2994
      %v3407 = vpack.c.bf16 %v3005, %v2995
      %v3408 = vpack.c.bf16 %v3006, %v2996
      %v3409 = vpack.c.bf16 %v3007, %v2997
      %v3410 = vpack.c.bf16 %v3008, %v2998
      %v3411 = vpack.c.bf16 %v3009, %v2999
      %v3412 = vpack.c.bf16 %v3010, %v3000
      %v3413 = vpack.c.bf16 %v3011, %v3001
      %v3414 = vpack.c.bf16 %v3012, %v3002
      %v3415 = vpack.c.bf16 %v3023, %v3013
      %v3416 = vpack.c.bf16 %v3024, %v3014
      %v3417 = vpack.c.bf16 %v3025, %v3015
      %v3418 = vpack.c.bf16 %v3026, %v3016
      %v3419 = vpack.c.bf16 %v3027, %v3017
      %v3420 = vpack.c.bf16 %v3028, %v3018
      %v3421 = vpack.c.bf16 %v3029, %v3019
      %v3422 = vpack.c.bf16 %v3030, %v3020
      %v3423 = vpack.c.bf16 %v3031, %v3021
      %v3424 = vpack.c.bf16 %v3032, %v3022
      %v3425 = vpack.c.bf16 %v3043, %v3033
      %v3426 = vpack.c.bf16 %v3044, %v3034
      %v3427 = vpack.c.bf16 %v3045, %v3035
      %v3428 = vpack.c.bf16 %v3046, %v3036
      %v3429 = vpack.c.bf16 %v3047, %v3037
      %v3430 = vpack.c.bf16 %v3048, %v3038
      %v3431 = vpack.c.bf16 %v3049, %v3039
      %v3432 = vpack.c.bf16 %v3050, %v3040
      %v3433 = vpack.c.bf16 %v3051, %v3041
      %v3434 = vpack.c.bf16 %v3052, %v3042
      %v3435 = vpack.c.bf16 %v3063, %v3053
      %v3436 = vpack.c.bf16 %v3064, %v3054
      %v3437 = vpack.c.bf16 %v3065, %v3055
      %v3438 = vpack.c.bf16 %v3066, %v3056
      %v3439 = vpack.c.bf16 %v3067, %v3057
      %v3440 = vpack.c.bf16 %v3068, %v3058
      %v3441 = vpack.c.bf16 %v3069, %v3059
      %v3442 = vpack.c.bf16 %v3070, %v3060
      %v3443 = vpack.c.bf16 %v3071, %v3061
      %v3444 = vpack.c.bf16 %v3072, %v3062
      %v3445 = vpack.c.bf16 %v3083, %v3073
      %v3446 = vpack.c.bf16 %v3084, %v3074
      %v3447 = vpack.c.bf16 %v3085, %v3075
      %v3448 = vpack.c.bf16 %v3086, %v3076
      %v3449 = vpack.c.bf16 %v3087, %v3077
      %v3450 = vpack.c.bf16 %v3088, %v3078
      %v3451 = vpack.c.bf16 %v3089, %v3079
      %v3452 = vpack.c.bf16 %v3090, %v3080
      %v3453 = vpack.c.bf16 %v3091, %v3081
      %v3454 = vpack.c.bf16 %v3092, %v3082
      %v3455 = vpack.c.bf16 %v3103, %v3093
      %v3456 = vpack.c.bf16 %v3104, %v3094
      %v3457 = vpack.c.bf16 %v3105, %v3095
      %v3458 = vpack.c.bf16 %v3106, %v3096
      %v3459 = vpack.c.bf16 %v3107, %v3097
      %v3460 = vpack.c.bf16 %v3108, %v3098
      %v3461 = vpack.c.bf16 %v3109, %v3099
      %v3462 = vpack.c.bf16 %v3110, %v3100
      %v3463 = vpack.c.bf16 %v3111, %v3101
      %v3464 = vpack.c.bf16 %v3112, %v3102
      %v3465 = vpack.c.bf16 %v3123, %v3113
      %v3466 = vpack.c.bf16 %v3124, %v3114
      %v3467 = vpack.c.bf16 %v3125, %v3115
      %v3468 = vpack.c.bf16 %v3126, %v3116
      %v3469 = vpack.c.bf16 %v3127, %v3117
      %v3470 = vpack.c.bf16 %v3128, %v3118
      %v3471 = vpack.c.bf16 %v3129, %v3119
      %v3472 = vpack.c.bf16 %v3130, %v3120
      %v3473 = vpack.c.bf16 %v3131, %v3121
      %v3474 = vpack.c.bf16 %v3132, %v3122
      %v3475 = vpack.c.bf16 %v3143, %v3133
      %v3476 = vpack.c.bf16 %v3144, %v3134
      %v3477 = vpack.c.bf16 %v3145, %v3135
      %v3478 = vpack.c.bf16 %v3146, %v3136
      %v3479 = vpack.c.bf16 %v3147, %v3137
      %v3480 = vpack.c.bf16 %v3148, %v3138
      %v3481 = vpack.c.bf16 %v3149, %v3139
      %v3482 = vpack.c.bf16 %v3150, %v3140
      %v3483 = vpack.c.bf16 %v3151, %v3141
      %v3484 = vpack.c.bf16 %v3152, %v3142
      %v3487 = vunpack.c.l.b16 %v3163
      %v3488 = vunpack.c.h.b16 %v3163
      %v3489 = vunpack.c.l.b16 %v3164
      %v3490 = vunpack.c.h.b16 %v3164
      %v3491 = vpack.c.b16 %v3487, %v3487
      %v3492 = vpack.c.b16 %v3488, %v3488
      %v3493 = vpack.c.b16 %v3489, %v3489
      %v3494 = vpack.c.b16 %v3490, %v3490
      %3499 = vmatprep.subr.bf16.mxu0 %v3166
      %3500 = vmatpush1.bf16.msra.mxu0 %v3165
      %3501 = vmatprep.subr.bf16.mxu0 %v3176
      %3502 = vmatpush1.bf16.msra.mxu0 %v3175
      %3503 = vmatprep.subr.bf16.mxu0 %v3186
      %3504 = vmatpush1.bf16.msra.mxu0 %v3185
      %3505 = vmatprep.subr.bf16.mxu0 %v3196
      %3506 = vmatpush1.bf16.msra.mxu0 %v3195
      %3507 = vmatprep.subr.bf16.mxu0 %v3206
      %3508 = vmatpush1.bf16.msra.mxu0 %v3205
      %3509 = vmatprep.subr.bf16.mxu0 %v3216
      %3510 = vmatpush1.bf16.msra.mxu0 %v3215
      %3511 = vmatprep.subr.bf16.mxu0 %v3226
      %3512 = vmatpush1.bf16.msra.mxu0 %v3225
      %3513 = vmatprep.subr.bf16.mxu0 %v3236
      %3514 = vmatpush1.bf16.msra.mxu0 %v3235
      %3515 = vmatprep.subr.bf16.mxu0 %v3246
      %3516 = vmatpush1.bf16.msra.mxu0 %v3245
      %3517 = vmatprep.subr.bf16.mxu0 %v3256
      %3518 = vmatpush1.bf16.msra.mxu0 %v3255
      %3519 = vmatprep.subr.bf16.mxu0 %v3266
      %3520 = vmatpush1.bf16.msra.mxu0 %v3265
      %3521 = vmatprep.subr.bf16.mxu0 %v3276
      %3522 = vmatpush1.bf16.msra.mxu0 %v3275
      %3523 = vmatprep.subr.bf16.mxu0 %v3286
      %3524 = vmatpush1.bf16.msra.mxu0 %v3285
      %3525 = vmatprep.subr.bf16.mxu0 %v3296
      %3526 = vmatpush1.bf16.msra.mxu0 %v3295
      %3527 = vmatprep.subr.bf16.mxu0 %v3306
      %3528 = vmatpush1.bf16.msra.mxu0 %v3305
      %3529 = vmatprep.subr.bf16.mxu0 %v3316
      %3530 = vmatpush1.bf16.msra.mxu0 %v3315
      %3531 = vmatprep.mubr.bf16.mxu0 %v3492
      %3532 = vmatmul.mubr.bf16.gmra.mrb[0].mxu0 %v3491
      %v3533 = vpop.f32.mrb[0].mxu0
      %v3534 = vadd.f32 0.0, %v3533
      %v3535 = vpop.f32.mrb[0].mxu0
      %v3536 = vadd.f32 0.0, %v3535
      %v3537 = vpop.f32.mrb[0].mxu0
      %v3538 = vpop.f32.mrb[0].mxu0
      %3539 = vdwg.mxu0
      %3540 = vmatprep.subr.bf16.mxu0 %v3326
      %3541 = vmatpush1.bf16.msra.mxu0 %v3325
      %3542 = vmatprep.subr.bf16.mxu0 %v3336
      %3543 = vmatpush1.bf16.msra.mxu0 %v3335
      %3544 = vmatprep.subr.bf16.mxu0 %v3346
      %3545 = vmatpush1.bf16.msra.mxu0 %v3345
      %3546 = vmatprep.subr.bf16.mxu0 %v3356
      %3547 = vmatpush1.bf16.msra.mxu0 %v3355
      %3548 = vmatprep.subr.bf16.mxu0 %v3366
      %3549 = vmatpush1.bf16.msra.mxu0 %v3365
      %3550 = vmatprep.subr.bf16.mxu0 %v3376
      %3551 = vmatpush1.bf16.msra.mxu0 %v3375
      %3552 = vmatprep.subr.bf16.mxu0 %v3386
      %3553 = vmatpush1.bf16.msra.mxu0 %v3385
      %3554 = vmatprep.subr.bf16.mxu0 %v3396
      %3555 = vmatpush1.bf16.msra.mxu0 %v3395
      %3556 = vmatprep.subr.bf16.mxu0 %v3406
      %3557 = vmatpush1.bf16.msra.mxu0 %v3405
      %3558 = vmatprep.subr.bf16.mxu0 %v3416
      %3559 = vmatpush1.bf16.msra.mxu0 %v3415
      %3560 = vmatprep.subr.bf16.mxu0 %v3426
      %3561 = vmatpush1.bf16.msra.mxu0 %v3425
      %3562 = vmatprep.subr.bf16.mxu0 %v3436
      %3563 = vmatpush1.bf16.msra.mxu0 %v3435
      %3564 = vmatprep.subr.bf16.mxu0 %v3446
      %3565 = vmatpush1.bf16.msra.mxu0 %v3445
      %3566 = vmatprep.subr.bf16.mxu0 %v3456
      %3567 = vmatpush1.bf16.msra.mxu0 %v3455
      %3568 = vmatprep.subr.bf16.mxu0 %v3466
      %3569 = vmatpush1.bf16.msra.mxu0 %v3465
      %3570 = vmatprep.subr.bf16.mxu0 %v3476
      %3571 = vmatpush1.bf16.msra.mxu0 %v3475
      %3572 = vmatprep.mubr.bf16.mxu0 %v3494
      %3573 = vmatmul.mubr.bf16.gmra.mrb[0].mxu0 %v3493
      %v3574 = vpop.f32.mrb[0].mxu0
      %v3575 = vadd.f32 %v3534, %v3574
      %v3576 = vpop.f32.mrb[0].mxu0
      %v3577 = vadd.f32 %v3536, %v3576
      %v3578 = vpop.f32.mrb[0].mxu0
      %v3579 = vpop.f32.mrb[0].mxu0
      %3580 = vdwg.mxu0
      %3581 = vmatprep.subr.bf16.mxu0 %v3168
      %3582 = vmatpush1.bf16.msra.mxu0 %v3167
      %3583 = vmatprep.subr.bf16.mxu0 %v3178
      %3584 = vmatpush1.bf16.msra.mxu0 %v3177
      %3585 = vmatprep.subr.bf16.mxu0 %v3188
      %3586 = vmatpush1.bf16.msra.mxu0 %v3187
      %3587 = vmatprep.subr.bf16.mxu0 %v3198
      %3588 = vmatpush1.bf16.msra.mxu0 %v3197
      %3589 = vmatprep.subr.bf16.mxu0 %v3208
      %3590 = vmatpush1.bf16.msra.mxu0 %v3207
      %3591 = vmatprep.subr.bf16.mxu0 %v3218
      %3592 = vmatpush1.bf16.msra.mxu0 %v3217
      %3593 = vmatprep.subr.bf16.mxu0 %v3228
      %3594 = vmatpush1.bf16.msra.mxu0 %v3227
      %3595 = vmatprep.subr.bf16.mxu0 %v3238
      %3596 = vmatpush1.bf16.msra.mxu0 %v3237
      %3597 = vmatprep.subr.bf16.mxu0 %v3248
      %3598 = vmatpush1.bf16.msra.mxu0 %v3247
      %3599 = vmatprep.subr.bf16.mxu0 %v3258
      %3600 = vmatpush1.bf16.msra.mxu0 %v3257
      %3601 = vmatprep.subr.bf16.mxu0 %v3268
      %3602 = vmatpush1.bf16.msra.mxu0 %v3267
      %3603 = vmatprep.subr.bf16.mxu0 %v3278
      %3604 = vmatpush1.bf16.msra.mxu0 %v3277
      %3605 = vmatprep.subr.bf16.mxu0 %v3288
      %3606 = vmatpush1.bf16.msra.mxu0 %v3287
      %3607 = vmatprep.subr.bf16.mxu0 %v3298
      %3608 = vmatpush1.bf16.msra.mxu0 %v3297
      %3609 = vmatprep.subr.bf16.mxu0 %v3308
      %3610 = vmatpush1.bf16.msra.mxu0 %v3307
      %3611 = vmatprep.subr.bf16.mxu0 %v3318
      %3612 = vmatpush1.bf16.msra.mxu0 %v3317
      %3613 = vmatprep.mubr.bf16.mxu0 %v3492
      %3614 = vmatmul.mubr.bf16.gmra.mrb[0].mxu0 %v3491
      %v3615 = vpop.f32.mrb[0].mxu0
      %v3616 = vadd.f32 0.0, %v3615
      %v3617 = vpop.f32.mrb[0].mxu0
      %v3618 = vadd.f32 0.0, %v3617
      %v3619 = vpop.f32.mrb[0].mxu0
      %v3620 = vpop.f32.mrb[0].mxu0
      %3621 = vdwg.mxu0
      %3622 = vmatprep.subr.bf16.mxu0 %v3328
      %3623 = vmatpush1.bf16.msra.mxu0 %v3327
      %3624 = vmatprep.subr.bf16.mxu0 %v3338
      %3625 = vmatpush1.bf16.msra.mxu0 %v3337
      %3626 = vmatprep.subr.bf16.mxu0 %v3348
      %3627 = vmatpush1.bf16.msra.mxu0 %v3347
      %3628 = vmatprep.subr.bf16.mxu0 %v3358
      %3629 = vmatpush1.bf16.msra.mxu0 %v3357
      %3630 = vmatprep.subr.bf16.mxu0 %v3368
      %3631 = vmatpush1.bf16.msra.mxu0 %v3367
      %3632 = vmatprep.subr.bf16.mxu0 %v3378
      %3633 = vmatpush1.bf16.msra.mxu0 %v3377
      %3634 = vmatprep.subr.bf16.mxu0 %v3388
      %3635 = vmatpush1.bf16.msra.mxu0 %v3387
      %3636 = vmatprep.subr.bf16.mxu0 %v3398
      %3637 = vmatpush1.bf16.msra.mxu0 %v3397
      %3638 = vmatprep.subr.bf16.mxu0 %v3408
      %3639 = vmatpush1.bf16.msra.mxu0 %v3407
      %3640 = vmatprep.subr.bf16.mxu0 %v3418
      %3641 = vmatpush1.bf16.msra.mxu0 %v3417
      %3642 = vmatprep.subr.bf16.mxu0 %v3428
      %3643 = vmatpush1.bf16.msra.mxu0 %v3427
      %3644 = vmatprep.subr.bf16.mxu0 %v3438
      %3645 = vmatpush1.bf16.msra.mxu0 %v3437
      %3646 = vmatprep.subr.bf16.mxu0 %v3448
      %3647 = vmatpush1.bf16.msra.mxu0 %v3447
      %3648 = vmatprep.subr.bf16.mxu0 %v3458
      %3649 = vmatpush1.bf16.msra.mxu0 %v3457
      %3650 = vmatprep.subr.bf16.mxu0 %v3468
      %3651 = vmatpush1.bf16.msra.mxu0 %v3467
      %3652 = vmatprep.subr.bf16.mxu0 %v3478
      %3653 = vmatpush1.bf16.msra.mxu0 %v3477
      %3654 = vmatprep.mubr.bf16.mxu0 %v3494
      %3655 = vmatmul.mubr.bf16.gmra.mrb[0].mxu0 %v3493
      %v3656 = vpop.f32.mrb[0].mxu0
      %v3657 = vadd.f32 %v3616, %v3656
      %v3658 = vpop.f32.mrb[0].mxu0
      %v3659 = vadd.f32 %v3618, %v3658
      %v3660 = vpop.f32.mrb[0].mxu0
      %v3661 = vpop.f32.mrb[0].mxu0
      %3662 = vdwg.mxu0
      %3663 = vmatprep.subr.bf16.mxu0 %v3170
      %3664 = vmatpush1.bf16.msra.mxu0 %v3169
      %3665 = vmatprep.subr.bf16.mxu0 %v3180
      %3666 = vmatpush1.bf16.msra.mxu0 %v3179
      %3667 = vmatprep.subr.bf16.mxu0 %v3190
      %3668 = vmatpush1.bf16.msra.mxu0 %v3189
      %3669 = vmatprep.subr.bf16.mxu0 %v3200
      %3670 = vmatpush1.bf16.msra.mxu0 %v3199
      %3671 = vmatprep.subr.bf16.mxu0 %v3210
      %3672 = vmatpush1.bf16.msra.mxu0 %v3209
      %3673 = vmatprep.subr.bf16.mxu0 %v3220
      %3674 = vmatpush1.bf16.msra.mxu0 %v3219
      %3675 = vmatprep.subr.bf16.mxu0 %v3230
      %3676 = vmatpush1.bf16.msra.mxu0 %v3229
      %3677 = vmatprep.subr.bf16.mxu0 %v3240
      %3678 = vmatpush1.bf16.msra.mxu0 %v3239
      %3679 = vmatprep.subr.bf16.mxu0 %v3250
      %3680 = vmatpush1.bf16.msra.mxu0 %v3249
      %3681 = vmatprep.subr.bf16.mxu0 %v3260
      %3682 = vmatpush1.bf16.msra.mxu0 %v3259
      %3683 = vmatprep.subr.bf16.mxu0 %v3270
      %3684 = vmatpush1.bf16.msra.mxu0 %v3269
      %3685 = vmatprep.subr.bf16.mxu0 %v3280
      %3686 = vmatpush1.bf16.msra.mxu0 %v3279
      %3687 = vmatprep.subr.bf16.mxu0 %v3290
      %3688 = vmatpush1.bf16.msra.mxu0 %v3289
      %3689 = vmatprep.subr.bf16.mxu0 %v3300
      %3690 = vmatpush1.bf16.msra.mxu0 %v3299
      %3691 = vmatprep.subr.bf16.mxu0 %v3310
      %3692 = vmatpush1.bf16.msra.mxu0 %v3309
      %3693 = vmatprep.subr.bf16.mxu0 %v3320
      %3694 = vmatpush1.bf16.msra.mxu0 %v3319
      %3695 = vmatprep.mubr.bf16.mxu0 %v3492
      %3696 = vmatmul.mubr.bf16.gmra.mrb[0].mxu0 %v3491
      %v3697 = vpop.f32.mrb[0].mxu0
      %v3698 = vadd.f32 0.0, %v3697
      %v3699 = vpop.f32.mrb[0].mxu0
      %v3700 = vadd.f32 0.0, %v3699
      %v3701 = vpop.f32.mrb[0].mxu0
      %v3702 = vpop.f32.mrb[0].mxu0
      %3703 = vdwg.mxu0
      %3704 = vmatprep.subr.bf16.mxu0 %v3330
      %3705 = vmatpush1.bf16.msra.mxu0 %v3329
      %3706 = vmatprep.subr.bf16.mxu0 %v3340
      %3707 = vmatpush1.bf16.msra.mxu0 %v3339
      %3708 = vmatprep.subr.bf16.mxu0 %v3350
      %3709 = vmatpush1.bf16.msra.mxu0 %v3349
      %3710 = vmatprep.subr.bf16.mxu0 %v3360
      %3711 = vmatpush1.bf16.msra.mxu0 %v3359
      %3712 = vmatprep.subr.bf16.mxu0 %v3370
      %3713 = vmatpush1.bf16.msra.mxu0 %v3369
      %3714 = vmatprep.subr.bf16.mxu0 %v3380
      %3715 = vmatpush1.bf16.msra.mxu0 %v3379
      %3716 = vmatprep.subr.bf16.mxu0 %v3390
      %3717 = vmatpush1.bf16.msra.mxu0 %v3389
      %3718 = vmatprep.subr.bf16.mxu0 %v3400
      %3719 = vmatpush1.bf16.msra.mxu0 %v3399
      %3720 = vmatprep.subr.bf16.mxu0 %v3410
      %3721 = vmatpush1.bf16.msra.mxu0 %v3409
      %3722 = vmatprep.subr.bf16.mxu0 %v3420
      %3723 = vmatpush1.bf16.msra.mxu0 %v3419
      %3724 = vmatprep.subr.bf16.mxu0 %v3430
      %3725 = vmatpush1.bf16.msra.mxu0 %v3429
      %3726 = vmatprep.subr.bf16.mxu0 %v3440
      %3727 = vmatpush1.bf16.msra.mxu0 %v3439
      %3728 = vmatprep.subr.bf16.mxu0 %v3450
      %3729 = vmatpush1.bf16.msra.mxu0 %v3449
      %3730 = vmatprep.subr.bf16.mxu0 %v3460
      %3731 = vmatpush1.bf16.msra.mxu0 %v3459
      %3732 = vmatprep.subr.bf16.mxu0 %v3470
      %3733 = vmatpush1.bf16.msra.mxu0 %v3469
      %3734 = vmatprep.subr.bf16.mxu0 %v3480
      %3735 = vmatpush1.bf16.msra.mxu0 %v3479
      %3736 = vmatprep.mubr.bf16.mxu0 %v3494
      %3737 = vmatmul.mubr.bf16.gmra.mrb[0].mxu0 %v3493
      %v3738 = vpop.f32.mrb[0].mxu0
      %v3739 = vadd.f32 %v3698, %v3738
      %v3740 = vpop.f32.mrb[0].mxu0
      %v3741 = vadd.f32 %v3700, %v3740
      %v3742 = vpop.f32.mrb[0].mxu0
      %v3743 = vpop.f32.mrb[0].mxu0
      %3744 = vdwg.mxu0
      %3745 = vmatprep.subr.bf16.mxu0 %v3172
      %3746 = vmatpush1.bf16.msra.mxu0 %v3171
      %3747 = vmatprep.subr.bf16.mxu0 %v3182
      %3748 = vmatpush1.bf16.msra.mxu0 %v3181
      %3749 = vmatprep.subr.bf16.mxu0 %v3192
      %3750 = vmatpush1.bf16.msra.mxu0 %v3191
      %3751 = vmatprep.subr.bf16.mxu0 %v3202
      %3752 = vmatpush1.bf16.msra.mxu0 %v3201
      %3753 = vmatprep.subr.bf16.mxu0 %v3212
      %3754 = vmatpush1.bf16.msra.mxu0 %v3211
      %3755 = vmatprep.subr.bf16.mxu0 %v3222
      %3756 = vmatpush1.bf16.msra.mxu0 %v3221
      %3757 = vmatprep.subr.bf16.mxu0 %v3232
      %3758 = vmatpush1.bf16.msra.mxu0 %v3231
      %3759 = vmatprep.subr.bf16.mxu0 %v3242
      %3760 = vmatpush1.bf16.msra.mxu0 %v3241
      %3761 = vmatprep.subr.bf16.mxu0 %v3252
      %3762 = vmatpush1.bf16.msra.mxu0 %v3251
      %3763 = vmatprep.subr.bf16.mxu0 %v3262
      %3764 = vmatpush1.bf16.msra.mxu0 %v3261
      %3765 = vmatprep.subr.bf16.mxu0 %v3272
      %3766 = vmatpush1.bf16.msra.mxu0 %v3271
      %3767 = vmatprep.subr.bf16.mxu0 %v3282
      %3768 = vmatpush1.bf16.msra.mxu0 %v3281
      %3769 = vmatprep.subr.bf16.mxu0 %v3292
      %3770 = vmatpush1.bf16.msra.mxu0 %v3291
      %3771 = vmatprep.subr.bf16.mxu0 %v3302
      %3772 = vmatpush1.bf16.msra.mxu0 %v3301
      %3773 = vmatprep.subr.bf16.mxu0 %v3312
      %3774 = vmatpush1.bf16.msra.mxu0 %v3311
      %3775 = vmatprep.subr.bf16.mxu0 %v3322
      %3776 = vmatpush1.bf16.msra.mxu0 %v3321
      %3777 = vmatprep.mubr.bf16.mxu0 %v3492
      %3778 = vmatmul.mubr.bf16.gmra.mrb[0].mxu0 %v3491
      %v3779 = vpop.f32.mrb[0].mxu0
      %v3780 = vadd.f32 0.0, %v3779
      %v3781 = vpop.f32.mrb[0].mxu0
      %v3782 = vadd.f32 0.0, %v3781
      %v3783 = vpop.f32.mrb[0].mxu0
      %v3784 = vpop.f32.mrb[0].mxu0
      %3785 = vdwg.mxu0
      %3786 = vmatprep.subr.bf16.mxu0 %v3332
      %3787 = vmatpush1.bf16.msra.mxu0 %v3331
      %3788 = vmatprep.subr.bf16.mxu0 %v3342
      %3789 = vmatpush1.bf16.msra.mxu0 %v3341
      %3790 = vmatprep.subr.bf16.mxu0 %v3352
      %3791 = vmatpush1.bf16.msra.mxu0 %v3351
      %3792 = vmatprep.subr.bf16.mxu0 %v3362
      %3793 = vmatpush1.bf16.msra.mxu0 %v3361
      %3794 = vmatprep.subr.bf16.mxu0 %v3372
      %3795 = vmatpush1.bf16.msra.mxu0 %v3371
      %3796 = vmatprep.subr.bf16.mxu0 %v3382
      %3797 = vmatpush1.bf16.msra.mxu0 %v3381
      %3798 = vmatprep.subr.bf16.mxu0 %v3392
      %3799 = vmatpush1.bf16.msra.mxu0 %v3391
      %3800 = vmatprep.subr.bf16.mxu0 %v3402
      %3801 = vmatpush1.bf16.msra.mxu0 %v3401
      %3802 = vmatprep.subr.bf16.mxu0 %v3412
      %3803 = vmatpush1.bf16.msra.mxu0 %v3411
      %3804 = vmatprep.subr.bf16.mxu0 %v3422
      %3805 = vmatpush1.bf16.msra.mxu0 %v3421
      %3806 = vmatprep.subr.bf16.mxu0 %v3432
      %3807 = vmatpush1.bf16.msra.mxu0 %v3431
      %3808 = vmatprep.subr.bf16.mxu0 %v3442
      %3809 = vmatpush1.bf16.msra.mxu0 %v3441
      %3810 = vmatprep.subr.bf16.mxu0 %v3452
      %3811 = vmatpush1.bf16.msra.mxu0 %v3451
      %3812 = vmatprep.subr.bf16.mxu0 %v3462
      %3813 = vmatpush1.bf16.msra.mxu0 %v3461
      %3814 = vmatprep.subr.bf16.mxu0 %v3472
      %3815 = vmatpush1.bf16.msra.mxu0 %v3471
      %3816 = vmatprep.subr.bf16.mxu0 %v3482
      %3817 = vmatpush1.bf16.msra.mxu0 %v3481
      %3818 = vmatprep.mubr.bf16.mxu0 %v3494
      %3819 = vmatmul.mubr.bf16.gmra.mrb[0].mxu0 %v3493
      %v3820 = vpop.f32.mrb[0].mxu0
      %v3821 = vadd.f32 %v3780, %v3820
      %v3822 = vpop.f32.mrb[0].mxu0
      %v3823 = vadd.f32 %v3782, %v3822
      %v3824 = vpop.f32.mrb[0].mxu0
      %v3825 = vpop.f32.mrb[0].mxu0
      %3826 = vdwg.mxu0
      %3827 = vmatprep.subr.bf16.mxu0 %v3174
      %3828 = vmatpush1.bf16.msra.mxu0 %v3173
      %3829 = vmatprep.subr.bf16.mxu0 %v3184
      %3830 = vmatpush1.bf16.msra.mxu0 %v3183
      %3831 = vmatprep.subr.bf16.mxu0 %v3194
      %3832 = vmatpush1.bf16.msra.mxu0 %v3193
      %3833 = vmatprep.subr.bf16.mxu0 %v3204
      %3834 = vmatpush1.bf16.msra.mxu0 %v3203
      %3835 = vmatprep.subr.bf16.mxu0 %v3214
      %3836 = vmatpush1.bf16.msra.mxu0 %v3213
      %3837 = vmatprep.subr.bf16.mxu0 %v3224
      %3838 = vmatpush1.bf16.msra.mxu0 %v3223
      %3839 = vmatprep.subr.bf16.mxu0 %v3234
      %3840 = vmatpush1.bf16.msra.mxu0 %v3233
      %3841 = vmatprep.subr.bf16.mxu0 %v3244
      %3842 = vmatpush1.bf16.msra.mxu0 %v3243
      %3843 = vmatprep.subr.bf16.mxu0 %v3254
      %3844 = vmatpush1.bf16.msra.mxu0 %v3253
      %3845 = vmatprep.subr.bf16.mxu0 %v3264
      %3846 = vmatpush1.bf16.msra.mxu0 %v3263
      %3847 = vmatprep.subr.bf16.mxu0 %v3274
      %3848 = vmatpush1.bf16.msra.mxu0 %v3273
      %3849 = vmatprep.subr.bf16.mxu0 %v3284
      %3850 = vmatpush1.bf16.msra.mxu0 %v3283
      %3851 = vmatprep.subr.bf16.mxu0 %v3294
      %3852 = vmatpush1.bf16.msra.mxu0 %v3293
      %3853 = vmatprep.subr.bf16.mxu0 %v3304
      %3854 = vmatpush1.bf16.msra.mxu0 %v3303
      %3855 = vmatprep.subr.bf16.mxu0 %v3314
      %3856 = vmatpush1.bf16.msra.mxu0 %v3313
      %3857 = vmatprep.subr.bf16.mxu0 %v3324
      %3858 = vmatpush1.bf16.msra.mxu0 %v3323
      %3859 = vmatprep.mubr.bf16.mxu0 %v3492
      %3860 = vmatmul.mubr.bf16.gmra.mrb[0].mxu0 %v3491
      %v3861 = vpop.f32.mrb[0].mxu0
      %v3862 = vadd.f32 0.0, %v3861
      %v3863 = vpop.f32.mrb[0].mxu0
      %v3864 = vadd.f32 0.0, %v3863
      %v3865 = vpop.f32.mrb[0].mxu0
      %v3866 = vpop.f32.mrb[0].mxu0
      %3867 = vdwg.mxu0
      %3868 = vmatprep.subr.bf16.mxu0 %v3334
      %3869 = vmatpush1.bf16.msra.mxu0 %v3333
      %3870 = vmatprep.subr.bf16.mxu0 %v3344
      %3871 = vmatpush1.bf16.msra.mxu0 %v3343
      %3872 = vmatprep.subr.bf16.mxu0 %v3354
      %3873 = vmatpush1.bf16.msra.mxu0 %v3353
      %3874 = vmatprep.subr.bf16.mxu0 %v3364
      %3875 = vmatpush1.bf16.msra.mxu0 %v3363
      %3876 = vmatprep.subr.bf16.mxu0 %v3374
      %3877 = vmatpush1.bf16.msra.mxu0 %v3373
      %3878 = vmatprep.subr.bf16.mxu0 %v3384
      %3879 = vmatpush1.bf16.msra.mxu0 %v3383
      %3880 = vmatprep.subr.bf16.mxu0 %v3394
      %3881 = vmatpush1.bf16.msra.mxu0 %v3393
      %3882 = vmatprep.subr.bf16.mxu0 %v3404
      %3883 = vmatpush1.bf16.msra.mxu0 %v3403
      %3884 = vmatprep.subr.bf16.mxu0 %v3414
      %3885 = vmatpush1.bf16.msra.mxu0 %v3413
      %3886 = vmatprep.subr.bf16.mxu0 %v3424
      %3887 = vmatpush1.bf16.msra.mxu0 %v3423
      %3888 = vmatprep.subr.bf16.mxu0 %v3434
      %3889 = vmatpush1.bf16.msra.mxu0 %v3433
      %3890 = vmatprep.subr.bf16.mxu0 %v3444
      %3891 = vmatpush1.bf16.msra.mxu0 %v3443
      %3892 = vmatprep.subr.bf16.mxu0 %v3454
      %3893 = vmatpush1.bf16.msra.mxu0 %v3453
      %3894 = vmatprep.subr.bf16.mxu0 %v3464
      %3895 = vmatpush1.bf16.msra.mxu0 %v3463
      %3896 = vmatprep.subr.bf16.mxu0 %v3474
      %3897 = vmatpush1.bf16.msra.mxu0 %v3473
      %3898 = vmatprep.subr.bf16.mxu0 %v3484
      %3899 = vmatpush1.bf16.msra.mxu0 %v3483
      %3900 = vmatprep.mubr.bf16.mxu0 %v3494
      %3901 = vmatmul.mubr.bf16.gmra.mrb[0].mxu0 %v3493
      %v3902 = vpop.f32.mrb[0].mxu0
      %v3903 = vadd.f32 %v3862, %v3902
      %v3904 = vpop.f32.mrb[0].mxu0
      %v3905 = vadd.f32 %v3864, %v3904
      %v3906 = vpop.f32.mrb[0].mxu0
      %v3907 = vpop.f32.mrb[0].mxu0
      %3908 = vdwg.mxu0
      %v3909 = vadd.f32 %v3153, %v3575
      %v3910 = vadd.f32 %v3154, %v3577
      %v3911 = vadd.f32 %v3155, %v3657
      %v3912 = vadd.f32 %v3156, %v3659
      %v3913 = vadd.f32 %v3157, %v3739
      %v3914 = vadd.f32 %v3158, %v3741
      %v3915 = vadd.f32 %v3159, %v3821
      %v3916 = vadd.f32 %v3160, %v3823
      %v3917 = vadd.f32 %v3161, %v3903
      %v3918 = vadd.f32 %v3162, %v3905
      %3919 = vst [vmem:[#allocation2] sm:$0xff] %v3909
      %3920 = vst [vmem:[#allocation2 + $0x8] sm:$0xff] %v3910
      %3921 = vst [vmem:[#allocation2 + $0x10] sm:$0xff] %v3911
      %3922 = vst [vmem:[#allocation2 + $0x18] sm:$0xff] %v3912
      %3923 = vst [vmem:[#allocation2 + $0x20] sm:$0xff] %v3913
      %3924 = vst [vmem:[#allocation2 + $0x28] sm:$0xff] %v3914
      %3925 = vst [vmem:[#allocation2 + $0x30] sm:$0xff] %v3915
      %3926 = vst [vmem:[#allocation2 + $0x38] sm:$0xff] %v3916
      %3927 = vst [vmem:[#allocation2 + $0x40] sm:$0xff] %v3917
      %3928 = vst [vmem:[#allocation2 + $0x48] sm:$0xff] %v3918
      %p3929 = scmp.eq.s32.totalorder %s22, 3
      // Predicated region
      $region49: #{multitask_forward.1} parent=43 // pred_check
        %p3930 = pneg %p3929
      $region50: #{multitask_forward.1} parent=43 // pred_check_branch
        %3932 = sbr.rel (%p3930) target = $region52
      $region51: #{multitask_forward.1} parent=43 // pred_region
        %v3933 = vld [vmem:[#allocation2] sm:$0xff]
        %v3934 = vld [vmem:[#allocation2 + $0x8] sm:$0xff]
        %v3935 = vld [vmem:[#allocation2 + $0x10] sm:$0xff]
        %v3936 = vld [vmem:[#allocation2 + $0x18] sm:$0xff]
        %v3937 = vld [vmem:[#allocation2 + $0x20] sm:$0xff]
        %v3938 = vld [vmem:[#allocation2 + $0x28] sm:$0xff]
        %v3939 = vld [vmem:[#allocation2 + $0x30] sm:$0xff]
        %v3940 = vld [vmem:[#allocation2 + $0x38] sm:$0xff]
        %v3941 = vld [vmem:[#allocation2 + $0x40] sm:$0xff]
        %v3942 = vld [vmem:[#allocation2 + $0x48] sm:$0xff]
        %v3943 = vpack.c.bf16 %v3933, %v3933
        %v3944 = vpack.c.bf16 %v3934, %v3934
        %v3945 = vpack.c.bf16 %v3935, %v3935
        %v3946 = vpack.c.bf16 %v3936, %v3936
        %v3947 = vpack.c.bf16 %v3937, %v3937
        %v3948 = vpack.c.bf16 %v3938, %v3938
        %v3949 = vpack.c.bf16 %v3939, %v3939
        %v3950 = vpack.c.bf16 %v3940, %v3940
        %v3951 = vpack.c.bf16 %v3941, %v3941
        %v3952 = vpack.c.bf16 %v3942, %v3942
        %v3953 = vld [vmem:[%s3] sm:$0xf]
        %v3954 = vld [vmem:[%s3 + $0x4] sm:$0xf]
        %v3955 = vld [vmem:[%s3 + $0x8] sm:$0xf]
        %v3956 = vld [vmem:[%s3 + $0xc] sm:$0xf]
        %v3957 = vld [vmem:[%s3 + $0x10] sm:$0xf]
        %v3958 = vld [vmem:[%s3 + $0x14] sm:$0xf]
        %v3959 = vld [vmem:[%s3 + $0x18] sm:$0xf]
        %v3960 = vld [vmem:[%s3 + $0x1c] sm:$0xf]
        %v3961 = vld [vmem:[%s3 + $0x20] sm:$0xf]
        %v3962 = vld [vmem:[%s3 + $0x24] sm:$0xf]
        %v3963 = vld [vmem:[%s3 + $0x28] sm:$0xf]
        %v3964 = vld [vmem:[%s3 + $0x2c] sm:$0xf]
        %v3965 = vld [vmem:[%s3 + $0x30] sm:$0xf]
        %v3966 = vld [vmem:[%s3 + $0x34] sm:$0xf]
        %v3967 = vld [vmem:[%s3 + $0x38] sm:$0xf]
        %v3968 = vld [vmem:[%s3 + $0x3c] sm:$0xf]
        %v3969 = vld [vmem:[%s3 + $0x40] sm:$0xf]
        %v3970 = vld [vmem:[%s3 + $0x44] sm:$0xf]
        %v3971 = vld [vmem:[%s3 + $0x48] sm:$0xf]
        %v3972 = vld [vmem:[%s3 + $0x4c] sm:$0xf]
        %v3973 = vld [vmem:[%s3 + $0x50] sm:$0xf]
        %v3974 = vld [vmem:[%s3 + $0x54] sm:$0xf]
        %v3975 = vld [vmem:[%s3 + $0x58] sm:$0xf]
        %v3976 = vld [vmem:[%s3 + $0x5c] sm:$0xf]
        %v3977 = vld [vmem:[%s3 + $0x60] sm:$0xf]
        %v3978 = vld [vmem:[%s3 + $0x64] sm:$0xf]
        %v3979 = vld [vmem:[%s3 + $0x68] sm:$0xf]
        %v3980 = vld [vmem:[%s3 + $0x6c] sm:$0xf]
        %v3981 = vld [vmem:[%s3 + $0x70] sm:$0xf]
        %v3982 = vld [vmem:[%s3 + $0x74] sm:$0xf]
        %v3983 = vld [vmem:[%s3 + $0x78] sm:$0xf]
        %v3984 = vld [vmem:[%s3 + $0x7c] sm:$0xf]
        %v3985 = vld [vmem:[%s3 + $0x80] sm:$0xf]
        %v3986 = vld [vmem:[%s3 + $0x84] sm:$0xf]
        %v3987 = vld [vmem:[%s3 + $0x88] sm:$0xf]
        %v3988 = vld [vmem:[%s3 + $0x8c] sm:$0xf]
        %v3989 = vld [vmem:[%s3 + $0x90] sm:$0xf]
        %v3990 = vld [vmem:[%s3 + $0x94] sm:$0xf]
        %v3991 = vld [vmem:[%s3 + $0x98] sm:$0xf]
        %v3992 = vld [vmem:[%s3 + $0x9c] sm:$0xf]
        %v3993 = vld [vmem:[%s3 + $0xa0] sm:$0xf]
        %v3994 = vld [vmem:[%s3 + $0xa4] sm:$0xf]
        %v3995 = vld [vmem:[%s3 + $0xa8] sm:$0xf]
        %v3996 = vld [vmem:[%s3 + $0xac] sm:$0xf]
        %v3997 = vld [vmem:[%s3 + $0xb0] sm:$0xf]
        %v3998 = vld [vmem:[%s3 + $0xb4] sm:$0xf]
        %v3999 = vld [vmem:[%s3 + $0xb8] sm:$0xf]
        %v4000 = vld [vmem:[%s3 + $0xbc] sm:$0xf]
        %v4001 = vld [vmem:[%s3 + $0xc0] sm:$0xf]
        %v4002 = vld [vmem:[%s3 + $0xc4] sm:$0xf]
        %v4003 = vld [vmem:[%s3 + $0xc8] sm:$0xf]
        %v4004 = vld [vmem:[%s3 + $0xcc] sm:$0xf]
        %v4005 = vld [vmem:[%s3 + $0xd0] sm:$0xf]
        %v4006 = vld [vmem:[%s3 + $0xd4] sm:$0xf]
        %v4007 = vld [vmem:[%s3 + $0xd8] sm:$0xf]
        %v4008 = vld [vmem:[%s3 + $0xdc] sm:$0xf]
        %v4009 = vld [vmem:[%s3 + $0xe0] sm:$0xf]
        %v4010 = vld [vmem:[%s3 + $0xe4] sm:$0xf]
        %v4011 = vld [vmem:[%s3 + $0xe8] sm:$0xf]
        %v4012 = vld [vmem:[%s3 + $0xec] sm:$0xf]
        %v4013 = vld [vmem:[%s3 + $0xf0] sm:$0xf]
        %v4014 = vld [vmem:[%s3 + $0xf4] sm:$0xf]
        %v4015 = vld [vmem:[%s3 + $0xf8] sm:$0xf]
        %v4016 = vld [vmem:[%s3 + $0xfc] sm:$0xf]
        %v4017 = vld [vmem:[%s3 + $0x100] sm:$0xf]
        %v4018 = vld [vmem:[%s3 + $0x104] sm:$0xf]
        %v4019 = vld [vmem:[%s3 + $0x108] sm:$0xf]
        %v4020 = vld [vmem:[%s3 + $0x10c] sm:$0xf]
        %v4021 = vld [vmem:[%s3 + $0x110] sm:$0xf]
        %v4022 = vld [vmem:[%s3 + $0x114] sm:$0xf]
        %v4023 = vld [vmem:[%s3 + $0x118] sm:$0xf]
        %v4024 = vld [vmem:[%s3 + $0x11c] sm:$0xf]
        %v4025 = vld [vmem:[%s3 + $0x120] sm:$0xf]
        %v4026 = vld [vmem:[%s3 + $0x124] sm:$0xf]
        %v4027 = vld [vmem:[%s3 + $0x128] sm:$0xf]
        %v4028 = vld [vmem:[%s3 + $0x12c] sm:$0xf]
        %v4029 = vld [vmem:[%s3 + $0x130] sm:$0xf]
        %v4030 = vld [vmem:[%s3 + $0x134] sm:$0xf]
        %v4031 = vld [vmem:[%s3 + $0x138] sm:$0xf]
        %v4032 = vld [vmem:[%s3 + $0x13c] sm:$0xf]
        %v4033 = vld [vmem:[%s3 + $0x140] sm:$0xf]
        %v4034 = vld [vmem:[%s3 + $0x144] sm:$0xf]
        %v4035 = vld [vmem:[%s3 + $0x148] sm:$0xf]
        %v4036 = vld [vmem:[%s3 + $0x14c] sm:$0xf]
        %v4037 = vld [vmem:[%s3 + $0x150] sm:$0xf]
        %v4038 = vld [vmem:[%s3 + $0x154] sm:$0xf]
        %v4039 = vld [vmem:[%s3 + $0x158] sm:$0xf]
        %v4040 = vld [vmem:[%s3 + $0x15c] sm:$0xf]
        %v4041 = vld [vmem:[%s3 + $0x160] sm:$0xf]
        %v4042 = vld [vmem:[%s3 + $0x164] sm:$0xf]
        %v4043 = vld [vmem:[%s3 + $0x168] sm:$0xf]
        %v4044 = vld [vmem:[%s3 + $0x16c] sm:$0xf]
        %v4045 = vld [vmem:[%s3 + $0x170] sm:$0xf]
        %v4046 = vld [vmem:[%s3 + $0x174] sm:$0xf]
        %v4047 = vld [vmem:[%s3 + $0x178] sm:$0xf]
        %v4048 = vld [vmem:[%s3 + $0x17c] sm:$0xf]
        %v4049 = vld [vmem:[%s3 + $0x180] sm:$0xf]
        %v4050 = vld [vmem:[%s3 + $0x184] sm:$0xf]
        %v4051 = vld [vmem:[%s3 + $0x188] sm:$0xf]
        %v4052 = vld [vmem:[%s3 + $0x18c] sm:$0xf]
        %v4053 = vld [vmem:[%s3 + $0x190] sm:$0xf]
        %v4054 = vld [vmem:[%s3 + $0x194] sm:$0xf]
        %v4055 = vld [vmem:[%s3 + $0x198] sm:$0xf]
        %v4056 = vld [vmem:[%s3 + $0x19c] sm:$0xf]
        %v4057 = vld [vmem:[%s3 + $0x1a0] sm:$0xf]
        %v4058 = vld [vmem:[%s3 + $0x1a4] sm:$0xf]
        %v4059 = vld [vmem:[%s3 + $0x1a8] sm:$0xf]
        %v4060 = vld [vmem:[%s3 + $0x1ac] sm:$0xf]
        %v4061 = vld [vmem:[%s3 + $0x1b0] sm:$0xf]
        %v4062 = vld [vmem:[%s3 + $0x1b4] sm:$0xf]
        %v4063 = vld [vmem:[%s3 + $0x1b8] sm:$0xf]
        %v4064 = vld [vmem:[%s3 + $0x1bc] sm:$0xf]
        %v4065 = vld [vmem:[%s3 + $0x1c0] sm:$0xf]
        %v4066 = vld [vmem:[%s3 + $0x1c4] sm:$0xf]
        %v4067 = vld [vmem:[%s3 + $0x1c8] sm:$0xf]
        %v4068 = vld [vmem:[%s3 + $0x1cc] sm:$0xf]
        %v4069 = vld [vmem:[%s3 + $0x1d0] sm:$0xf]
        %v4070 = vld [vmem:[%s3 + $0x1d4] sm:$0xf]
        %v4071 = vld [vmem:[%s3 + $0x1d8] sm:$0xf]
        %v4072 = vld [vmem:[%s3 + $0x1dc] sm:$0xf]
        %v4073 = vld [vmem:[%s3 + $0x1e0] sm:$0xf]
        %v4074 = vld [vmem:[%s3 + $0x1e4] sm:$0xf]
        %v4075 = vld [vmem:[%s3 + $0x1e8] sm:$0xf]
        %v4076 = vld [vmem:[%s3 + $0x1ec] sm:$0xf]
        %v4077 = vld [vmem:[%s3 + $0x1f0] sm:$0xf]
        %v4078 = vld [vmem:[%s3 + $0x1f4] sm:$0xf]
        %v4079 = vld [vmem:[%s3 + $0x1f8] sm:$0xf]
        %v4080 = vld [vmem:[%s3 + $0x1fc] sm:$0xf]
        %v4081 = vld [vmem:[%s3 + $0x200] sm:$0xf]
        %v4082 = vld [vmem:[%s3 + $0x204] sm:$0xf]
        %v4083 = vld [vmem:[%s3 + $0x208] sm:$0xf]
        %v4084 = vld [vmem:[%s3 + $0x20c] sm:$0xf]
        %v4085 = vld [vmem:[%s3 + $0x210] sm:$0xf]
        %v4086 = vld [vmem:[%s3 + $0x214] sm:$0xf]
        %v4087 = vld [vmem:[%s3 + $0x218] sm:$0xf]
        %v4088 = vld [vmem:[%s3 + $0x21c] sm:$0xf]
        %v4089 = vld [vmem:[%s3 + $0x220] sm:$0xf]
        %v4090 = vld [vmem:[%s3 + $0x224] sm:$0xf]
        %v4091 = vld [vmem:[%s3 + $0x228] sm:$0xf]
        %v4092 = vld [vmem:[%s3 + $0x22c] sm:$0xf]
        %v4093 = vld [vmem:[%s3 + $0x230] sm:$0xf]
        %v4094 = vld [vmem:[%s3 + $0x234] sm:$0xf]
        %v4095 = vld [vmem:[%s3 + $0x238] sm:$0xf]
        %v4096 = vld [vmem:[%s3 + $0x23c] sm:$0xf]
        %v4097 = vld [vmem:[%s3 + $0x240] sm:$0xf]
        %v4098 = vld [vmem:[%s3 + $0x244] sm:$0xf]
        %v4099 = vld [vmem:[%s3 + $0x248] sm:$0xf]
        %v4100 = vld [vmem:[%s3 + $0x24c] sm:$0xf]
        %v4101 = vld [vmem:[%s3 + $0x250] sm:$0xf]
        %v4102 = vld [vmem:[%s3 + $0x254] sm:$0xf]
        %v4103 = vld [vmem:[%s3 + $0x258] sm:$0xf]
        %v4104 = vld [vmem:[%s3 + $0x25c] sm:$0xf]
        %v4105 = vld [vmem:[%s3 + $0x260] sm:$0xf]
        %v4106 = vld [vmem:[%s3 + $0x264] sm:$0xf]
        %v4107 = vld [vmem:[%s3 + $0x268] sm:$0xf]
        %v4108 = vld [vmem:[%s3 + $0x26c] sm:$0xf]
        %v4109 = vld [vmem:[%s3 + $0x270] sm:$0xf]
        %v4110 = vld [vmem:[%s3 + $0x274] sm:$0xf]
        %v4111 = vld [vmem:[%s3 + $0x278] sm:$0xf]
        %v4112 = vld [vmem:[%s3 + $0x27c] sm:$0xf]
        %v4113 = vld [vmem:[%s4] sm:$0x1]
        %v4115 = vlaneseq
        %v4116 = vshrl.u32 %v4115, 7
        %v4117 = vsub.s32 0, %v4116
        %v4118 = vrot.slane %v4113, %v4117
        %v4280 = vunpack.c.l.b16 %v3953
        %v4281 = vunpack.c.l.b16 %v3954
        %v4282 = vunpack.c.l.b16 %v3955
        %v4283 = vunpack.c.l.b16 %v3956
        %v4284 = vunpack.c.l.b16 %v3957
        %v4285 = vunpack.c.l.b16 %v3958
        %v4286 = vunpack.c.l.b16 %v3959
        %v4287 = vunpack.c.l.b16 %v3960
        %v4288 = vunpack.c.l.b16 %v3961
        %v4289 = vunpack.c.l.b16 %v3962
        %v4290 = vunpack.c.l.b16 %v3963
        %v4291 = vunpack.c.l.b16 %v3964
        %v4292 = vunpack.c.l.b16 %v3965
        %v4293 = vunpack.c.l.b16 %v3966
        %v4294 = vunpack.c.l.b16 %v3967
        %v4295 = vunpack.c.l.b16 %v3968
        %v4296 = vunpack.c.l.b16 %v3969
        %v4297 = vunpack.c.l.b16 %v3970
        %v4298 = vunpack.c.l.b16 %v3971
        %v4299 = vunpack.c.l.b16 %v3972
        %v4300 = vunpack.c.l.b16 %v3973
        %v4301 = vunpack.c.l.b16 %v3974
        %v4302 = vunpack.c.l.b16 %v3975
        %v4303 = vunpack.c.l.b16 %v3976
        %v4304 = vunpack.c.l.b16 %v3977
        %v4305 = vunpack.c.l.b16 %v3978
        %v4306 = vunpack.c.l.b16 %v3979
        %v4307 = vunpack.c.l.b16 %v3980
        %v4308 = vunpack.c.l.b16 %v3981
        %v4309 = vunpack.c.l.b16 %v3982
        %v4310 = vunpack.c.l.b16 %v3983
        %v4311 = vunpack.c.l.b16 %v3984
        %v4312 = vunpack.c.l.b16 %v3985
        %v4313 = vunpack.c.l.b16 %v3986
        %v4314 = vunpack.c.l.b16 %v3987
        %v4315 = vunpack.c.l.b16 %v3988
        %v4316 = vunpack.c.l.b16 %v3989
        %v4317 = vunpack.c.l.b16 %v3990
        %v4318 = vunpack.c.l.b16 %v3991
        %v4319 = vunpack.c.l.b16 %v3992
        %v4320 = vunpack.c.l.b16 %v3993
        %v4321 = vunpack.c.l.b16 %v3994
        %v4322 = vunpack.c.l.b16 %v3995
        %v4323 = vunpack.c.l.b16 %v3996
        %v4324 = vunpack.c.l.b16 %v3997
        %v4325 = vunpack.c.l.b16 %v3998
        %v4326 = vunpack.c.l.b16 %v3999
        %v4327 = vunpack.c.l.b16 %v4000
        %v4328 = vunpack.c.l.b16 %v4001
        %v4329 = vunpack.c.l.b16 %v4002
        %v4330 = vunpack.c.l.b16 %v4003
        %v4331 = vunpack.c.l.b16 %v4004
        %v4332 = vunpack.c.l.b16 %v4005
        %v4333 = vunpack.c.l.b16 %v4006
        %v4334 = vunpack.c.l.b16 %v4007
        %v4335 = vunpack.c.l.b16 %v4008
        %v4336 = vunpack.c.l.b16 %v4009
        %v4337 = vunpack.c.l.b16 %v4010
        %v4338 = vunpack.c.l.b16 %v4011
        %v4339 = vunpack.c.l.b16 %v4012
        %v4340 = vunpack.c.l.b16 %v4013
        %v4341 = vunpack.c.l.b16 %v4014
        %v4342 = vunpack.c.l.b16 %v4015
        %v4343 = vunpack.c.l.b16 %v4016
        %v4344 = vunpack.c.l.b16 %v4017
        %v4345 = vunpack.c.l.b16 %v4018
        %v4346 = vunpack.c.l.b16 %v4019
        %v4347 = vunpack.c.l.b16 %v4020
        %v4348 = vunpack.c.l.b16 %v4021
        %v4349 = vunpack.c.l.b16 %v4022
        %v4350 = vunpack.c.l.b16 %v4023
        %v4351 = vunpack.c.l.b16 %v4024
        %v4352 = vunpack.c.l.b16 %v4025
        %v4353 = vunpack.c.l.b16 %v4026
        %v4354 = vunpack.c.l.b16 %v4027
        %v4355 = vunpack.c.l.b16 %v4028
        %v4356 = vunpack.c.l.b16 %v4029
        %v4357 = vunpack.c.l.b16 %v4030
        %v4358 = vunpack.c.l.b16 %v4031
        %v4359 = vunpack.c.l.b16 %v4032
        %v4360 = vunpack.c.l.b16 %v4033
        %v4361 = vunpack.c.l.b16 %v4034
        %v4362 = vunpack.c.l.b16 %v4035
        %v4363 = vunpack.c.l.b16 %v4036
        %v4364 = vunpack.c.l.b16 %v4037
        %v4365 = vunpack.c.l.b16 %v4038
        %v4366 = vunpack.c.l.b16 %v4039
        %v4367 = vunpack.c.l.b16 %v4040
        %v4368 = vunpack.c.l.b16 %v4041
        %v4369 = vunpack.c.l.b16 %v4042
        %v4370 = vunpack.c.l.b16 %v4043
        %v4371 = vunpack.c.l.b16 %v4044
        %v4372 = vunpack.c.l.b16 %v4045
        %v4373 = vunpack.c.l.b16 %v4046
        %v4374 = vunpack.c.l.b16 %v4047
        %v4375 = vunpack.c.l.b16 %v4048
        %v4376 = vunpack.c.l.b16 %v4049
        %v4377 = vunpack.c.l.b16 %v4050
        %v4378 = vunpack.c.l.b16 %v4051
        %v4379 = vunpack.c.l.b16 %v4052
        %v4380 = vunpack.c.l.b16 %v4053
        %v4381 = vunpack.c.l.b16 %v4054
        %v4382 = vunpack.c.l.b16 %v4055
        %v4383 = vunpack.c.l.b16 %v4056
        %v4384 = vunpack.c.l.b16 %v4057
        %v4385 = vunpack.c.l.b16 %v4058
        %v4386 = vunpack.c.l.b16 %v4059
        %v4387 = vunpack.c.l.b16 %v4060
        %v4388 = vunpack.c.l.b16 %v4061
        %v4389 = vunpack.c.l.b16 %v4062
        %v4390 = vunpack.c.l.b16 %v4063
        %v4391 = vunpack.c.l.b16 %v4064
        %v4392 = vunpack.c.l.b16 %v4065
        %v4393 = vunpack.c.l.b16 %v4066
        %v4394 = vunpack.c.l.b16 %v4067
        %v4395 = vunpack.c.l.b16 %v4068
        %v4396 = vunpack.c.l.b16 %v4069
        %v4397 = vunpack.c.l.b16 %v4070
        %v4398 = vunpack.c.l.b16 %v4071
        %v4399 = vunpack.c.l.b16 %v4072
        %v4400 = vunpack.c.l.b16 %v4073
        %v4401 = vunpack.c.l.b16 %v4074
        %v4402 = vunpack.c.l.b16 %v4075
        %v4403 = vunpack.c.l.b16 %v4076
        %v4404 = vunpack.c.l.b16 %v4077
        %v4405 = vunpack.c.l.b16 %v4078
        %v4406 = vunpack.c.l.b16 %v4079
        %v4407 = vunpack.c.l.b16 %v4080
        %v4408 = vunpack.c.l.b16 %v4081
        %v4409 = vunpack.c.l.b16 %v4082
        %v4410 = vunpack.c.l.b16 %v4083
        %v4411 = vunpack.c.l.b16 %v4084
        %v4412 = vunpack.c.l.b16 %v4085
        %v4413 = vunpack.c.l.b16 %v4086
        %v4414 = vunpack.c.l.b16 %v4087
        %v4415 = vunpack.c.l.b16 %v4088
        %v4416 = vunpack.c.l.b16 %v4089
        %v4417 = vunpack.c.l.b16 %v4090
        %v4418 = vunpack.c.l.b16 %v4091
        %v4419 = vunpack.c.l.b16 %v4092
        %v4420 = vunpack.c.l.b16 %v4093
        %v4421 = vunpack.c.l.b16 %v4094
        %v4422 = vunpack.c.l.b16 %v4095
        %v4423 = vunpack.c.l.b16 %v4096
        %v4424 = vunpack.c.l.b16 %v4097
        %v4425 = vunpack.c.l.b16 %v4098
        %v4426 = vunpack.c.l.b16 %v4099
        %v4427 = vunpack.c.l.b16 %v4100
        %v4428 = vunpack.c.l.b16 %v4101
        %v4429 = vunpack.c.l.b16 %v4102
        %v4430 = vunpack.c.l.b16 %v4103
        %v4431 = vunpack.c.l.b16 %v4104
        %v4432 = vunpack.c.l.b16 %v4105
        %v4433 = vunpack.c.l.b16 %v4106
        %v4434 = vunpack.c.l.b16 %v4107
        %v4435 = vunpack.c.l.b16 %v4108
        %v4436 = vunpack.c.l.b16 %v4109
        %v4437 = vunpack.c.l.b16 %v4110
        %v4438 = vunpack.c.l.b16 %v4111
        %v4439 = vunpack.c.l.b16 %v4112
        %v4440 = vpack.c.b16 %v4281, %v4280
        %v4441 = vpack.c.b16 %v4283, %v4282
        %v4442 = vpack.c.b16 %v4285, %v4284
        %v4443 = vpack.c.b16 %v4287, %v4286
        %v4444 = vpack.c.b16 %v4289, %v4288
        %v4445 = vpack.c.b16 %v4291, %v4290
        %v4446 = vpack.c.b16 %v4293, %v4292
        %v4447 = vpack.c.b16 %v4295, %v4294
        %v4448 = vpack.c.b16 %v4297, %v4296
        %v4449 = vpack.c.b16 %v4299, %v4298
        %v4450 = vpack.c.b16 %v4301, %v4300
        %v4451 = vpack.c.b16 %v4303, %v4302
        %v4452 = vpack.c.b16 %v4305, %v4304
        %v4453 = vpack.c.b16 %v4307, %v4306
        %v4454 = vpack.c.b16 %v4309, %v4308
        %v4455 = vpack.c.b16 %v4311, %v4310
        %v4456 = vpack.c.b16 %v4313, %v4312
        %v4457 = vpack.c.b16 %v4315, %v4314
        %v4458 = vpack.c.b16 %v4317, %v4316
        %v4459 = vpack.c.b16 %v4319, %v4318
        %v4460 = vpack.c.b16 %v4321, %v4320
        %v4461 = vpack.c.b16 %v4323, %v4322
        %v4462 = vpack.c.b16 %v4325, %v4324
        %v4463 = vpack.c.b16 %v4327, %v4326
        %v4464 = vpack.c.b16 %v4329, %v4328
        %v4465 = vpack.c.b16 %v4331, %v4330
        %v4466 = vpack.c.b16 %v4333, %v4332
        %v4467 = vpack.c.b16 %v4335, %v4334
        %v4468 = vpack.c.b16 %v4337, %v4336
        %v4469 = vpack.c.b16 %v4339, %v4338
        %v4470 = vpack.c.b16 %v4341, %v4340
        %v4471 = vpack.c.b16 %v4343, %v4342
        %v4472 = vpack.c.b16 %v4345, %v4344
        %v4473 = vpack.c.b16 %v4347, %v4346
        %v4474 = vpack.c.b16 %v4349, %v4348
        %v4475 = vpack.c.b16 %v4351, %v4350
        %v4476 = vpack.c.b16 %v4353, %v4352
        %v4477 = vpack.c.b16 %v4355, %v4354
        %v4478 = vpack.c.b16 %v4357, %v4356
        %v4479 = vpack.c.b16 %v4359, %v4358
        %v4480 = vpack.c.b16 %v4361, %v4360
        %v4481 = vpack.c.b16 %v4363, %v4362
        %v4482 = vpack.c.b16 %v4365, %v4364
        %v4483 = vpack.c.b16 %v4367, %v4366
        %v4484 = vpack.c.b16 %v4369, %v4368
        %v4485 = vpack.c.b16 %v4371, %v4370
        %v4486 = vpack.c.b16 %v4373, %v4372
        %v4487 = vpack.c.b16 %v4375, %v4374
        %v4488 = vpack.c.b16 %v4377, %v4376
        %v4489 = vpack.c.b16 %v4379, %v4378
        %v4490 = vpack.c.b16 %v4381, %v4380
        %v4491 = vpack.c.b16 %v4383, %v4382
        %v4492 = vpack.c.b16 %v4385, %v4384
        %v4493 = vpack.c.b16 %v4387, %v4386
        %v4494 = vpack.c.b16 %v4389, %v4388
        %v4495 = vpack.c.b16 %v4391, %v4390
        %v4496 = vpack.c.b16 %v4393, %v4392
        %v4497 = vpack.c.b16 %v4395, %v4394
        %v4498 = vpack.c.b16 %v4397, %v4396
        %v4499 = vpack.c.b16 %v4399, %v4398
        %v4500 = vpack.c.b16 %v4401, %v4400
        %v4501 = vpack.c.b16 %v4403, %v4402
        %v4502 = vpack.c.b16 %v4405, %v4404
        %v4503 = vpack.c.b16 %v4407, %v4406
        %v4504 = vpack.c.b16 %v4409, %v4408
        %v4505 = vpack.c.b16 %v4411, %v4410
        %v4506 = vpack.c.b16 %v4413, %v4412
        %v4507 = vpack.c.b16 %v4415, %v4414
        %v4508 = vpack.c.b16 %v4417, %v4416
        %v4509 = vpack.c.b16 %v4419, %v4418
        %v4510 = vpack.c.b16 %v4421, %v4420
        %v4511 = vpack.c.b16 %v4423, %v4422
        %v4512 = vpack.c.b16 %v4425, %v4424
        %v4513 = vpack.c.b16 %v4427, %v4426
        %v4514 = vpack.c.b16 %v4429, %v4428
        %v4515 = vpack.c.b16 %v4431, %v4430
        %v4516 = vpack.c.b16 %v4433, %v4432
        %v4517 = vpack.c.b16 %v4435, %v4434
        %v4518 = vpack.c.b16 %v4437, %v4436
        %v4519 = vpack.c.b16 %v4439, %v4438
        %4600 = vmatprep.subr.bf16.mxu0 0
        %4601 = vmatpush1.bf16.msra.mxu0 %v4440
        %4602 = vmatprep.subr.bf16.mxu0 0
        %4603 = vmatpush1.bf16.msra.mxu0 %v4441
        %4604 = vmatprep.subr.bf16.mxu0 0
        %4605 = vmatpush1.bf16.msra.mxu0 %v4442
        %4606 = vmatprep.subr.bf16.mxu0 0
        %4607 = vmatpush1.bf16.msra.mxu0 %v4443
        %4608 = vmatprep.subr.bf16.mxu0 0
        %4609 = vmatpush1.bf16.msra.mxu0 %v4444
        %4610 = vmatprep.subr.bf16.mxu0 0
        %4611 = vmatpush1.bf16.msra.mxu0 %v4445
        %4612 = vmatprep.subr.bf16.mxu0 0
        %4613 = vmatpush1.bf16.msra.mxu0 %v4446
        %4614 = vmatprep.subr.bf16.mxu0 0
        %4615 = vmatpush1.bf16.msra.mxu0 %v4447
        %4616 = vmatprep.subr.bf16.mxu0 0
        %4617 = vmatpush1.bf16.msra.mxu0 %v4448
        %4618 = vmatprep.subr.bf16.mxu0 0
        %4619 = vmatpush1.bf16.msra.mxu0 %v4449
        %4620 = vmatprep.subr.bf16.mxu0 0
        %4621 = vmatpush1.bf16.msra.mxu0 %v4450
        %4622 = vmatprep.subr.bf16.mxu0 0
        %4623 = vmatpush1.bf16.msra.mxu0 %v4451
        %4624 = vmatprep.subr.bf16.mxu0 0
        %4625 = vmatpush1.bf16.msra.mxu0 %v4452
        %4626 = vmatprep.subr.bf16.mxu0 0
        %4627 = vmatpush1.bf16.msra.mxu0 %v4453
        %4628 = vmatprep.subr.bf16.mxu0 0
        %4629 = vmatpush1.bf16.msra.mxu0 %v4454
        %4630 = vmatprep.subr.bf16.mxu0 0
        %4631 = vmatpush1.bf16.msra.mxu0 %v4455
        %4632 = vmatprep.mubr.bf16.mxu0 %v3944
        %4633 = vmatmul.mubr.bf16.gmra.mrb[0].mxu0 %v3943
        %v4634 = vpop.f32.mrb[0].mxu0
        %v4635 = vadd.f32 %v4118, %v4634
        %v4636 = vpop.f32.mrb[0].mxu0
        %v4637 = vpop.f32.mrb[0].mxu0
        %v4638 = vpop.f32.mrb[0].mxu0
        %4639 = vdwg.mxu0
        %4640 = vmatprep.subr.bf16.mxu0 0
        %4641 = vmatpush1.bf16.msra.mxu0 %v4456
        %4642 = vmatprep.subr.bf16.mxu0 0
        %4643 = vmatpush1.bf16.msra.mxu0 %v4457
        %4644 = vmatprep.subr.bf16.mxu0 0
        %4645 = vmatpush1.bf16.msra.mxu0 %v4458
        %4646 = vmatprep.subr.bf16.mxu0 0
        %4647 = vmatpush1.bf16.msra.mxu0 %v4459
        %4648 = vmatprep.subr.bf16.mxu0 0
        %4649 = vmatpush1.bf16.msra.mxu0 %v4460
        %4650 = vmatprep.subr.bf16.mxu0 0
        %4651 = vmatpush1.bf16.msra.mxu0 %v4461
        %4652 = vmatprep.subr.bf16.mxu0 0
        %4653 = vmatpush1.bf16.msra.mxu0 %v4462
        %4654 = vmatprep.subr.bf16.mxu0 0
        %4655 = vmatpush1.bf16.msra.mxu0 %v4463
        %4656 = vmatprep.subr.bf16.mxu0 0
        %4657 = vmatpush1.bf16.msra.mxu0 %v4464
        %4658 = vmatprep.subr.bf16.mxu0 0
        %4659 = vmatpush1.bf16.msra.mxu0 %v4465
        %4660 = vmatprep.subr.bf16.mxu0 0
        %4661 = vmatpush1.bf16.msra.mxu0 %v4466
        %4662 = vmatprep.subr.bf16.mxu0 0
        %4663 = vmatpush1.bf16.msra.mxu0 %v4467
        %4664 = vmatprep.subr.bf16.mxu0 0
        %4665 = vmatpush1.bf16.msra.mxu0 %v4468
        %4666 = vmatprep.subr.bf16.mxu0 0
        %4667 = vmatpush1.bf16.msra.mxu0 %v4469
        %4668 = vmatprep.subr.bf16.mxu0 0
        %4669 = vmatpush1.bf16.msra.mxu0 %v4470
        %4670 = vmatprep.subr.bf16.mxu0 0
        %4671 = vmatpush1.bf16.msra.mxu0 %v4471
        %4672 = vmatprep.mubr.bf16.mxu0 %v3946
        %4673 = vmatmul.mubr.bf16.gmra.mrb[0].mxu0 %v3945
        %v4674 = vpop.f32.mrb[0].mxu0
        %v4675 = vadd.f32 %v4635, %v4674
        %v4676 = vpop.f32.mrb[0].mxu0
        %v4677 = vpop.f32.mrb[0].mxu0
        %v4678 = vpop.f32.mrb[0].mxu0
        %4679 = vdwg.mxu0
        %4680 = vmatprep.subr.bf16.mxu0 0
        %4681 = vmatpush1.bf16.msra.mxu0 %v4472
        %4682 = vmatprep.subr.bf16.mxu0 0
        %4683 = vmatpush1.bf16.msra.mxu0 %v4473
        %4684 = vmatprep.subr.bf16.mxu0 0
        %4685 = vmatpush1.bf16.msra.mxu0 %v4474
        %4686 = vmatprep.subr.bf16.mxu0 0
        %4687 = vmatpush1.bf16.msra.mxu0 %v4475
        %4688 = vmatprep.subr.bf16.mxu0 0
        %4689 = vmatpush1.bf16.msra.mxu0 %v4476
        %4690 = vmatprep.subr.bf16.mxu0 0
        %4691 = vmatpush1.bf16.msra.mxu0 %v4477
        %4692 = vmatprep.subr.bf16.mxu0 0
        %4693 = vmatpush1.bf16.msra.mxu0 %v4478
        %4694 = vmatprep.subr.bf16.mxu0 0
        %4695 = vmatpush1.bf16.msra.mxu0 %v4479
        %4696 = vmatprep.subr.bf16.mxu0 0
        %4697 = vmatpush1.bf16.msra.mxu0 %v4480
        %4698 = vmatprep.subr.bf16.mxu0 0
        %4699 = vmatpush1.bf16.msra.mxu0 %v4481
        %4700 = vmatprep.subr.bf16.mxu0 0
        %4701 = vmatpush1.bf16.msra.mxu0 %v4482
        %4702 = vmatprep.subr.bf16.mxu0 0
        %4703 = vmatpush1.bf16.msra.mxu0 %v4483
        %4704 = vmatprep.subr.bf16.mxu0 0
        %4705 = vmatpush1.bf16.msra.mxu0 %v4484
        %4706 = vmatprep.subr.bf16.mxu0 0
        %4707 = vmatpush1.bf16.msra.mxu0 %v4485
        %4708 = vmatprep.subr.bf16.mxu0 0
        %4709 = vmatpush1.bf16.msra.mxu0 %v4486
        %4710 = vmatprep.subr.bf16.mxu0 0
        %4711 = vmatpush1.bf16.msra.mxu0 %v4487
        %4712 = vmatprep.mubr.bf16.mxu0 %v3948
        %4713 = vmatmul.mubr.bf16.gmra.mrb[0].mxu0 %v3947
        %v4714 = vpop.f32.mrb[0].mxu0
        %v4715 = vadd.f32 %v4675, %v4714
        %v4716 = vpop.f32.mrb[0].mxu0
        %v4717 = vpop.f32.mrb[0].mxu0
        %v4718 = vpop.f32.mrb[0].mxu0
        %4719 = vdwg.mxu0
        %4720 = vmatprep.subr.bf16.mxu0 0
        %4721 = vmatpush1.bf16.msra.mxu0 %v4488
        %4722 = vmatprep.subr.bf16.mxu0 0
        %4723 = vmatpush1.bf16.msra.mxu0 %v4489
        %4724 = vmatprep.subr.bf16.mxu0 0
        %4725 = vmatpush1.bf16.msra.mxu0 %v4490
        %4726 = vmatprep.subr.bf16.mxu0 0
        %4727 = vmatpush1.bf16.msra.mxu0 %v4491
        %4728 = vmatprep.subr.bf16.mxu0 0
        %4729 = vmatpush1.bf16.msra.mxu0 %v4492
        %4730 = vmatprep.subr.bf16.mxu0 0
        %4731 = vmatpush1.bf16.msra.mxu0 %v4493
        %4732 = vmatprep.subr.bf16.mxu0 0
        %4733 = vmatpush1.bf16.msra.mxu0 %v4494
        %4734 = vmatprep.subr.bf16.mxu0 0
        %4735 = vmatpush1.bf16.msra.mxu0 %v4495
        %4736 = vmatprep.subr.bf16.mxu0 0
        %4737 = vmatpush1.bf16.msra.mxu0 %v4496
        %4738 = vmatprep.subr.bf16.mxu0 0
        %4739 = vmatpush1.bf16.msra.mxu0 %v4497
        %4740 = vmatprep.subr.bf16.mxu0 0
        %4741 = vmatpush1.bf16.msra.mxu0 %v4498
        %4742 = vmatprep.subr.bf16.mxu0 0
        %4743 = vmatpush1.bf16.msra.mxu0 %v4499
        %4744 = vmatprep.subr.bf16.mxu0 0
        %4745 = vmatpush1.bf16.msra.mxu0 %v4500
        %4746 = vmatprep.subr.bf16.mxu0 0
        %4747 = vmatpush1.bf16.msra.mxu0 %v4501
        %4748 = vmatprep.subr.bf16.mxu0 0
        %4749 = vmatpush1.bf16.msra.mxu0 %v4502
        %4750 = vmatprep.subr.bf16.mxu0 0
        %4751 = vmatpush1.bf16.msra.mxu0 %v4503
        %4752 = vmatprep.mubr.bf16.mxu0 %v3950
        %4753 = vmatmul.mubr.bf16.gmra.mrb[0].mxu0 %v3949
        %v4754 = vpop.f32.mrb[0].mxu0
        %v4755 = vadd.f32 %v4715, %v4754
        %v4756 = vpop.f32.mrb[0].mxu0
        %v4757 = vpop.f32.mrb[0].mxu0
        %v4758 = vpop.f32.mrb[0].mxu0
        %4759 = vdwg.mxu0
        %4760 = vmatprep.subr.bf16.mxu0 0
        %4761 = vmatpush1.bf16.msra.mxu0 %v4504
        %4762 = vmatprep.subr.bf16.mxu0 0
        %4763 = vmatpush1.bf16.msra.mxu0 %v4505
        %4764 = vmatprep.subr.bf16.mxu0 0
        %4765 = vmatpush1.bf16.msra.mxu0 %v4506
        %4766 = vmatprep.subr.bf16.mxu0 0
        %4767 = vmatpush1.bf16.msra.mxu0 %v4507
        %4768 = vmatprep.subr.bf16.mxu0 0
        %4769 = vmatpush1.bf16.msra.mxu0 %v4508
        %4770 = vmatprep.subr.bf16.mxu0 0
        %4771 = vmatpush1.bf16.msra.mxu0 %v4509
        %4772 = vmatprep.subr.bf16.mxu0 0
        %4773 = vmatpush1.bf16.msra.mxu0 %v4510
        %4774 = vmatprep.subr.bf16.mxu0 0
        %4775 = vmatpush1.bf16.msra.mxu0 %v4511
        %4776 = vmatprep.subr.bf16.mxu0 0
        %4777 = vmatpush1.bf16.msra.mxu0 %v4512
        %4778 = vmatprep.subr.bf16.mxu0 0
        %4779 = vmatpush1.bf16.msra.mxu0 %v4513
        %4780 = vmatprep.subr.bf16.mxu0 0
        %4781 = vmatpush1.bf16.msra.mxu0 %v4514
        %4782 = vmatprep.subr.bf16.mxu0 0
        %4783 = vmatpush1.bf16.msra.mxu0 %v4515
        %4784 = vmatprep.subr.bf16.mxu0 0
        %4785 = vmatpush1.bf16.msra.mxu0 %v4516
        %4786 = vmatprep.subr.bf16.mxu0 0
        %4787 = vmatpush1.bf16.msra.mxu0 %v4517
        %4788 = vmatprep.subr.bf16.mxu0 0
        %4789 = vmatpush1.bf16.msra.mxu0 %v4518
        %4790 = vmatprep.subr.bf16.mxu0 0
        %4791 = vmatpush1.bf16.msra.mxu0 %v4519
        %4792 = vmatprep.mubr.bf16.mxu0 %v3952
        %4793 = vmatmul.mubr.bf16.gmra.mrb[0].mxu0 %v3951
        %v4794 = vpop.f32.mrb[0].mxu0
        %v4795 = vadd.f32 %v4755, %v4794
        %v4796 = vpop.f32.mrb[0].mxu0
        %v4797 = vpop.f32.mrb[0].mxu0
        %v4798 = vpop.f32.mrb[0].mxu0
        %4799 = vdwg.mxu0
        %4800 = vst [vmem:[%s275] sm:$0xff] %v4795
      $region52: #{multitask_forward.1} parent=43 // pred_fallthru
        _
      %p4801 = scmp.lt.s32.totalorder %s21, 0
      %s4802 = scalar_select %p4801, %s21, 0
      %s4803 = smul.addr %s4802, 8
      %s4804 = scalar_lea.vmem %s6, %s4803
      // Predicated region
      $region53: #{multitask_forward.1} parent=43 // pred_check
        %p4805 = pneg %p180
      $region54: #{multitask_forward.1} parent=43 // pred_check_branch
        %4807 = sbr.rel (%p4805) target = $region56
      $region55: #{multitask_forward.1} parent=43 // pred_region
        _
      $region56: #{multitask_forward.1} parent=43 // pred_fallthru
        _
      // Predicated region
      $region57: #{multitask_forward.1} parent=43 // pred_check
        %p4808 = pneg %p180
      $region58: #{multitask_forward.1} parent=43 // pred_check_branch
        %4810 = sbr.rel (%p4808) target = $region60
      $region59: #{multitask_forward.1} parent=43 // pred_region
        %p4811 = scmp.lt.s32.totalorder %s21, 0
        %s4812 = scalar_select %p4811, %s21, 0
        %s4813 = smul.addr %s4812, 8
        %s4814 = scalar_lea.vmem %s6, %s4813
      $region60: #{multitask_forward.1} parent=43 // pred_fallthru
        _
    $region44: #{multitask_forward.1} parent=5 // pred_fallthru
      _
    %p4815 = scmp.le.s32.totalorder 2, %s12
    // Predicated region
    $region61: #{multitask_forward.1} parent=5 // pred_check
      %p4816 = pneg %p4815
    $region62: #{multitask_forward.1} parent=5 // pred_check_branch
      %4818 = sbr.rel (%p4816) target = $region64
    $region63: #{multitask_forward.1} parent=5 // pred_region
      %s4819 = ssub.s32 %s12, 2
    $region64: #{multitask_forward.1} parent=5 // pred_fallthru
      _
  $region6: #{multitask_forward.1} parent=0 // loop_footer
    %s16 = sadd.s32 1, %s12
  $region7: #{multitask_forward.1} parent=0 // loop_footer_branch
    %11 = sbr.rel target = $region3
  $region8: #{multitask_forward.1} parent=0 // loop_exit
    _

</llo_original>
